<compile_context>
chip_gen: v7x
topology: tpu7x:2x2x1
jax: 0.10.0
libtpu: 0.0.40
codegen_flags: <defaults>
</compile_context>

<pallas_src>
import functools

import jax
import jax.numpy as jnp
from jax.experimental import pallas as pl
from jax.experimental.pallas import tpu as pltpu


def _dhg_kernel(feats_ref, x_ref, wkkT_ref, bkk_ref, wk1_ref, wfcT_ref, bfc_ref,
                o_ref, *, kn):
    eps = 1e-12          # torch.nn.functional.normalize eps
    neg_inf = -1e30

    full = feats_ref[...]                                   # (N, d) all nodes
    x = x_ref[...]                                          # (T, d) this row tile
    n_total = full.shape[0]

    # ---- cos_dis: row-L2-normalize, then X_tile_n @ X_full_n^T on the MXU ----
    full_n = full / jnp.maximum(
        jnp.sqrt(jnp.sum(full * full, axis=1, keepdims=True)), eps)
    x_n = x / jnp.maximum(
        jnp.sqrt(jnp.sum(x * x, axis=1, keepdims=True)), eps)
    sim = jax.lax.dot_general(x_n, full_n, (((1,), (1,)), ((), ())),
                              preferred_element_type=jnp.float32)       # (T, N)

    # ---- top-kn neighbour selection + gather ----
    # Iterative masked argmax (lowest index wins ties, like torch.topk), then a
    # one-hot (T, N) @ (N, d) matmul on the MXU to gather the raw features.
    ids = jax.lax.broadcasted_iota(jnp.int32, sim.shape, 1).astype(jnp.float32)
    work = sim
    neigh = []                                              # kn tensors of (T, d)
    for _ in range(kn):
        row_max = jnp.max(work, axis=1, keepdims=True)                  # (T, 1)
        sel = jnp.where(work >= row_max, ids, jnp.float32(n_total))
        idx = jnp.min(sel, axis=1, keepdims=True)                       # (T, 1)
        onehot = (ids == idx).astype(jnp.float32)                       # (T, N)
        neigh.append(jnp.dot(onehot, full,
                             preferred_element_type=jnp.float32))       # (T, d)
        work = jnp.where(ids == idx, neg_inf, work)

    # ---- VertexConv.Transform (grouped Conv1d kn -> kn*kn, kernel=d) + softmax,
    #      fused with convK1 (Conv1d kn -> 1, kernel 1) pooling ----
    wkkT = wkkT_ref[...]                                    # (d, kn*kn)
    bkk = bkk_ref[...]                                      # (1, kn*kn)
    wk1 = wk1_ref[...]                                      # (1, kn)

    coeff = jnp.zeros((x.shape[0], kn), dtype=jnp.float32)  # (T, kn)
    for j in range(kn):
        s = jnp.dot(neigh[j], wkkT[:, j * kn:(j + 1) * kn],
                    preferred_element_type=jnp.float32)     # (T, kn)
        s = s + bkk[:, j * kn:(j + 1) * kn]
        s = s - jnp.max(s, axis=-1, keepdims=True)
        e = jnp.exp(s)
        mult_j = e / jnp.sum(e, axis=-1, keepdims=True)     # softmax over m
        coeff = coeff + mult_j * wk1[:, j:j + 1]            # fold convK1 weight

    # pooled[n, :] = sum_m coeff[n, m] * neigh_m[n, :]   (VPU FMAs, no tiny matmul)
    pooled = coeff[:, 0:1] * neigh[0]
    for m in range(1, kn):
        pooled = pooled + coeff[:, m:m + 1] * neigh[m]

    # EdgeConv over the single knn hyperedge: softmax of one score == 1, so the
    # EdgeConv MLP cannot change the output -> identity (semantics preserved).
    # TODO(synk): nn.Dropout(p=0.6) is implemented as inference-mode identity.
    # Final GraphConvolution fc; convK1 bias was folded into bfc in the wrapper.
    out = jnp.dot(pooled, wfcT_ref[...],
                  preferred_element_type=jnp.float32) + bfc_ref[...]
    o_ref[...] = out.astype(o_ref.dtype)


def dhg_layer_forward(feats, wkk, bkk, wk1, bk1, wfc, bfc, *, kn, tile_n=None):
    """feats: (N, d) f32.  Parameters in their PyTorch layouts:
       wkk (kn*kn, 1, d), bkk (kn*kn,)   -- Transform.convKK
       wk1 (1, kn, 1),   bk1 (1,)        -- VertexConv.convK1
       wfc (dim_out, d), bfc (dim_out,)  -- GraphConvolution.fc
       Returns (N, dim_out) f32."""
    n, d = feats.shape
    dim_out = wfc.shape[0]
    if tile_n is None:
        tile_n = 128 if (n >= 128 and n % 128 == 0) else n
    assert n % tile_n == 0, "node count must be divisible by the row tile"
    grid = (n // tile_n,)

    wkk_t = wkk.reshape(kn * kn, d).T                 # (d, kn*kn)
    wfc_t = wfc.T                                     # (d, dim_out)
    bkk2 = bkk.reshape(1, kn * kn)
    wk12 = wk1.reshape(1, kn)
    bk1_s = jnp.reshape(bk1, ())
    # convK1 bias folded into the final Linear bias: (p + b)W^T = pW^T + b*colsum
    bfc_eff = (bfc + bk1_s * jnp.sum(wfc_t, axis=0)).reshape(1, dim_out)

    kernel = functools.partial(_dhg_kernel, kn=kn)
    return pl.pallas_call(
        kernel,
        out_shape=jax.ShapeDtypeStruct((n, dim_out), jnp.float32),
        grid_spec=pltpu.PrefetchScalarGridSpec(
            num_scalar_prefetch=0,
            grid=grid,
            in_specs=[
                pl.BlockSpec((n, d), lambda i: (0, 0)),           # full feats (resident)
                pl.BlockSpec((tile_n, d), lambda i: (i, 0)),      # row tile (pipelined)
                pl.BlockSpec((d, kn * kn), lambda i: (0, 0)),     # convKK weight^T
                pl.BlockSpec((1, kn * kn), lambda i: (0, 0)),     # convKK bias
                pl.BlockSpec((1, kn), lambda i: (0, 0)),          # convK1 weight
                pl.BlockSpec((d, dim_out), lambda i: (0, 0)),     # fc weight^T
                pl.BlockSpec((1, dim_out), lambda i: (0, 0)),     # fc bias (+ folded bK1)
            ],
            out_specs=pl.BlockSpec((tile_n, dim_out), lambda i: (i, 0)),
        ),
        compiler_params=pltpu.CompilerParams(
            dimension_semantics=("parallel",),
            vmem_limit_bytes=32 * 1024 * 1024,
        ),
    )(feats, feats, wkk_t, bkk2, wk12, wfc_t, bfc_eff)


def reference_forward(feats, wkk, bkk, wk1, bk1, wfc, bfc, kn):
    """Pure-JAX mirror of the PyTorch DHGLayer forward (knn branch)."""
    hp = jax.lax.Precision.HIGHEST
    n, d = feats.shape
    # cos_dis + topk + gather
    norm = jnp.sqrt(jnp.sum(feats * feats, axis=1, keepdims=True))
    xn = feats / jnp.maximum(norm, 1e-12)
    sim = jnp.matmul(xn, xn.T, precision=hp)
    _, idx = jax.lax.top_k(sim, kn)                          # (N, kn)
    neigh = feats[idx.reshape(-1)].reshape(n, kn, d)
    # VertexConv: Transform (grouped convKK) + softmax + matmul, then convK1
    wkk_r = wkk.reshape(kn, kn, d)
    conved = jnp.einsum('njd,jmd->njm', neigh, wkk_r,
                        precision=hp) + bkk.reshape(kn, kn)
    mult = jax.nn.softmax(conved, axis=-1)
    transformed = jnp.einsum('njm,nmd->njd', mult, neigh, precision=hp)
    pooled = jnp.einsum('j,njd->nd', wk1.reshape(kn), transformed,
                        precision=hp) + jnp.reshape(bk1, ())
    # EdgeConv with a single hyperedge: softmax over one edge == 1 -> identity.
    # Dropout: inference-mode identity.  Final fc:
    return jnp.matmul(pooled, wfc.T, precision=hp) + bfc


if __name__ == "__main__":
    key = jax.random.PRNGKey(0)
    N, D_IN, D_OUT, KN = 256, 32, 32, 4
    ks = jax.random.split(key, 8)

    feats = jax.random.normal(ks[0], (N, D_IN), dtype=jnp.float32)
    # PyTorch-layout parameters
    wkk = jax.random.normal(ks[1], (KN * KN, 1, D_IN), jnp.float32) / jnp.sqrt(D_IN)
    bkk = 0.1 * jax.random.normal(ks[2], (KN * KN,), jnp.float32)
    wk1 = jax.random.normal(ks[3], (1, KN, 1), jnp.float32) / jnp.sqrt(KN)
    bk1 = 0.1 * jax.random.normal(ks[4], (1,), jnp.float32)
    wfc = jax.random.normal(ks[5], (D_OUT, D_IN), jnp.float32) / jnp.sqrt(D_IN)
    bfc = 0.1 * jax.random.normal(ks[6], (D_OUT,), jnp.float32)

    out = dhg_layer_forward(feats, wkk, bkk, wk1, bk1, wfc, bfc, kn=KN)
    out = jax.block_until_ready(out)

    ref = reference_forward(feats, wkk, bkk, wk1, bk1, wfc, bfc, KN)
    assert out.shape == (N, D_OUT)
    assert bool(jnp.allclose(out, ref, atol=2e-3, rtol=2e-3)), "mismatch vs reference"

    print("KERNEL_OK")
</pallas_src>

<mosaic_0001>
module attributes {stable_mosaic.version = 11 : i64} {
  func.func @_dhg_kernel(%arg0: i32, %arg1: memref<256x32xf32, #tpu.memory_space<vmem>>, %arg2: memref<128x32xf32, #tpu.memory_space<vmem>>, %arg3: memref<32x16xf32, #tpu.memory_space<vmem>>, %arg4: memref<1x16xf32, #tpu.memory_space<vmem>>, %arg5: memref<1x4xf32, #tpu.memory_space<vmem>>, %arg6: memref<32x32xf32, #tpu.memory_space<vmem>>, %arg7: memref<1x32xf32, #tpu.memory_space<vmem>>, %arg8: memref<128x32xf32, #tpu.memory_space<vmem>>) attributes {dimension_semantics = [#tpu.dimension_semantics<parallel>], iteration_bounds = array<i64: 2>, scalar_prefetch = 0 : i64, scratch_operands = 0 : i64, tpu.core_type = #tpu.core_type<tc>, window_params = [{pipeline_mode = #tpu.pipeline_mode<synchronous>, transform_indices = @transform_0, window_bounds = array<i64: 256, 32>}, {transform_indices = @transform_1, window_bounds = array<i64: 128, 32>}, {pipeline_mode = #tpu.pipeline_mode<synchronous>, transform_indices = @transform_2, window_bounds = array<i64: 32, 16>}, {pipeline_mode = #tpu.pipeline_mode<synchronous>, transform_indices = @transform_3, window_bounds = array<i64: 1, 16>}, {pipeline_mode = #tpu.pipeline_mode<synchronous>, transform_indices = @transform_4, window_bounds = array<i64: 1, 4>}, {pipeline_mode = #tpu.pipeline_mode<synchronous>, transform_indices = @transform_5, window_bounds = array<i64: 32, 32>}, {pipeline_mode = #tpu.pipeline_mode<synchronous>, transform_indices = @transform_6, window_bounds = array<i64: 1, 32>}, {transform_indices = @transform_7, window_bounds = array<i64: 128, 32>}]} {
    %c0 = arith.constant 0 : index
    %c0_0 = arith.constant 0 : index
    %0 = vector.load %arg1[%c0, %c0_0] : memref<256x32xf32, #tpu.memory_space<vmem>>, vector<256x32xf32>
    %c0_1 = arith.constant 0 : index
    %c0_2 = arith.constant 0 : index
    %1 = vector.load %arg2[%c0_1, %c0_2] : memref<128x32xf32, #tpu.memory_space<vmem>>, vector<128x32xf32>
    %2 = arith.mulf %0, %0 : vector<256x32xf32>
    %cst = arith.constant dense<0.000000e+00> : vector<256xf32>
    %3 = vector.multi_reduction <add>, %2, %cst [1] : vector<256x32xf32> to vector<256xf32>
    %4 = vector.shape_cast %3 : vector<256xf32> to vector<256x1xf32>
    %5 = math.sqrt %4 : vector<256x1xf32>
    %cst_3 = arith.constant 9.99999996E-13 : f32
    %6 = vector.broadcast %cst_3 : f32 to vector<256x1xf32>
    %7 = arith.maximumf %5, %6 : vector<256x1xf32>
    %8 = vector.broadcast %7 : vector<256x1xf32> to vector<256x32xf32>
    %9 = arith.divf %0, %8 : vector<256x32xf32>
    %10 = arith.mulf %1, %1 : vector<128x32xf32>
    %cst_4 = arith.constant dense<0.000000e+00> : vector<128xf32>
    %11 = vector.multi_reduction <add>, %10, %cst_4 [1] : vector<128x32xf32> to vector<128xf32>
    %12 = vector.shape_cast %11 : vector<128xf32> to vector<128x1xf32>
    %13 = math.sqrt %12 : vector<128x1xf32>
    %cst_5 = arith.constant 9.99999996E-13 : f32
    %14 = vector.broadcast %cst_5 : f32 to vector<128x1xf32>
    %15 = arith.maximumf %13, %14 : vector<128x1xf32>
    %16 = vector.broadcast %15 : vector<128x1xf32> to vector<128x32xf32>
    %17 = arith.divf %1, %16 : vector<128x32xf32>
    %cst_6 = arith.constant dense<0.000000e+00> : vector<128x256xf32>
    %18 = tpu.matmul %17, %9, %cst_6 {dimension_numbers = #tpu.dot_dimension_numbers<[1], [1], [0], [0], [0, 0, 1, 0], [], []>} : vector<128x32xf32>, vector<256x32xf32>, vector<128x256xf32> -> vector<128x256xf32>
    %19 = tpu.iota {dimensions = array<i32: 1>} : vector<128x256xi32>
    %20 = arith.sitofp %19 : vector<128x256xi32> to vector<128x256xf32>
    %cst_7 = arith.constant dense<0xFF800000> : vector<128xf32>
    %21 = vector.multi_reduction <maximumf>, %18, %cst_7 [1] : vector<128x256xf32> to vector<128xf32>
    %22 = vector.shape_cast %21 : vector<128xf32> to vector<128x1xf32>
    %23 = vector.broadcast %22 : vector<128x1xf32> to vector<128x256xf32>
    %24 = arith.cmpf oge, %18, %23 : vector<128x256xf32>
    %cst_8 = arith.constant 2.560000e+02 : f32
    %25 = vector.broadcast %cst_8 : f32 to vector<128x256xf32>
    %26 = arith.select %24, %20, %25 : vector<128x256xi1>, vector<128x256xf32>
    %cst_9 = arith.constant dense<0x7F800000> : vector<128xf32>
    %27 = vector.multi_reduction <minimumf>, %26, %cst_9 [1] : vector<128x256xf32> to vector<128xf32>
    %28 = vector.shape_cast %27 : vector<128xf32> to vector<128x1xf32>
    %29 = vector.broadcast %28 : vector<128x1xf32> to vector<128x256xf32>
    %30 = arith.cmpf oeq, %20, %29 : vector<128x256xf32>
    %31 = arith.extui %30 : vector<128x256xi1> to vector<128x256xi32>
    %32 = arith.sitofp %31 : vector<128x256xi32> to vector<128x256xf32>
    %cst_10 = arith.constant dense<0.000000e+00> : vector<128x32xf32>
    %33 = tpu.matmul %32, %0, %cst_10 {dimension_numbers = #tpu.dot_dimension_numbers<[1], [0], [0], [1], [0, 0, 1, 1], [], []>} : vector<128x256xf32>, vector<256x32xf32>, vector<128x32xf32> -> vector<128x32xf32>
    %34 = vector.broadcast %28 : vector<128x1xf32> to vector<128x256xf32>
    %35 = arith.cmpf oeq, %20, %34 : vector<128x256xf32>
    %cst_11 = arith.constant -1.000000e+30 : f32
    %36 = vector.broadcast %cst_11 : f32 to vector<128x256xf32>
    %37 = arith.select %35, %36, %18 : vector<128x256xi1>, vector<128x256xf32>
    %cst_12 = arith.constant dense<0xFF800000> : vector<128xf32>
    %38 = vector.multi_reduction <maximumf>, %37, %cst_12 [1] : vector<128x256xf32> to vector<128xf32>
    %39 = vector.shape_cast %38 : vector<128xf32> to vector<128x1xf32>
    %40 = vector.broadcast %39 : vector<128x1xf32> to vector<128x256xf32>
    %41 = arith.cmpf oge, %37, %40 : vector<128x256xf32>
    %cst_13 = arith.constant 2.560000e+02 : f32
    %42 = vector.broadcast %cst_13 : f32 to vector<128x256xf32>
    %43 = arith.select %41, %20, %42 : vector<128x256xi1>, vector<128x256xf32>
    %cst_14 = arith.constant dense<0x7F800000> : vector<128xf32>
    %44 = vector.multi_reduction <minimumf>, %43, %cst_14 [1] : vector<128x256xf32> to vector<128xf32>
    %45 = vector.shape_cast %44 : vector<128xf32> to vector<128x1xf32>
    %46 = vector.broadcast %45 : vector<128x1xf32> to vector<128x256xf32>
    %47 = arith.cmpf oeq, %20, %46 : vector<128x256xf32>
    %48 = arith.extui %47 : vector<128x256xi1> to vector<128x256xi32>
    %49 = arith.sitofp %48 : vector<128x256xi32> to vector<128x256xf32>
    %cst_15 = arith.constant dense<0.000000e+00> : vector<128x32xf32>
    %50 = tpu.matmul %49, %0, %cst_15 {dimension_numbers = #tpu.dot_dimension_numbers<[1], [0], [0], [1], [0, 0, 1, 1], [], []>} : vector<128x256xf32>, vector<256x32xf32>, vector<128x32xf32> -> vector<128x32xf32>
    %51 = vector.broadcast %45 : vector<128x1xf32> to vector<128x256xf32>
    %52 = arith.cmpf oeq, %20, %51 : vector<128x256xf32>
    %cst_16 = arith.constant -1.000000e+30 : f32
    %53 = vector.broadcast %cst_16 : f32 to vector<128x256xf32>
    %54 = arith.select %52, %53, %37 : vector<128x256xi1>, vector<128x256xf32>
    %cst_17 = arith.constant dense<0xFF800000> : vector<128xf32>
    %55 = vector.multi_reduction <maximumf>, %54, %cst_17 [1] : vector<128x256xf32> to vector<128xf32>
    %56 = vector.shape_cast %55 : vector<128xf32> to vector<128x1xf32>
    %57 = vector.broadcast %56 : vector<128x1xf32> to vector<128x256xf32>
    %58 = arith.cmpf oge, %54, %57 : vector<128x256xf32>
    %cst_18 = arith.constant 2.560000e+02 : f32
    %59 = vector.broadcast %cst_18 : f32 to vector<128x256xf32>
    %60 = arith.select %58, %20, %59 : vector<128x256xi1>, vector<128x256xf32>
    %cst_19 = arith.constant dense<0x7F800000> : vector<128xf32>
    %61 = vector.multi_reduction <minimumf>, %60, %cst_19 [1] : vector<128x256xf32> to vector<128xf32>
    %62 = vector.shape_cast %61 : vector<128xf32> to vector<128x1xf32>
    %63 = vector.broadcast %62 : vector<128x1xf32> to vector<128x256xf32>
    %64 = arith.cmpf oeq, %20, %63 : vector<128x256xf32>
    %65 = arith.extui %64 : vector<128x256xi1> to vector<128x256xi32>
    %66 = arith.sitofp %65 : vector<128x256xi32> to vector<128x256xf32>
    %cst_20 = arith.constant dense<0.000000e+00> : vector<128x32xf32>
    %67 = tpu.matmul %66, %0, %cst_20 {dimension_numbers = #tpu.dot_dimension_numbers<[1], [0], [0], [1], [0, 0, 1, 1], [], []>} : vector<128x256xf32>, vector<256x32xf32>, vector<128x32xf32> -> vector<128x32xf32>
    %68 = vector.broadcast %62 : vector<128x1xf32> to vector<128x256xf32>
    %69 = arith.cmpf oeq, %20, %68 : vector<128x256xf32>
    %cst_21 = arith.constant -1.000000e+30 : f32
    %70 = vector.broadcast %cst_21 : f32 to vector<128x256xf32>
    %71 = arith.select %69, %70, %54 : vector<128x256xi1>, vector<128x256xf32>
    %cst_22 = arith.constant dense<0xFF800000> : vector<128xf32>
    %72 = vector.multi_reduction <maximumf>, %71, %cst_22 [1] : vector<128x256xf32> to vector<128xf32>
    %73 = vector.shape_cast %72 : vector<128xf32> to vector<128x1xf32>
    %74 = vector.broadcast %73 : vector<128x1xf32> to vector<128x256xf32>
    %75 = arith.cmpf oge, %71, %74 : vector<128x256xf32>
    %cst_23 = arith.constant 2.560000e+02 : f32
    %76 = vector.broadcast %cst_23 : f32 to vector<128x256xf32>
    %77 = arith.select %75, %20, %76 : vector<128x256xi1>, vector<128x256xf32>
    %cst_24 = arith.constant dense<0x7F800000> : vector<128xf32>
    %78 = vector.multi_reduction <minimumf>, %77, %cst_24 [1] : vector<128x256xf32> to vector<128xf32>
    %79 = vector.shape_cast %78 : vector<128xf32> to vector<128x1xf32>
    %80 = vector.broadcast %79 : vector<128x1xf32> to vector<128x256xf32>
    %81 = arith.cmpf oeq, %20, %80 : vector<128x256xf32>
    %82 = arith.extui %81 : vector<128x256xi1> to vector<128x256xi32>
    %83 = arith.sitofp %82 : vector<128x256xi32> to vector<128x256xf32>
    %cst_25 = arith.constant dense<0.000000e+00> : vector<128x32xf32>
    %84 = tpu.matmul %83, %0, %cst_25 {dimension_numbers = #tpu.dot_dimension_numbers<[1], [0], [0], [1], [0, 0, 1, 1], [], []>} : vector<128x256xf32>, vector<256x32xf32>, vector<128x32xf32> -> vector<128x32xf32>
    %c0_26 = arith.constant 0 : index
    %c0_27 = arith.constant 0 : index
    %85 = vector.load %arg3[%c0_26, %c0_27] : memref<32x16xf32, #tpu.memory_space<vmem>>, vector<32x16xf32>
    %c0_28 = arith.constant 0 : index
    %c0_29 = arith.constant 0 : index
    %86 = vector.load %arg4[%c0_28, %c0_29] : memref<1x16xf32, #tpu.memory_space<vmem>>, vector<1x16xf32>
    %c0_30 = arith.constant 0 : index
    %c0_31 = arith.constant 0 : index
    %87 = vector.load %arg5[%c0_30, %c0_31] : memref<1x4xf32, #tpu.memory_space<vmem>>, vector<1x4xf32>
    %cst_32 = arith.constant 0.000000e+00 : f32
    %88 = vector.broadcast %cst_32 : f32 to vector<128x4xf32>
    %89 = vector.extract_strided_slice %85 {offsets = [0, 0], sizes = [32, 4], strides = [1, 1]} : vector<32x16xf32> to vector<32x4xf32>
    %cst_33 = arith.constant dense<0.000000e+00> : vector<128x4xf32>
    %90 = tpu.matmul %33, %89, %cst_33 {dimension_numbers = #tpu.dot_dimension_numbers<[1], [0], [0], [1], [0, 0, 1, 1], [], []>} : vector<128x32xf32>, vector<32x4xf32>, vector<128x4xf32> -> vector<128x4xf32>
    %91 = vector.extract_strided_slice %86 {offsets = [0, 0], sizes = [1, 4], strides = [1, 1]} : vector<1x16xf32> to vector<1x4xf32>
    %92 = vector.broadcast %91 : vector<1x4xf32> to vector<128x4xf32>
    %93 = arith.addf %90, %92 : vector<128x4xf32>
    %cst_34 = arith.constant dense<0xFF800000> : vector<128xf32>
    %94 = vector.multi_reduction <maximumf>, %93, %cst_34 [1] : vector<128x4xf32> to vector<128xf32>
    %95 = vector.shape_cast %94 : vector<128xf32> to vector<128x1xf32>
    %96 = vector.broadcast %95 : vector<128x1xf32> to vector<128x4xf32>
    %97 = arith.subf %93, %96 : vector<128x4xf32>
    %98 = math.exp %97 : vector<128x4xf32>
    %cst_35 = arith.constant dense<0.000000e+00> : vector<128xf32>
    %99 = vector.multi_reduction <add>, %98, %cst_35 [1] : vector<128x4xf32> to vector<128xf32>
    %100 = vector.shape_cast %99 : vector<128xf32> to vector<128x1xf32>
    %101 = vector.broadcast %100 : vector<128x1xf32> to vector<128x4xf32>
    %102 = arith.divf %98, %101 : vector<128x4xf32>
    %103 = vector.extract_strided_slice %87 {offsets = [0, 0], sizes = [1, 1], strides = [1, 1]} : vector<1x4xf32> to vector<1x1xf32>
    %104 = vector.broadcast %103 : vector<1x1xf32> to vector<128x4xf32>
    %105 = arith.mulf %102, %104 : vector<128x4xf32>
    %106 = arith.addf %88, %105 : vector<128x4xf32>
    %107 = vector.extract_strided_slice %85 {offsets = [0, 4], sizes = [32, 4], strides = [1, 1]} : vector<32x16xf32> to vector<32x4xf32>
    %cst_36 = arith.constant dense<0.000000e+00> : vector<128x4xf32>
    %108 = tpu.matmul %50, %107, %cst_36 {dimension_numbers = #tpu.dot_dimension_numbers<[1], [0], [0], [1], [0, 0, 1, 1], [], []>} : vector<128x32xf32>, vector<32x4xf32>, vector<128x4xf32> -> vector<128x4xf32>
    %109 = vector.extract_strided_slice %86 {offsets = [0, 4], sizes = [1, 4], strides = [1, 1]} : vector<1x16xf32> to vector<1x4xf32>
    %110 = vector.broadcast %109 : vector<1x4xf32> to vector<128x4xf32>
    %111 = arith.addf %108, %110 : vector<128x4xf32>
    %cst_37 = arith.constant dense<0xFF800000> : vector<128xf32>
    %112 = vector.multi_reduction <maximumf>, %111, %cst_37 [1] : vector<128x4xf32> to vector<128xf32>
    %113 = vector.shape_cast %112 : vector<128xf32> to vector<128x1xf32>
    %114 = vector.broadcast %113 : vector<128x1xf32> to vector<128x4xf32>
    %115 = arith.subf %111, %114 : vector<128x4xf32>
    %116 = math.exp %115 : vector<128x4xf32>
    %cst_38 = arith.constant dense<0.000000e+00> : vector<128xf32>
    %117 = vector.multi_reduction <add>, %116, %cst_38 [1] : vector<128x4xf32> to vector<128xf32>
    %118 = vector.shape_cast %117 : vector<128xf32> to vector<128x1xf32>
    %119 = vector.broadcast %118 : vector<128x1xf32> to vector<128x4xf32>
    %120 = arith.divf %116, %119 : vector<128x4xf32>
    %121 = vector.extract_strided_slice %87 {offsets = [0, 1], sizes = [1, 1], strides = [1, 1]} : vector<1x4xf32> to vector<1x1xf32>
    %122 = vector.broadcast %121 : vector<1x1xf32> to vector<128x4xf32>
    %123 = arith.mulf %120, %122 : vector<128x4xf32>
    %124 = arith.addf %106, %123 : vector<128x4xf32>
    %125 = vector.extract_strided_slice %85 {offsets = [0, 8], sizes = [32, 4], strides = [1, 1]} : vector<32x16xf32> to vector<32x4xf32>
    %cst_39 = arith.constant dense<0.000000e+00> : vector<128x4xf32>
    %126 = tpu.matmul %67, %125, %cst_39 {dimension_numbers = #tpu.dot_dimension_numbers<[1], [0], [0], [1], [0, 0, 1, 1], [], []>} : vector<128x32xf32>, vector<32x4xf32>, vector<128x4xf32> -> vector<128x4xf32>
    %127 = vector.extract_strided_slice %86 {offsets = [0, 8], sizes = [1, 4], strides = [1, 1]} : vector<1x16xf32> to vector<1x4xf32>
    %128 = vector.broadcast %127 : vector<1x4xf32> to vector<128x4xf32>
    %129 = arith.addf %126, %128 : vector<128x4xf32>
    %cst_40 = arith.constant dense<0xFF800000> : vector<128xf32>
    %130 = vector.multi_reduction <maximumf>, %129, %cst_40 [1] : vector<128x4xf32> to vector<128xf32>
    %131 = vector.shape_cast %130 : vector<128xf32> to vector<128x1xf32>
    %132 = vector.broadcast %131 : vector<128x1xf32> to vector<128x4xf32>
    %133 = arith.subf %129, %132 : vector<128x4xf32>
    %134 = math.exp %133 : vector<128x4xf32>
    %cst_41 = arith.constant dense<0.000000e+00> : vector<128xf32>
    %135 = vector.multi_reduction <add>, %134, %cst_41 [1] : vector<128x4xf32> to vector<128xf32>
    %136 = vector.shape_cast %135 : vector<128xf32> to vector<128x1xf32>
    %137 = vector.broadcast %136 : vector<128x1xf32> to vector<128x4xf32>
    %138 = arith.divf %134, %137 : vector<128x4xf32>
    %139 = vector.extract_strided_slice %87 {offsets = [0, 2], sizes = [1, 1], strides = [1, 1]} : vector<1x4xf32> to vector<1x1xf32>
    %140 = vector.broadcast %139 : vector<1x1xf32> to vector<128x4xf32>
    %141 = arith.mulf %138, %140 : vector<128x4xf32>
    %142 = arith.addf %124, %141 : vector<128x4xf32>
    %143 = vector.extract_strided_slice %85 {offsets = [0, 12], sizes = [32, 4], strides = [1, 1]} : vector<32x16xf32> to vector<32x4xf32>
    %cst_42 = arith.constant dense<0.000000e+00> : vector<128x4xf32>
    %144 = tpu.matmul %84, %143, %cst_42 {dimension_numbers = #tpu.dot_dimension_numbers<[1], [0], [0], [1], [0, 0, 1, 1], [], []>} : vector<128x32xf32>, vector<32x4xf32>, vector<128x4xf32> -> vector<128x4xf32>
    %145 = vector.extract_strided_slice %86 {offsets = [0, 12], sizes = [1, 4], strides = [1, 1]} : vector<1x16xf32> to vector<1x4xf32>
    %146 = vector.broadcast %145 : vector<1x4xf32> to vector<128x4xf32>
    %147 = arith.addf %144, %146 : vector<128x4xf32>
    %cst_43 = arith.constant dense<0xFF800000> : vector<128xf32>
    %148 = vector.multi_reduction <maximumf>, %147, %cst_43 [1] : vector<128x4xf32> to vector<128xf32>
    %149 = vector.shape_cast %148 : vector<128xf32> to vector<128x1xf32>
    %150 = vector.broadcast %149 : vector<128x1xf32> to vector<128x4xf32>
    %151 = arith.subf %147, %150 : vector<128x4xf32>
    %152 = math.exp %151 : vector<128x4xf32>
    %cst_44 = arith.constant dense<0.000000e+00> : vector<128xf32>
    %153 = vector.multi_reduction <add>, %152, %cst_44 [1] : vector<128x4xf32> to vector<128xf32>
    %154 = vector.shape_cast %153 : vector<128xf32> to vector<128x1xf32>
    %155 = vector.broadcast %154 : vector<128x1xf32> to vector<128x4xf32>
    %156 = arith.divf %152, %155 : vector<128x4xf32>
    %157 = vector.extract_strided_slice %87 {offsets = [0, 3], sizes = [1, 1], strides = [1, 1]} : vector<1x4xf32> to vector<1x1xf32>
    %158 = vector.broadcast %157 : vector<1x1xf32> to vector<128x4xf32>
    %159 = arith.mulf %156, %158 : vector<128x4xf32>
    %160 = arith.addf %142, %159 : vector<128x4xf32>
    %161 = vector.extract_strided_slice %160 {offsets = [0, 0], sizes = [128, 1], strides = [1, 1]} : vector<128x4xf32> to vector<128x1xf32>
    %162 = vector.broadcast %161 : vector<128x1xf32> to vector<128x32xf32>
    %163 = arith.mulf %162, %33 : vector<128x32xf32>
    %164 = vector.extract_strided_slice %160 {offsets = [0, 1], sizes = [128, 1], strides = [1, 1]} : vector<128x4xf32> to vector<128x1xf32>
    %165 = vector.broadcast %164 : vector<128x1xf32> to vector<128x32xf32>
    %166 = arith.mulf %165, %50 : vector<128x32xf32>
    %167 = arith.addf %163, %166 : vector<128x32xf32>
    %168 = vector.extract_strided_slice %160 {offsets = [0, 2], sizes = [128, 1], strides = [1, 1]} : vector<128x4xf32> to vector<128x1xf32>
    %169 = vector.broadcast %168 : vector<128x1xf32> to vector<128x32xf32>
    %170 = arith.mulf %169, %67 : vector<128x32xf32>
    %171 = arith.addf %167, %170 : vector<128x32xf32>
    %172 = vector.extract_strided_slice %160 {offsets = [0, 3], sizes = [128, 1], strides = [1, 1]} : vector<128x4xf32> to vector<128x1xf32>
    %173 = vector.broadcast %172 : vector<128x1xf32> to vector<128x32xf32>
    %174 = arith.mulf %173, %84 : vector<128x32xf32>
    %175 = arith.addf %171, %174 : vector<128x32xf32>
    %c0_45 = arith.constant 0 : index
    %c0_46 = arith.constant 0 : index
    %176 = vector.load %arg6[%c0_45, %c0_46] : memref<32x32xf32, #tpu.memory_space<vmem>>, vector<32x32xf32>
    %cst_47 = arith.constant dense<0.000000e+00> : vector<128x32xf32>
    %177 = tpu.matmul %175, %176, %cst_47 {dimension_numbers = #tpu.dot_dimension_numbers<[1], [0], [0], [1], [0, 0, 1, 1], [], []>} : vector<128x32xf32>, vector<32x32xf32>, vector<128x32xf32> -> vector<128x32xf32>
    %c0_48 = arith.constant 0 : index
    %c0_49 = arith.constant 0 : index
    %178 = vector.load %arg7[%c0_48, %c0_49] : memref<1x32xf32, #tpu.memory_space<vmem>>, vector<1x32xf32>
    %179 = vector.broadcast %178 : vector<1x32xf32> to vector<128x32xf32>
    %180 = arith.addf %177, %179 : vector<128x32xf32>
    %c0_50 = arith.constant 0 : index
    %c0_51 = arith.constant 0 : index
    %181 = vector.load %arg8[%c0_50, %c0_51] : memref<128x32xf32, #tpu.memory_space<vmem>>, vector<128x32xf32>
    tpu.vector_store %arg8[%c0_50, %c0_51], %180 {strides = array<i32>} : memref<128x32xf32, #tpu.memory_space<vmem>>, vector<128x32xf32>,
    return
  }
  func.func @transform_0(%arg0: i32) -> (i32, i32) {
    %c0_i32 = arith.constant 0 : i32
    %c0_i32_0 = arith.constant 0 : i32
    %c0_i32_1 = arith.constant 0 : i32
    return %c0_i32, %c0_i32_0 : i32, i32
  }
  func.func @transform_1(%arg0: i32) -> (i32, i32) {
    %c0_i32 = arith.constant 0 : i32
    %c0_i32_0 = arith.constant 0 : i32
    return %arg0, %c0_i32 : i32, i32
  }
  func.func @transform_2(%arg0: i32) -> (i32, i32) {
    %c0_i32 = arith.constant 0 : i32
    %c0_i32_0 = arith.constant 0 : i32
    %c0_i32_1 = arith.constant 0 : i32
    return %c0_i32, %c0_i32_0 : i32, i32
  }
  func.func @transform_3(%arg0: i32) -> (i32, i32) {
    %c0_i32 = arith.constant 0 : i32
    %c0_i32_0 = arith.constant 0 : i32
    %c0_i32_1 = arith.constant 0 : i32
    return %c0_i32, %c0_i32_0 : i32, i32
  }
  func.func @transform_4(%arg0: i32) -> (i32, i32) {
    %c0_i32 = arith.constant 0 : i32
    %c0_i32_0 = arith.constant 0 : i32
    %c0_i32_1 = arith.constant 0 : i32
    return %c0_i32, %c0_i32_0 : i32, i32
  }
  func.func @transform_5(%arg0: i32) -> (i32, i32) {
    %c0_i32 = arith.constant 0 : i32
    %c0_i32_0 = arith.constant 0 : i32
    %c0_i32_1 = arith.constant 0 : i32
    return %c0_i32, %c0_i32_0 : i32, i32
  }
  func.func @transform_6(%arg0: i32) -> (i32, i32) {
    %c0_i32 = arith.constant 0 : i32
    %c0_i32_0 = arith.constant 0 : i32
    %c0_i32_1 = arith.constant 0 : i32
    return %c0_i32, %c0_i32_0 : i32, i32
  }
  func.func @transform_7(%arg0: i32) -> (i32, i32) {
    %c0_i32 = arith.constant 0 : i32
    %c0_i32_0 = arith.constant 0 : i32
    return %arg0, %c0_i32 : i32, i32
  }
}

</mosaic_0001>

<llo_original>
// kernel: tpu_custom_call.1
$region0: #{tpu_custom_call.1}
  #allocation0 [shape = 'u32[]', space=smem, size = 0x4, offset = 0x4, fixed_abs, tag = 'smem constant byte address 0x4 - core index']
  #allocation1 [shape = 'u32[144,128]{1,0:T(1,128)}', space=vmem, size = 0x12000, scoped, tag = 'internal scratch']
  %s0 = inlined_call_operand.vmem [shape: f32[256,32], index: 0, kind: input, shape index: {}]
  %s1 = inlined_call_operand.vmem [shape: f32[256,32], index: 1, kind: input, shape index: {}]
  %s2 = inlined_call_operand.vmem [shape: f32[32,16], index: 2, kind: input, shape index: {}]
  %s3 = inlined_call_operand.vmem [shape: f32[1,16], index: 3, kind: input, shape index: {}]
  %s4 = inlined_call_operand.vmem [shape: f32[1,4], index: 4, kind: input, shape index: {}]
  %s5 = inlined_call_operand.vmem [shape: f32[32,32], index: 5, kind: input, shape index: {}]
  %s6 = inlined_call_operand.vmem [shape: f32[1,32], index: 6, kind: input, shape index: {}]
  %s7 = inlined_call_operand.vmem [shape: f32[256,32], index: 7, kind: output, shape index: {}]
  %s8 = sld [smem:[#allocation0]]
  $region61: #{tpu_custom_call.1} parent=0
    _
  %s10 = ssub.s32 1, %s8
  %s11 = scalar_select 0, %s10, %s8
  loop: start=0, step=1, limit=4
  $region2: #{tpu_custom_call.1} parent=0 // loop_pre_header
    _
  $region3: #{tpu_custom_call.1} parent=0 // loop_header
    %s13 = sphi 0, %s17
    %p14 = scmp.ge.s32.totalorder %s13, 4
    %s21 = sphi 0, %s21
    %s23 = sphi 0, %s21
    %s24 = sphi 0, %s23
    %s38 = sphi 0, %s24
    %s44 = sphi 0, %s46
    %s47 = sphi 0, %s44
    %s48 = sphi 0, %s47
    %s64 = sphi 0, %s48
    %s68 = sphi 0, %s68
    %s70 = sphi 0, %s68
    %s71 = sphi 0, %s70
    %s85 = sphi 0, %s71
    %s89 = sphi 0, %s89
    %s91 = sphi 0, %s89
    %s92 = sphi 0, %s91
    %s106 = sphi 0, %s92
    %s110 = sphi 0, %s110
    %s112 = sphi 0, %s110
    %s113 = sphi 0, %s112
    %s127 = sphi 0, %s113
    %s131 = sphi 0, %s131
    %s133 = sphi 0, %s131
    %s134 = sphi 0, %s133
    %s148 = sphi 0, %s134
    %s152 = sphi 0, %s152
    %s154 = sphi 0, %s152
    %s155 = sphi 0, %s154
    %s169 = sphi 0, %s155
    %s175 = sphi 0, %s177
    %s178 = sphi 0, %s175
    %s179 = sphi 0, %s178
    %s195 = sphi 0, %s179
  $region4: #{tpu_custom_call.1} parent=0 // loop_header_branch
    %16 = sbr.rel (%p14) target = $region8
  $region5: #{tpu_custom_call.1} parent=0 // loop_body
    %s18 = ssub.s32 %s13, 1
    %s19 = ssub.s32 %s13, 2
    %s20 = sadd.s32 %s13, 1
    %s22 = sadd.s32 %s21, 1
    %p25 = scmp.eq.s32.totalorder %s13, 1
    %p26 = scmp.ne.s32.totalorder %s21, %s23
    %p27 = scmp.eq.s32.totalorder %s13, 0
    %p28 = por %p26, %p27
    %p29 = scmp.ne.s32.totalorder %s21, %s23
    %p30 = scmp.eq.s32.totalorder %s18, 1
    %p31 = por %p29, %p30
    %p32 = scmp.ne.s32.totalorder %s23, %s24
    %p33 = scmp.eq.s32.totalorder %s18, 0
    %p34 = por %p32, %p33
    %p35 = scmp.ne.s32.totalorder %s23, %s24
    %p36 = scmp.eq.s32.totalorder %s19, 1
    %p37 = por %p35, %p36
    %p39 = scmp.ne.s32.totalorder %s24, %s38
    %p40 = scmp.eq.s32.totalorder %s19, 0
    %p41 = por %p39, %p40
    %s42 = ssub.s32 %s13, %s20
    %p43 = scmp.eq.s32.totalorder %s42, 0
    %s45 = sadd.s32 %s44, 1
    %s46 = scalar_select %p43, %s44, %s45
    %p49 = pneg %p43
    %p50 = scmp.eq.s32.totalorder %s13, 1
    %p51 = por %p49, %p50
    %p52 = scmp.ne.s32.totalorder %s44, %s47
    %p53 = scmp.eq.s32.totalorder %s13, 0
    %p54 = por %p52, %p53
    %p55 = scmp.ne.s32.totalorder %s44, %s47
    %p56 = scmp.eq.s32.totalorder %s18, 1
    %p57 = por %p55, %p56
    %p58 = scmp.ne.s32.totalorder %s47, %s48
    %p59 = scmp.eq.s32.totalorder %s18, 0
    %p60 = por %p58, %p59
    %p61 = scmp.ne.s32.totalorder %s47, %s48
    %p62 = scmp.eq.s32.totalorder %s19, 1
    %p63 = por %p61, %p62
    %p65 = scmp.ne.s32.totalorder %s48, %s64
    %p66 = scmp.eq.s32.totalorder %s19, 0
    %p67 = por %p65, %p66
    %s69 = sadd.s32 %s68, 1
    %p72 = scmp.eq.s32.totalorder %s13, 1
    %p73 = scmp.ne.s32.totalorder %s68, %s70
    %p74 = scmp.eq.s32.totalorder %s13, 0
    %p75 = por %p73, %p74
    %p76 = scmp.ne.s32.totalorder %s68, %s70
    %p77 = scmp.eq.s32.totalorder %s18, 1
    %p78 = por %p76, %p77
    %p79 = scmp.ne.s32.totalorder %s70, %s71
    %p80 = scmp.eq.s32.totalorder %s18, 0
    %p81 = por %p79, %p80
    %p82 = scmp.ne.s32.totalorder %s70, %s71
    %p83 = scmp.eq.s32.totalorder %s19, 1
    %p84 = por %p82, %p83
    %p86 = scmp.ne.s32.totalorder %s71, %s85
    %p87 = scmp.eq.s32.totalorder %s19, 0
    %p88 = por %p86, %p87
    %s90 = sadd.s32 %s89, 1
    %p93 = scmp.eq.s32.totalorder %s13, 1
    %p94 = scmp.ne.s32.totalorder %s89, %s91
    %p95 = scmp.eq.s32.totalorder %s13, 0
    %p96 = por %p94, %p95
    %p97 = scmp.ne.s32.totalorder %s89, %s91
    %p98 = scmp.eq.s32.totalorder %s18, 1
    %p99 = por %p97, %p98
    %p100 = scmp.ne.s32.totalorder %s91, %s92
    %p101 = scmp.eq.s32.totalorder %s18, 0
    %p102 = por %p100, %p101
    %p103 = scmp.ne.s32.totalorder %s91, %s92
    %p104 = scmp.eq.s32.totalorder %s19, 1
    %p105 = por %p103, %p104
    %p107 = scmp.ne.s32.totalorder %s92, %s106
    %p108 = scmp.eq.s32.totalorder %s19, 0
    %p109 = por %p107, %p108
    %s111 = sadd.s32 %s110, 1
    %p114 = scmp.eq.s32.totalorder %s13, 1
    %p115 = scmp.ne.s32.totalorder %s110, %s112
    %p116 = scmp.eq.s32.totalorder %s13, 0
    %p117 = por %p115, %p116
    %p118 = scmp.ne.s32.totalorder %s110, %s112
    %p119 = scmp.eq.s32.totalorder %s18, 1
    %p120 = por %p118, %p119
    %p121 = scmp.ne.s32.totalorder %s112, %s113
    %p122 = scmp.eq.s32.totalorder %s18, 0
    %p123 = por %p121, %p122
    %p124 = scmp.ne.s32.totalorder %s112, %s113
    %p125 = scmp.eq.s32.totalorder %s19, 1
    %p126 = por %p124, %p125
    %p128 = scmp.ne.s32.totalorder %s113, %s127
    %p129 = scmp.eq.s32.totalorder %s19, 0
    %p130 = por %p128, %p129
    %s132 = sadd.s32 %s131, 1
    %p135 = scmp.eq.s32.totalorder %s13, 1
    %p136 = scmp.ne.s32.totalorder %s131, %s133
    %p137 = scmp.eq.s32.totalorder %s13, 0
    %p138 = por %p136, %p137
    %p139 = scmp.ne.s32.totalorder %s131, %s133
    %p140 = scmp.eq.s32.totalorder %s18, 1
    %p141 = por %p139, %p140
    %p142 = scmp.ne.s32.totalorder %s133, %s134
    %p143 = scmp.eq.s32.totalorder %s18, 0
    %p144 = por %p142, %p143
    %p145 = scmp.ne.s32.totalorder %s133, %s134
    %p146 = scmp.eq.s32.totalorder %s19, 1
    %p147 = por %p145, %p146
    %p149 = scmp.ne.s32.totalorder %s134, %s148
    %p150 = scmp.eq.s32.totalorder %s19, 0
    %p151 = por %p149, %p150
    %s153 = sadd.s32 %s152, 1
    %p156 = scmp.eq.s32.totalorder %s13, 1
    %p157 = scmp.ne.s32.totalorder %s152, %s154
    %p158 = scmp.eq.s32.totalorder %s13, 0
    %p159 = por %p157, %p158
    %p160 = scmp.ne.s32.totalorder %s152, %s154
    %p161 = scmp.eq.s32.totalorder %s18, 1
    %p162 = por %p160, %p161
    %p163 = scmp.ne.s32.totalorder %s154, %s155
    %p164 = scmp.eq.s32.totalorder %s18, 0
    %p165 = por %p163, %p164
    %p166 = scmp.ne.s32.totalorder %s154, %s155
    %p167 = scmp.eq.s32.totalorder %s19, 1
    %p168 = por %p166, %p167
    %p170 = scmp.ne.s32.totalorder %s155, %s169
    %p171 = scmp.eq.s32.totalorder %s19, 0
    %p172 = por %p170, %p171
    %s173 = ssub.s32 %s13, %s20
    %p174 = scmp.eq.s32.totalorder %s173, 0
    %s176 = sadd.s32 %s175, 1
    %s177 = scalar_select %p174, %s175, %s176
    %p180 = pneg %p174
    %p181 = scmp.eq.s32.totalorder %s13, 1
    %p182 = por %p180, %p181
    %p183 = scmp.ne.s32.totalorder %s175, %s178
    %p184 = scmp.eq.s32.totalorder %s13, 0
    %p185 = por %p183, %p184
    %p186 = scmp.ne.s32.totalorder %s175, %s178
    %p187 = scmp.eq.s32.totalorder %s18, 1
    %p188 = por %p186, %p187
    %p189 = scmp.ne.s32.totalorder %s178, %s179
    %p190 = scmp.eq.s32.totalorder %s18, 0
    %p191 = por %p189, %p190
    %p192 = scmp.ne.s32.totalorder %s178, %s179
    %p193 = scmp.eq.s32.totalorder %s19, 1
    %p194 = por %p192, %p193
    %p196 = scmp.ne.s32.totalorder %s179, %s195
    %p197 = scmp.eq.s32.totalorder %s19, 0
    %p198 = por %p196, %p197
    %p199 = scmp.le.s32.totalorder 1, %s13
    %p200 = scmp.lt.s32.totalorder %s13, 3
    %p201 = pnand %p199, %p200
    %p202 = pneg %p201
    // Predicated region
    $region9: #{tpu_custom_call.1} parent=5 // pred_check
      _
    $region10: #{tpu_custom_call.1} parent=5 // pred_check_branch
      %204 = sbr.rel (%p201) target = $region12
    $region11: #{tpu_custom_call.1} parent=5 // pred_region
      %s205 = ssub.s32 %s13, 1
      // Predicated region
      $region13: #{tpu_custom_call.1} parent=11 // pred_check
        %p206 = pneg %p34
      $region14: #{tpu_custom_call.1} parent=11 // pred_check_branch
        %208 = sbr.rel (%p206) target = $region16
      $region15: #{tpu_custom_call.1} parent=11 // pred_region
        _
      $region16: #{tpu_custom_call.1} parent=11 // pred_fallthru
        _
      // Predicated region
      $region17: #{tpu_custom_call.1} parent=11 // pred_check
        %p209 = pneg %p81
      $region18: #{tpu_custom_call.1} parent=11 // pred_check_branch
        %211 = sbr.rel (%p209) target = $region20
      $region19: #{tpu_custom_call.1} parent=11 // pred_region
        _
      $region20: #{tpu_custom_call.1} parent=11 // pred_fallthru
        _
      // Predicated region
      $region21: #{tpu_custom_call.1} parent=11 // pred_check
        %p212 = pneg %p102
      $region22: #{tpu_custom_call.1} parent=11 // pred_check_branch
        %214 = sbr.rel (%p212) target = $region24
      $region23: #{tpu_custom_call.1} parent=11 // pred_region
        _
      $region24: #{tpu_custom_call.1} parent=11 // pred_fallthru
        _
      // Predicated region
      $region25: #{tpu_custom_call.1} parent=11 // pred_check
        %p215 = pneg %p123
      $region26: #{tpu_custom_call.1} parent=11 // pred_check_branch
        %217 = sbr.rel (%p215) target = $region28
      $region27: #{tpu_custom_call.1} parent=11 // pred_region
        _
      $region28: #{tpu_custom_call.1} parent=11 // pred_fallthru
        _
      // Predicated region
      $region29: #{tpu_custom_call.1} parent=11 // pred_check
        %p218 = pneg %p144
      $region30: #{tpu_custom_call.1} parent=11 // pred_check_branch
        %220 = sbr.rel (%p218) target = $region32
      $region31: #{tpu_custom_call.1} parent=11 // pred_region
        _
      $region32: #{tpu_custom_call.1} parent=11 // pred_fallthru
        _
      // Predicated region
      $region33: #{tpu_custom_call.1} parent=11 // pred_check
        %p221 = pneg %p165
      $region34: #{tpu_custom_call.1} parent=11 // pred_check_branch
        %223 = sbr.rel (%p221) target = $region36
      $region35: #{tpu_custom_call.1} parent=11 // pred_region
        _
      $region36: #{tpu_custom_call.1} parent=11 // pred_fallthru
        _
    $region12: #{tpu_custom_call.1} parent=5 // pred_fallthru
      _
    %p224 = scmp.lt.s32.totalorder %s13, 2
    // Predicated region
    $region37: #{tpu_custom_call.1} parent=5 // pred_check
      %p225 = pneg %p224
    $region38: #{tpu_custom_call.1} parent=5 // pred_check_branch
      %227 = sbr.rel (%p225) target = $region40
    $region39: #{tpu_custom_call.1} parent=5 // pred_region
      // Predicated region
      $region41: #{tpu_custom_call.1} parent=39 // pred_check
        %p228 = pneg %p54
      $region42: #{tpu_custom_call.1} parent=39 // pred_check_branch
        %230 = sbr.rel (%p228) target = $region44
      $region43: #{tpu_custom_call.1} parent=39 // pred_region
        %s231 = smul.u32 16, %s13
        %p232 = scmp.lt.s32.totalorder %s231, 31
        %s233 = scalar_select %p232, %s231, 31
        %s234 = smul.addr %s233, 8
        %s235 = scalar_lea.vmem %s1, %s234
        %s236 = smul.u32 16, %s13
      $region44: #{tpu_custom_call.1} parent=39 // pred_fallthru
        _
    $region40: #{tpu_custom_call.1} parent=5 // pred_fallthru
      _
    %p237 = scmp.le.s32.totalorder 1, %s13
    %p238 = scmp.lt.s32.totalorder %s13, 3
    %p239 = pnand %p237, %p238
    %p240 = pneg %p239
    // Predicated region
    $region45: #{tpu_custom_call.1} parent=5 // pred_check
      _
    $region46: #{tpu_custom_call.1} parent=5 // pred_check_branch
      %242 = sbr.rel (%p239) target = $region48
    $region47: #{tpu_custom_call.1} parent=5 // pred_region
      %s243 = ssub.s32 %s13, 1
      %p244 = pneg %p34
      %p245 = pneg %p31
      %s246 = smul.u32 16, %s18
      %p247 = scmp.lt.s32.totalorder %s246, 31
      %s248 = scalar_select %p247, %s246, 31
      %s249 = smul.addr %s248, 8
      %s250 = scalar_lea.vmem %s1, %s249
      %p251 = pneg %p60
      %p252 = pneg %p57
      %p253 = pneg %p81
      %p254 = pneg %p78
      %p255 = pneg %p102
      %p256 = pneg %p99
      %p257 = pneg %p123
      %p258 = pneg %p120
      %p259 = pneg %p144
      %p260 = pneg %p141
      %p261 = pneg %p165
      %p262 = pneg %p162
      %p263 = pneg %p191
      %p264 = pneg %p188
      %s265 = smul.u32 16, %s18
      %p266 = scmp.lt.s32.totalorder %s265, 31
      %s267 = scalar_select %p266, %s265, 31
      %s268 = smul.addr %s267, 8
      %s269 = scalar_lea.vmem %s7, %s268
      %s270 = smul.u32 16, %s18
      %p271 = scmp.lt.s32.totalorder %s270, 31
      %s272 = scalar_select %p271, %s270, 31
      %s273 = smul.addr %s272, 8
      %s274 = scalar_lea.vmem %s1, %s273
      %s275 = smul.u32 16, %s18
      %s276 = smul.u32 16, %s18
      %p277 = scmp.lt.s32.totalorder %s276, 31
      %s278 = scalar_select %p277, %s276, 31
      %s279 = smul.addr %s278, 8
      %s280 = scalar_lea.vmem %s7, %s279
      %s281 = smul.u32 16, %s18
      %v282 = vld [vmem:[%s0] sm:$0xff]
      %v283 = vld [vmem:[%s0 + $0x8] sm:$0xff]
      %v284 = vld [vmem:[%s0 + $0x10] sm:$0xff]
      %v285 = vld [vmem:[%s0 + $0x18] sm:$0xff]
      %v286 = vld [vmem:[%s0 + $0x20] sm:$0xff]
      %v287 = vld [vmem:[%s0 + $0x28] sm:$0xff]
      %v288 = vld [vmem:[%s0 + $0x30] sm:$0xff]
      %v289 = vld [vmem:[%s0 + $0x38] sm:$0xff]
      %v290 = vld [vmem:[%s0 + $0x40] sm:$0xff]
      %v291 = vld [vmem:[%s0 + $0x48] sm:$0xff]
      %v292 = vld [vmem:[%s0 + $0x50] sm:$0xff]
      %v293 = vld [vmem:[%s0 + $0x58] sm:$0xff]
      %v294 = vld [vmem:[%s0 + $0x60] sm:$0xff]
      %v295 = vld [vmem:[%s0 + $0x68] sm:$0xff]
      %v296 = vld [vmem:[%s0 + $0x70] sm:$0xff]
      %v297 = vld [vmem:[%s0 + $0x78] sm:$0xff]
      %v298 = vld [vmem:[%s0 + $0x80] sm:$0xff]
      %v299 = vld [vmem:[%s0 + $0x88] sm:$0xff]
      %v300 = vld [vmem:[%s0 + $0x90] sm:$0xff]
      %v301 = vld [vmem:[%s0 + $0x98] sm:$0xff]
      %v302 = vld [vmem:[%s0 + $0xa0] sm:$0xff]
      %v303 = vld [vmem:[%s0 + $0xa8] sm:$0xff]
      %v304 = vld [vmem:[%s0 + $0xb0] sm:$0xff]
      %v305 = vld [vmem:[%s0 + $0xb8] sm:$0xff]
      %v306 = vld [vmem:[%s0 + $0xc0] sm:$0xff]
      %v307 = vld [vmem:[%s0 + $0xc8] sm:$0xff]
      %v308 = vld [vmem:[%s0 + $0xd0] sm:$0xff]
      %v309 = vld [vmem:[%s0 + $0xd8] sm:$0xff]
      %v310 = vld [vmem:[%s0 + $0xe0] sm:$0xff]
      %v311 = vld [vmem:[%s0 + $0xe8] sm:$0xff]
      %v312 = vld [vmem:[%s0 + $0xf0] sm:$0xff]
      %v313 = vld [vmem:[%s0 + $0xf8] sm:$0xff]
      %v314 = vld [vmem:[%s274] sm:$0xff]
      %v315 = vld [vmem:[%s274 + $0x8] sm:$0xff]
      %v316 = vld [vmem:[%s274 + $0x10] sm:$0xff]
      %v317 = vld [vmem:[%s274 + $0x18] sm:$0xff]
      %v318 = vld [vmem:[%s274 + $0x20] sm:$0xff]
      %v319 = vld [vmem:[%s274 + $0x28] sm:$0xff]
      %v320 = vld [vmem:[%s274 + $0x30] sm:$0xff]
      %v321 = vld [vmem:[%s274 + $0x38] sm:$0xff]
      %v322 = vld [vmem:[%s274 + $0x40] sm:$0xff]
      %v323 = vld [vmem:[%s274 + $0x48] sm:$0xff]
      %v324 = vld [vmem:[%s274 + $0x50] sm:$0xff]
      %v325 = vld [vmem:[%s274 + $0x58] sm:$0xff]
      %v326 = vld [vmem:[%s274 + $0x60] sm:$0xff]
      %v327 = vld [vmem:[%s274 + $0x68] sm:$0xff]
      %v328 = vld [vmem:[%s274 + $0x70] sm:$0xff]
      %v329 = vld [vmem:[%s274 + $0x78] sm:$0xff]
      %v330 = vmul.f32 %v282, %v282
      %v331 = vmul.f32 %v283, %v283
      %v332 = vmul.f32 %v284, %v284
      %v333 = vmul.f32 %v285, %v285
      %v334 = vmul.f32 %v286, %v286
      %v335 = vmul.f32 %v287, %v287
      %v336 = vmul.f32 %v288, %v288
      %v337 = vmul.f32 %v289, %v289
      %v338 = vmul.f32 %v290, %v290
      %v339 = vmul.f32 %v291, %v291
      %v340 = vmul.f32 %v292, %v292
      %v341 = vmul.f32 %v293, %v293
      %v342 = vmul.f32 %v294, %v294
      %v343 = vmul.f32 %v295, %v295
      %v344 = vmul.f32 %v296, %v296
      %v345 = vmul.f32 %v297, %v297
      %v346 = vmul.f32 %v298, %v298
      %v347 = vmul.f32 %v299, %v299
      %v348 = vmul.f32 %v300, %v300
      %v349 = vmul.f32 %v301, %v301
      %v350 = vmul.f32 %v302, %v302
      %v351 = vmul.f32 %v303, %v303
      %v352 = vmul.f32 %v304, %v304
      %v353 = vmul.f32 %v305, %v305
      %v354 = vmul.f32 %v306, %v306
      %v355 = vmul.f32 %v307, %v307
      %v356 = vmul.f32 %v308, %v308
      %v357 = vmul.f32 %v309, %v309
      %v358 = vmul.f32 %v310, %v310
      %v359 = vmul.f32 %v311, %v311
      %v360 = vmul.f32 %v312, %v312
      %v361 = vmul.f32 %v313, %v313
      %vm362 = vcmask 261120
      %v363 = vsel %vm362, %v330, 0.0
      %364 = vadd.xlane.f32.xlu0 %v363
      %v365 = vpop.xlane.xlu0 %364
      %v366 = vsel %vm362, %v331, 0.0
      %367 = vadd.xlane.f32.xlu0 %v366
      %v368 = vpop.xlane.xlu0 %367
      %v369 = vsel %vm362, %v332, 0.0
      %370 = vadd.xlane.f32.xlu0 %v369
      %v371 = vpop.xlane.xlu0 %370
      %v372 = vsel %vm362, %v333, 0.0
      %373 = vadd.xlane.f32.xlu0 %v372
      %v374 = vpop.xlane.xlu0 %373
      %v375 = vsel %vm362, %v334, 0.0
      %376 = vadd.xlane.f32.xlu0 %v375
      %v377 = vpop.xlane.xlu0 %376
      %v378 = vsel %vm362, %v335, 0.0
      %379 = vadd.xlane.f32.xlu0 %v378
      %v380 = vpop.xlane.xlu0 %379
      %v381 = vsel %vm362, %v336, 0.0
      %382 = vadd.xlane.f32.xlu0 %v381
      %v383 = vpop.xlane.xlu0 %382
      %v384 = vsel %vm362, %v337, 0.0
      %385 = vadd.xlane.f32.xlu0 %v384
      %v386 = vpop.xlane.xlu0 %385
      %v387 = vsel %vm362, %v338, 0.0
      %388 = vadd.xlane.f32.xlu0 %v387
      %v389 = vpop.xlane.xlu0 %388
      %v390 = vsel %vm362, %v339, 0.0
      %391 = vadd.xlane.f32.xlu0 %v390
      %v392 = vpop.xlane.xlu0 %391
      %v393 = vsel %vm362, %v340, 0.0
      %394 = vadd.xlane.f32.xlu0 %v393
      %v395 = vpop.xlane.xlu0 %394
      %v396 = vsel %vm362, %v341, 0.0
      %397 = vadd.xlane.f32.xlu0 %v396
      %v398 = vpop.xlane.xlu0 %397
      %v399 = vsel %vm362, %v342, 0.0
      %400 = vadd.xlane.f32.xlu0 %v399
      %v401 = vpop.xlane.xlu0 %400
      %v402 = vsel %vm362, %v343, 0.0
      %403 = vadd.xlane.f32.xlu0 %v402
      %v404 = vpop.xlane.xlu0 %403
      %v405 = vsel %vm362, %v344, 0.0
      %406 = vadd.xlane.f32.xlu0 %v405
      %v407 = vpop.xlane.xlu0 %406
      %v408 = vsel %vm362, %v345, 0.0
      %409 = vadd.xlane.f32.xlu0 %v408
      %v410 = vpop.xlane.xlu0 %409
      %v411 = vsel %vm362, %v346, 0.0
      %412 = vadd.xlane.f32.xlu0 %v411
      %v413 = vpop.xlane.xlu0 %412
      %v414 = vsel %vm362, %v347, 0.0
      %415 = vadd.xlane.f32.xlu0 %v414
      %v416 = vpop.xlane.xlu0 %415
      %v417 = vsel %vm362, %v348, 0.0
      %418 = vadd.xlane.f32.xlu0 %v417
      %v419 = vpop.xlane.xlu0 %418
      %v420 = vsel %vm362, %v349, 0.0
      %421 = vadd.xlane.f32.xlu0 %v420
      %v422 = vpop.xlane.xlu0 %421
      %v423 = vsel %vm362, %v350, 0.0
      %424 = vadd.xlane.f32.xlu0 %v423
      %v425 = vpop.xlane.xlu0 %424
      %v426 = vsel %vm362, %v351, 0.0
      %427 = vadd.xlane.f32.xlu0 %v426
      %v428 = vpop.xlane.xlu0 %427
      %v429 = vsel %vm362, %v352, 0.0
      %430 = vadd.xlane.f32.xlu0 %v429
      %v431 = vpop.xlane.xlu0 %430
      %v432 = vsel %vm362, %v353, 0.0
      %433 = vadd.xlane.f32.xlu0 %v432
      %v434 = vpop.xlane.xlu0 %433
      %v435 = vsel %vm362, %v354, 0.0
      %436 = vadd.xlane.f32.xlu0 %v435
      %v437 = vpop.xlane.xlu0 %436
      %v438 = vsel %vm362, %v355, 0.0
      %439 = vadd.xlane.f32.xlu0 %v438
      %v440 = vpop.xlane.xlu0 %439
      %v441 = vsel %vm362, %v356, 0.0
      %442 = vadd.xlane.f32.xlu0 %v441
      %v443 = vpop.xlane.xlu0 %442
      %v444 = vsel %vm362, %v357, 0.0
      %445 = vadd.xlane.f32.xlu0 %v444
      %v446 = vpop.xlane.xlu0 %445
      %v447 = vsel %vm362, %v358, 0.0
      %448 = vadd.xlane.f32.xlu0 %v447
      %v449 = vpop.xlane.xlu0 %448
      %v450 = vsel %vm362, %v359, 0.0
      %451 = vadd.xlane.f32.xlu0 %v450
      %v452 = vpop.xlane.xlu0 %451
      %v453 = vsel %vm362, %v360, 0.0
      %454 = vadd.xlane.f32.xlu0 %v453
      %v455 = vpop.xlane.xlu0 %454
      %v456 = vsel %vm362, %v361, 0.0
      %457 = vadd.xlane.f32.xlu0 %v456
      %v458 = vpop.xlane.xlu0 %457
      %v459 = vrsqrt.pop %v365
      %v460 = vmul.f32 %v365, %v459
      %vm461 = vcmp.eq.f32.partialorder %v365, inf
      %v462 = vsel %vm461, %v365, %v460
      %vm463 = vcmp.eq.f32.partialorder %v365, 0.0
      %v464 = vand.u32 %v365, 2147483648
      %v465 = vsel %vm463, %v464, %v462
      %v466 = vrsqrt.pop %v368
      %v467 = vmul.f32 %v368, %v466
      %vm468 = vcmp.eq.f32.partialorder %v368, inf
      %v469 = vsel %vm468, %v368, %v467
      %vm470 = vcmp.eq.f32.partialorder %v368, 0.0
      %v471 = vand.u32 %v368, 2147483648
      %v472 = vsel %vm470, %v471, %v469
      %v473 = vrsqrt.pop %v371
      %v474 = vmul.f32 %v371, %v473
      %vm475 = vcmp.eq.f32.partialorder %v371, inf
      %v476 = vsel %vm475, %v371, %v474
      %vm477 = vcmp.eq.f32.partialorder %v371, 0.0
      %v478 = vand.u32 %v371, 2147483648
      %v479 = vsel %vm477, %v478, %v476
      %v480 = vrsqrt.pop %v374
      %v481 = vmul.f32 %v374, %v480
      %vm482 = vcmp.eq.f32.partialorder %v374, inf
      %v483 = vsel %vm482, %v374, %v481
      %vm484 = vcmp.eq.f32.partialorder %v374, 0.0
      %v485 = vand.u32 %v374, 2147483648
      %v486 = vsel %vm484, %v485, %v483
      %v487 = vrsqrt.pop %v377
      %v488 = vmul.f32 %v377, %v487
      %vm489 = vcmp.eq.f32.partialorder %v377, inf
      %v490 = vsel %vm489, %v377, %v488
      %vm491 = vcmp.eq.f32.partialorder %v377, 0.0
      %v492 = vand.u32 %v377, 2147483648
      %v493 = vsel %vm491, %v492, %v490
      %v494 = vrsqrt.pop %v380
      %v495 = vmul.f32 %v380, %v494
      %vm496 = vcmp.eq.f32.partialorder %v380, inf
      %v497 = vsel %vm496, %v380, %v495
      %vm498 = vcmp.eq.f32.partialorder %v380, 0.0
      %v499 = vand.u32 %v380, 2147483648
      %v500 = vsel %vm498, %v499, %v497
      %v501 = vrsqrt.pop %v383
      %v502 = vmul.f32 %v383, %v501
      %vm503 = vcmp.eq.f32.partialorder %v383, inf
      %v504 = vsel %vm503, %v383, %v502
      %vm505 = vcmp.eq.f32.partialorder %v383, 0.0
      %v506 = vand.u32 %v383, 2147483648
      %v507 = vsel %vm505, %v506, %v504
      %v508 = vrsqrt.pop %v386
      %v509 = vmul.f32 %v386, %v508
      %vm510 = vcmp.eq.f32.partialorder %v386, inf
      %v511 = vsel %vm510, %v386, %v509
      %vm512 = vcmp.eq.f32.partialorder %v386, 0.0
      %v513 = vand.u32 %v386, 2147483648
      %v514 = vsel %vm512, %v513, %v511
      %v515 = vrsqrt.pop %v389
      %v516 = vmul.f32 %v389, %v515
      %vm517 = vcmp.eq.f32.partialorder %v389, inf
      %v518 = vsel %vm517, %v389, %v516
      %vm519 = vcmp.eq.f32.partialorder %v389, 0.0
      %v520 = vand.u32 %v389, 2147483648
      %v521 = vsel %vm519, %v520, %v518
      %v522 = vrsqrt.pop %v392
      %v523 = vmul.f32 %v392, %v522
      %vm524 = vcmp.eq.f32.partialorder %v392, inf
      %v525 = vsel %vm524, %v392, %v523
      %vm526 = vcmp.eq.f32.partialorder %v392, 0.0
      %v527 = vand.u32 %v392, 2147483648
      %v528 = vsel %vm526, %v527, %v525
      %v529 = vrsqrt.pop %v395
      %v530 = vmul.f32 %v395, %v529
      %vm531 = vcmp.eq.f32.partialorder %v395, inf
      %v532 = vsel %vm531, %v395, %v530
      %vm533 = vcmp.eq.f32.partialorder %v395, 0.0
      %v534 = vand.u32 %v395, 2147483648
      %v535 = vsel %vm533, %v534, %v532
      %v536 = vrsqrt.pop %v398
      %v537 = vmul.f32 %v398, %v536
      %vm538 = vcmp.eq.f32.partialorder %v398, inf
      %v539 = vsel %vm538, %v398, %v537
      %vm540 = vcmp.eq.f32.partialorder %v398, 0.0
      %v541 = vand.u32 %v398, 2147483648
      %v542 = vsel %vm540, %v541, %v539
      %v543 = vrsqrt.pop %v401
      %v544 = vmul.f32 %v401, %v543
      %vm545 = vcmp.eq.f32.partialorder %v401, inf
      %v546 = vsel %vm545, %v401, %v544
      %vm547 = vcmp.eq.f32.partialorder %v401, 0.0
      %v548 = vand.u32 %v401, 2147483648
      %v549 = vsel %vm547, %v548, %v546
      %v550 = vrsqrt.pop %v404
      %v551 = vmul.f32 %v404, %v550
      %vm552 = vcmp.eq.f32.partialorder %v404, inf
      %v553 = vsel %vm552, %v404, %v551
      %vm554 = vcmp.eq.f32.partialorder %v404, 0.0
      %v555 = vand.u32 %v404, 2147483648
      %v556 = vsel %vm554, %v555, %v553
      %v557 = vrsqrt.pop %v407
      %v558 = vmul.f32 %v407, %v557
      %vm559 = vcmp.eq.f32.partialorder %v407, inf
      %v560 = vsel %vm559, %v407, %v558
      %vm561 = vcmp.eq.f32.partialorder %v407, 0.0
      %v562 = vand.u32 %v407, 2147483648
      %v563 = vsel %vm561, %v562, %v560
      %v564 = vrsqrt.pop %v410
      %v565 = vmul.f32 %v410, %v564
      %vm566 = vcmp.eq.f32.partialorder %v410, inf
      %v567 = vsel %vm566, %v410, %v565
      %vm568 = vcmp.eq.f32.partialorder %v410, 0.0
      %v569 = vand.u32 %v410, 2147483648
      %v570 = vsel %vm568, %v569, %v567
      %v571 = vrsqrt.pop %v413
      %v572 = vmul.f32 %v413, %v571
      %vm573 = vcmp.eq.f32.partialorder %v413, inf
      %v574 = vsel %vm573, %v413, %v572
      %vm575 = vcmp.eq.f32.partialorder %v413, 0.0
      %v576 = vand.u32 %v413, 2147483648
      %v577 = vsel %vm575, %v576, %v574
      %v578 = vrsqrt.pop %v416
      %v579 = vmul.f32 %v416, %v578
      %vm580 = vcmp.eq.f32.partialorder %v416, inf
      %v581 = vsel %vm580, %v416, %v579
      %vm582 = vcmp.eq.f32.partialorder %v416, 0.0
      %v583 = vand.u32 %v416, 2147483648
      %v584 = vsel %vm582, %v583, %v581
      %v585 = vrsqrt.pop %v419
      %v586 = vmul.f32 %v419, %v585
      %vm587 = vcmp.eq.f32.partialorder %v419, inf
      %v588 = vsel %vm587, %v419, %v586
      %vm589 = vcmp.eq.f32.partialorder %v419, 0.0
      %v590 = vand.u32 %v419, 2147483648
      %v591 = vsel %vm589, %v590, %v588
      %v592 = vrsqrt.pop %v422
      %v593 = vmul.f32 %v422, %v592
      %vm594 = vcmp.eq.f32.partialorder %v422, inf
      %v595 = vsel %vm594, %v422, %v593
      %vm596 = vcmp.eq.f32.partialorder %v422, 0.0
      %v597 = vand.u32 %v422, 2147483648
      %v598 = vsel %vm596, %v597, %v595
      %v599 = vrsqrt.pop %v425
      %v600 = vmul.f32 %v425, %v599
      %vm601 = vcmp.eq.f32.partialorder %v425, inf
      %v602 = vsel %vm601, %v425, %v600
      %vm603 = vcmp.eq.f32.partialorder %v425, 0.0
      %v604 = vand.u32 %v425, 2147483648
      %v605 = vsel %vm603, %v604, %v602
      %v606 = vrsqrt.pop %v428
      %v607 = vmul.f32 %v428, %v606
      %vm608 = vcmp.eq.f32.partialorder %v428, inf
      %v609 = vsel %vm608, %v428, %v607
      %vm610 = vcmp.eq.f32.partialorder %v428, 0.0
      %v611 = vand.u32 %v428, 2147483648
      %v612 = vsel %vm610, %v611, %v609
      %v613 = vrsqrt.pop %v431
      %v614 = vmul.f32 %v431, %v613
      %vm615 = vcmp.eq.f32.partialorder %v431, inf
      %v616 = vsel %vm615, %v431, %v614
      %vm617 = vcmp.eq.f32.partialorder %v431, 0.0
      %v618 = vand.u32 %v431, 2147483648
      %v619 = vsel %vm617, %v618, %v616
      %v620 = vrsqrt.pop %v434
      %v621 = vmul.f32 %v434, %v620
      %vm622 = vcmp.eq.f32.partialorder %v434, inf
      %v623 = vsel %vm622, %v434, %v621
      %vm624 = vcmp.eq.f32.partialorder %v434, 0.0
      %v625 = vand.u32 %v434, 2147483648
      %v626 = vsel %vm624, %v625, %v623
      %v627 = vrsqrt.pop %v437
      %v628 = vmul.f32 %v437, %v627
      %vm629 = vcmp.eq.f32.partialorder %v437, inf
      %v630 = vsel %vm629, %v437, %v628
      %vm631 = vcmp.eq.f32.partialorder %v437, 0.0
      %v632 = vand.u32 %v437, 2147483648
      %v633 = vsel %vm631, %v632, %v630
      %v634 = vrsqrt.pop %v440
      %v635 = vmul.f32 %v440, %v634
      %vm636 = vcmp.eq.f32.partialorder %v440, inf
      %v637 = vsel %vm636, %v440, %v635
      %vm638 = vcmp.eq.f32.partialorder %v440, 0.0
      %v639 = vand.u32 %v440, 2147483648
      %v640 = vsel %vm638, %v639, %v637
      %v641 = vrsqrt.pop %v443
      %v642 = vmul.f32 %v443, %v641
      %vm643 = vcmp.eq.f32.partialorder %v443, inf
      %v644 = vsel %vm643, %v443, %v642
      %vm645 = vcmp.eq.f32.partialorder %v443, 0.0
      %v646 = vand.u32 %v443, 2147483648
      %v647 = vsel %vm645, %v646, %v644
      %v648 = vrsqrt.pop %v446
      %v649 = vmul.f32 %v446, %v648
      %vm650 = vcmp.eq.f32.partialorder %v446, inf
      %v651 = vsel %vm650, %v446, %v649
      %vm652 = vcmp.eq.f32.partialorder %v446, 0.0
      %v653 = vand.u32 %v446, 2147483648
      %v654 = vsel %vm652, %v653, %v651
      %v655 = vrsqrt.pop %v449
      %v656 = vmul.f32 %v449, %v655
      %vm657 = vcmp.eq.f32.partialorder %v449, inf
      %v658 = vsel %vm657, %v449, %v656
      %vm659 = vcmp.eq.f32.partialorder %v449, 0.0
      %v660 = vand.u32 %v449, 2147483648
      %v661 = vsel %vm659, %v660, %v658
      %v662 = vrsqrt.pop %v452
      %v663 = vmul.f32 %v452, %v662
      %vm664 = vcmp.eq.f32.partialorder %v452, inf
      %v665 = vsel %vm664, %v452, %v663
      %vm666 = vcmp.eq.f32.partialorder %v452, 0.0
      %v667 = vand.u32 %v452, 2147483648
      %v668 = vsel %vm666, %v667, %v665
      %v669 = vrsqrt.pop %v455
      %v670 = vmul.f32 %v455, %v669
      %vm671 = vcmp.eq.f32.partialorder %v455, inf
      %v672 = vsel %vm671, %v455, %v670
      %vm673 = vcmp.eq.f32.partialorder %v455, 0.0
      %v674 = vand.u32 %v455, 2147483648
      %v675 = vsel %vm673, %v674, %v672
      %v676 = vrsqrt.pop %v458
      %v677 = vmul.f32 %v458, %v676
      %vm678 = vcmp.eq.f32.partialorder %v458, inf
      %v679 = vsel %vm678, %v458, %v677
      %vm680 = vcmp.eq.f32.partialorder %v458, 0.0
      %v681 = vand.u32 %v458, 2147483648
      %v682 = vsel %vm680, %v681, %v679
      %v683 = vmax.f32 %v465, 1e-12
      %v684 = vmax.f32 %v472, 1e-12
      %v685 = vmax.f32 %v479, 1e-12
      %v686 = vmax.f32 %v486, 1e-12
      %v687 = vmax.f32 %v493, 1e-12
      %v688 = vmax.f32 %v500, 1e-12
      %v689 = vmax.f32 %v507, 1e-12
      %v690 = vmax.f32 %v514, 1e-12
      %v691 = vmax.f32 %v521, 1e-12
      %v692 = vmax.f32 %v528, 1e-12
      %v693 = vmax.f32 %v535, 1e-12
      %v694 = vmax.f32 %v542, 1e-12
      %v695 = vmax.f32 %v549, 1e-12
      %v696 = vmax.f32 %v556, 1e-12
      %v697 = vmax.f32 %v563, 1e-12
      %v698 = vmax.f32 %v570, 1e-12
      %v699 = vmax.f32 %v577, 1e-12
      %v700 = vmax.f32 %v584, 1e-12
      %v701 = vmax.f32 %v591, 1e-12
      %v702 = vmax.f32 %v598, 1e-12
      %v703 = vmax.f32 %v605, 1e-12
      %v704 = vmax.f32 %v612, 1e-12
      %v705 = vmax.f32 %v619, 1e-12
      %v706 = vmax.f32 %v626, 1e-12
      %v707 = vmax.f32 %v633, 1e-12
      %v708 = vmax.f32 %v640, 1e-12
      %v709 = vmax.f32 %v647, 1e-12
      %v710 = vmax.f32 %v654, 1e-12
      %v711 = vmax.f32 %v661, 1e-12
      %v712 = vmax.f32 %v668, 1e-12
      %v713 = vmax.f32 %v675, 1e-12
      %v714 = vmax.f32 %v682, 1e-12
      %v715 = vrcp.pop %v683
      %v716 = vmul.f32 %v282, %v715
      %v717 = vrcp.pop %v684
      %v718 = vmul.f32 %v283, %v717
      %v719 = vrcp.pop %v685
      %v720 = vmul.f32 %v284, %v719
      %v721 = vrcp.pop %v686
      %v722 = vmul.f32 %v285, %v721
      %v723 = vrcp.pop %v687
      %v724 = vmul.f32 %v286, %v723
      %v725 = vrcp.pop %v688
      %v726 = vmul.f32 %v287, %v725
      %v727 = vrcp.pop %v689
      %v728 = vmul.f32 %v288, %v727
      %v729 = vrcp.pop %v690
      %v730 = vmul.f32 %v289, %v729
      %v731 = vrcp.pop %v691
      %v732 = vmul.f32 %v290, %v731
      %v733 = vrcp.pop %v692
      %v734 = vmul.f32 %v291, %v733
      %v735 = vrcp.pop %v693
      %v736 = vmul.f32 %v292, %v735
      %v737 = vrcp.pop %v694
      %v738 = vmul.f32 %v293, %v737
      %v739 = vrcp.pop %v695
      %v740 = vmul.f32 %v294, %v739
      %v741 = vrcp.pop %v696
      %v742 = vmul.f32 %v295, %v741
      %v743 = vrcp.pop %v697
      %v744 = vmul.f32 %v296, %v743
      %v745 = vrcp.pop %v698
      %v746 = vmul.f32 %v297, %v745
      %v747 = vrcp.pop %v699
      %v748 = vmul.f32 %v298, %v747
      %v749 = vrcp.pop %v700
      %v750 = vmul.f32 %v299, %v749
      %v751 = vrcp.pop %v701
      %v752 = vmul.f32 %v300, %v751
      %v753 = vrcp.pop %v702
      %v754 = vmul.f32 %v301, %v753
      %v755 = vrcp.pop %v703
      %v756 = vmul.f32 %v302, %v755
      %v757 = vrcp.pop %v704
      %v758 = vmul.f32 %v303, %v757
      %v759 = vrcp.pop %v705
      %v760 = vmul.f32 %v304, %v759
      %v761 = vrcp.pop %v706
      %v762 = vmul.f32 %v305, %v761
      %v763 = vrcp.pop %v707
      %v764 = vmul.f32 %v306, %v763
      %v765 = vrcp.pop %v708
      %v766 = vmul.f32 %v307, %v765
      %v767 = vrcp.pop %v709
      %v768 = vmul.f32 %v308, %v767
      %v769 = vrcp.pop %v710
      %v770 = vmul.f32 %v309, %v769
      %v771 = vrcp.pop %v711
      %v772 = vmul.f32 %v310, %v771
      %v773 = vrcp.pop %v712
      %v774 = vmul.f32 %v311, %v773
      %v775 = vrcp.pop %v713
      %v776 = vmul.f32 %v312, %v775
      %v777 = vrcp.pop %v714
      %v778 = vmul.f32 %v313, %v777
      %v779 = vmul.f32 %v314, %v314
      %v780 = vmul.f32 %v315, %v315
      %v781 = vmul.f32 %v316, %v316
      %v782 = vmul.f32 %v317, %v317
      %v783 = vmul.f32 %v318, %v318
      %v784 = vmul.f32 %v319, %v319
      %v785 = vmul.f32 %v320, %v320
      %v786 = vmul.f32 %v321, %v321
      %v787 = vmul.f32 %v322, %v322
      %v788 = vmul.f32 %v323, %v323
      %v789 = vmul.f32 %v324, %v324
      %v790 = vmul.f32 %v325, %v325
      %v791 = vmul.f32 %v326, %v326
      %v792 = vmul.f32 %v327, %v327
      %v793 = vmul.f32 %v328, %v328
      %v794 = vmul.f32 %v329, %v329
      %v795 = vsel %vm362, %v779, 0.0
      %796 = vadd.xlane.f32.xlu0 %v795
      %v797 = vpop.xlane.xlu0 %796
      %v798 = vsel %vm362, %v780, 0.0
      %799 = vadd.xlane.f32.xlu0 %v798
      %v800 = vpop.xlane.xlu0 %799
      %v801 = vsel %vm362, %v781, 0.0
      %802 = vadd.xlane.f32.xlu0 %v801
      %v803 = vpop.xlane.xlu0 %802
      %v804 = vsel %vm362, %v782, 0.0
      %805 = vadd.xlane.f32.xlu0 %v804
      %v806 = vpop.xlane.xlu0 %805
      %v807 = vsel %vm362, %v783, 0.0
      %808 = vadd.xlane.f32.xlu0 %v807
      %v809 = vpop.xlane.xlu0 %808
      %v810 = vsel %vm362, %v784, 0.0
      %811 = vadd.xlane.f32.xlu0 %v810
      %v812 = vpop.xlane.xlu0 %811
      %v813 = vsel %vm362, %v785, 0.0
      %814 = vadd.xlane.f32.xlu0 %v813
      %v815 = vpop.xlane.xlu0 %814
      %v816 = vsel %vm362, %v786, 0.0
      %817 = vadd.xlane.f32.xlu0 %v816
      %v818 = vpop.xlane.xlu0 %817
      %v819 = vsel %vm362, %v787, 0.0
      %820 = vadd.xlane.f32.xlu0 %v819
      %v821 = vpop.xlane.xlu0 %820
      %v822 = vsel %vm362, %v788, 0.0
      %823 = vadd.xlane.f32.xlu0 %v822
      %v824 = vpop.xlane.xlu0 %823
      %v825 = vsel %vm362, %v789, 0.0
      %826 = vadd.xlane.f32.xlu0 %v825
      %v827 = vpop.xlane.xlu0 %826
      %v828 = vsel %vm362, %v790, 0.0
      %829 = vadd.xlane.f32.xlu0 %v828
      %v830 = vpop.xlane.xlu0 %829
      %v831 = vsel %vm362, %v791, 0.0
      %832 = vadd.xlane.f32.xlu0 %v831
      %v833 = vpop.xlane.xlu0 %832
      %v834 = vsel %vm362, %v792, 0.0
      %835 = vadd.xlane.f32.xlu0 %v834
      %v836 = vpop.xlane.xlu0 %835
      %v837 = vsel %vm362, %v793, 0.0
      %838 = vadd.xlane.f32.xlu0 %v837
      %v839 = vpop.xlane.xlu0 %838
      %v840 = vsel %vm362, %v794, 0.0
      %841 = vadd.xlane.f32.xlu0 %v840
      %v842 = vpop.xlane.xlu0 %841
      %v843 = vrsqrt.pop %v797
      %v844 = vmul.f32 %v797, %v843
      %vm845 = vcmp.eq.f32.partialorder %v797, inf
      %v846 = vsel %vm845, %v797, %v844
      %vm847 = vcmp.eq.f32.partialorder %v797, 0.0
      %v848 = vand.u32 %v797, 2147483648
      %v849 = vsel %vm847, %v848, %v846
      %v850 = vrsqrt.pop %v800
      %v851 = vmul.f32 %v800, %v850
      %vm852 = vcmp.eq.f32.partialorder %v800, inf
      %v853 = vsel %vm852, %v800, %v851
      %vm854 = vcmp.eq.f32.partialorder %v800, 0.0
      %v855 = vand.u32 %v800, 2147483648
      %v856 = vsel %vm854, %v855, %v853
      %v857 = vrsqrt.pop %v803
      %v858 = vmul.f32 %v803, %v857
      %vm859 = vcmp.eq.f32.partialorder %v803, inf
      %v860 = vsel %vm859, %v803, %v858
      %vm861 = vcmp.eq.f32.partialorder %v803, 0.0
      %v862 = vand.u32 %v803, 2147483648
      %v863 = vsel %vm861, %v862, %v860
      %v864 = vrsqrt.pop %v806
      %v865 = vmul.f32 %v806, %v864
      %vm866 = vcmp.eq.f32.partialorder %v806, inf
      %v867 = vsel %vm866, %v806, %v865
      %vm868 = vcmp.eq.f32.partialorder %v806, 0.0
      %v869 = vand.u32 %v806, 2147483648
      %v870 = vsel %vm868, %v869, %v867
      %v871 = vrsqrt.pop %v809
      %v872 = vmul.f32 %v809, %v871
      %vm873 = vcmp.eq.f32.partialorder %v809, inf
      %v874 = vsel %vm873, %v809, %v872
      %vm875 = vcmp.eq.f32.partialorder %v809, 0.0
      %v876 = vand.u32 %v809, 2147483648
      %v877 = vsel %vm875, %v876, %v874
      %v878 = vrsqrt.pop %v812
      %v879 = vmul.f32 %v812, %v878
      %vm880 = vcmp.eq.f32.partialorder %v812, inf
      %v881 = vsel %vm880, %v812, %v879
      %vm882 = vcmp.eq.f32.partialorder %v812, 0.0
      %v883 = vand.u32 %v812, 2147483648
      %v884 = vsel %vm882, %v883, %v881
      %v885 = vrsqrt.pop %v815
      %v886 = vmul.f32 %v815, %v885
      %vm887 = vcmp.eq.f32.partialorder %v815, inf
      %v888 = vsel %vm887, %v815, %v886
      %vm889 = vcmp.eq.f32.partialorder %v815, 0.0
      %v890 = vand.u32 %v815, 2147483648
      %v891 = vsel %vm889, %v890, %v888
      %v892 = vrsqrt.pop %v818
      %v893 = vmul.f32 %v818, %v892
      %vm894 = vcmp.eq.f32.partialorder %v818, inf
      %v895 = vsel %vm894, %v818, %v893
      %vm896 = vcmp.eq.f32.partialorder %v818, 0.0
      %v897 = vand.u32 %v818, 2147483648
      %v898 = vsel %vm896, %v897, %v895
      %v899 = vrsqrt.pop %v821
      %v900 = vmul.f32 %v821, %v899
      %vm901 = vcmp.eq.f32.partialorder %v821, inf
      %v902 = vsel %vm901, %v821, %v900
      %vm903 = vcmp.eq.f32.partialorder %v821, 0.0
      %v904 = vand.u32 %v821, 2147483648
      %v905 = vsel %vm903, %v904, %v902
      %v906 = vrsqrt.pop %v824
      %v907 = vmul.f32 %v824, %v906
      %vm908 = vcmp.eq.f32.partialorder %v824, inf
      %v909 = vsel %vm908, %v824, %v907
      %vm910 = vcmp.eq.f32.partialorder %v824, 0.0
      %v911 = vand.u32 %v824, 2147483648
      %v912 = vsel %vm910, %v911, %v909
      %v913 = vrsqrt.pop %v827
      %v914 = vmul.f32 %v827, %v913
      %vm915 = vcmp.eq.f32.partialorder %v827, inf
      %v916 = vsel %vm915, %v827, %v914
      %vm917 = vcmp.eq.f32.partialorder %v827, 0.0
      %v918 = vand.u32 %v827, 2147483648
      %v919 = vsel %vm917, %v918, %v916
      %v920 = vrsqrt.pop %v830
      %v921 = vmul.f32 %v830, %v920
      %vm922 = vcmp.eq.f32.partialorder %v830, inf
      %v923 = vsel %vm922, %v830, %v921
      %vm924 = vcmp.eq.f32.partialorder %v830, 0.0
      %v925 = vand.u32 %v830, 2147483648
      %v926 = vsel %vm924, %v925, %v923
      %v927 = vrsqrt.pop %v833
      %v928 = vmul.f32 %v833, %v927
      %vm929 = vcmp.eq.f32.partialorder %v833, inf
      %v930 = vsel %vm929, %v833, %v928
      %vm931 = vcmp.eq.f32.partialorder %v833, 0.0
      %v932 = vand.u32 %v833, 2147483648
      %v933 = vsel %vm931, %v932, %v930
      %v934 = vrsqrt.pop %v836
      %v935 = vmul.f32 %v836, %v934
      %vm936 = vcmp.eq.f32.partialorder %v836, inf
      %v937 = vsel %vm936, %v836, %v935
      %vm938 = vcmp.eq.f32.partialorder %v836, 0.0
      %v939 = vand.u32 %v836, 2147483648
      %v940 = vsel %vm938, %v939, %v937
      %v941 = vrsqrt.pop %v839
      %v942 = vmul.f32 %v839, %v941
      %vm943 = vcmp.eq.f32.partialorder %v839, inf
      %v944 = vsel %vm943, %v839, %v942
      %vm945 = vcmp.eq.f32.partialorder %v839, 0.0
      %v946 = vand.u32 %v839, 2147483648
      %v947 = vsel %vm945, %v946, %v944
      %v948 = vrsqrt.pop %v842
      %v949 = vmul.f32 %v842, %v948
      %vm950 = vcmp.eq.f32.partialorder %v842, inf
      %v951 = vsel %vm950, %v842, %v949
      %vm952 = vcmp.eq.f32.partialorder %v842, 0.0
      %v953 = vand.u32 %v842, 2147483648
      %v954 = vsel %vm952, %v953, %v951
      %v955 = vmax.f32 %v849, 1e-12
      %v956 = vmax.f32 %v856, 1e-12
      %v957 = vmax.f32 %v863, 1e-12
      %v958 = vmax.f32 %v870, 1e-12
      %v959 = vmax.f32 %v877, 1e-12
      %v960 = vmax.f32 %v884, 1e-12
      %v961 = vmax.f32 %v891, 1e-12
      %v962 = vmax.f32 %v898, 1e-12
      %v963 = vmax.f32 %v905, 1e-12
      %v964 = vmax.f32 %v912, 1e-12
      %v965 = vmax.f32 %v919, 1e-12
      %v966 = vmax.f32 %v926, 1e-12
      %v967 = vmax.f32 %v933, 1e-12
      %v968 = vmax.f32 %v940, 1e-12
      %v969 = vmax.f32 %v947, 1e-12
      %v970 = vmax.f32 %v954, 1e-12
      %v971 = vrcp.pop %v955
      %v972 = vmul.f32 %v314, %v971
      %v973 = vrcp.pop %v956
      %v974 = vmul.f32 %v315, %v973
      %v975 = vrcp.pop %v957
      %v976 = vmul.f32 %v316, %v975
      %v977 = vrcp.pop %v958
      %v978 = vmul.f32 %v317, %v977
      %v979 = vrcp.pop %v959
      %v980 = vmul.f32 %v318, %v979
      %v981 = vrcp.pop %v960
      %v982 = vmul.f32 %v319, %v981
      %v983 = vrcp.pop %v961
      %v984 = vmul.f32 %v320, %v983
      %v985 = vrcp.pop %v962
      %v986 = vmul.f32 %v321, %v985
      %v987 = vrcp.pop %v963
      %v988 = vmul.f32 %v322, %v987
      %v989 = vrcp.pop %v964
      %v990 = vmul.f32 %v323, %v989
      %v991 = vrcp.pop %v965
      %v992 = vmul.f32 %v324, %v991
      %v993 = vrcp.pop %v966
      %v994 = vmul.f32 %v325, %v993
      %v995 = vrcp.pop %v967
      %v996 = vmul.f32 %v326, %v995
      %v997 = vrcp.pop %v968
      %v998 = vmul.f32 %v327, %v997
      %v999 = vrcp.pop %v969
      %v1000 = vmul.f32 %v328, %v999
      %v1001 = vrcp.pop %v970
      %v1002 = vmul.f32 %v329, %v1001
      %v1004 = vsel %vm362, %v972, 0
      %v1007 = vsel %vm362, %v974, 0
      %v1010 = vsel %vm362, %v976, 0
      %v1013 = vsel %vm362, %v978, 0
      %v1016 = vsel %vm362, %v980, 0
      %v1019 = vsel %vm362, %v982, 0
      %v1022 = vsel %vm362, %v984, 0
      %v1025 = vsel %vm362, %v986, 0
      %v1028 = vsel %vm362, %v988, 0
      %v1031 = vsel %vm362, %v990, 0
      %v1034 = vsel %vm362, %v992, 0
      %v1037 = vsel %vm362, %v994, 0
      %v1040 = vsel %vm362, %v996, 0
      %v1043 = vsel %vm362, %v998, 0
      %v1046 = vsel %vm362, %v1000, 0
      %v1049 = vsel %vm362, %v1002, 0
      %v1052 = vsel %vm362, %v716, 0
      %v1055 = vsel %vm362, %v718, 0
      %v1058 = vsel %vm362, %v720, 0
      %v1061 = vsel %vm362, %v722, 0
      %v1064 = vsel %vm362, %v724, 0
      %v1067 = vsel %vm362, %v726, 0
      %v1070 = vsel %vm362, %v728, 0
      %v1073 = vsel %vm362, %v730, 0
      %v1076 = vsel %vm362, %v732, 0
      %v1079 = vsel %vm362, %v734, 0
      %v1082 = vsel %vm362, %v736, 0
      %v1085 = vsel %vm362, %v738, 0
      %v1088 = vsel %vm362, %v740, 0
      %v1091 = vsel %vm362, %v742, 0
      %v1094 = vsel %vm362, %v744, 0
      %v1097 = vsel %vm362, %v746, 0
      %v1100 = vsel %vm362, %v748, 0
      %v1103 = vsel %vm362, %v750, 0
      %v1106 = vsel %vm362, %v752, 0
      %v1109 = vsel %vm362, %v754, 0
      %v1112 = vsel %vm362, %v756, 0
      %v1115 = vsel %vm362, %v758, 0
      %v1118 = vsel %vm362, %v760, 0
      %v1121 = vsel %vm362, %v762, 0
      %v1124 = vsel %vm362, %v764, 0
      %v1127 = vsel %vm362, %v766, 0
      %v1130 = vsel %vm362, %v768, 0
      %v1133 = vsel %vm362, %v770, 0
      %v1136 = vsel %vm362, %v772, 0
      %v1139 = vsel %vm362, %v774, 0
      %v1142 = vsel %vm362, %v776, 0
      %v1145 = vsel %vm362, %v778, 0
      %1147 = vmatprep.subr.mxu0 0.0
      %1148 = vmatpush1.xpose.msra.mxu0 %v1052
      %1149 = vmatprep.subr.mxu0 0.0
      %1150 = vmatpush1.xpose.msra.mxu0 %v1055
      %1151 = vmatprep.subr.mxu0 0.0
      %1152 = vmatpush1.xpose.msra.mxu0 %v1058
      %1153 = vmatprep.subr.mxu0 0.0
      %1154 = vmatpush1.xpose.msra.mxu0 %v1061
      %1155 = vmatprep.subr.mxu0 0.0
      %1156 = vmatpush1.xpose.msra.mxu0 %v1064
      %1157 = vmatprep.subr.mxu0 0.0
      %1158 = vmatpush1.xpose.msra.mxu0 %v1067
      %1159 = vmatprep.subr.mxu0 0.0
      %1160 = vmatpush1.xpose.msra.mxu0 %v1070
      %1161 = vmatprep.subr.mxu0 0.0
      %1162 = vmatpush1.xpose.msra.mxu0 %v1073
      %1163 = vmatprep.subr.mxu0 0.0
      %1164 = vmatpush1.xpose.msra.mxu0 %v1076
      %1165 = vmatprep.subr.mxu0 0.0
      %1166 = vmatpush1.xpose.msra.mxu0 %v1079
      %1167 = vmatprep.subr.mxu0 0.0
      %1168 = vmatpush1.xpose.msra.mxu0 %v1082
      %1169 = vmatprep.subr.mxu0 0.0
      %1170 = vmatpush1.xpose.msra.mxu0 %v1085
      %1171 = vmatprep.subr.mxu0 0.0
      %1172 = vmatpush1.xpose.msra.mxu0 %v1088
      %1173 = vmatprep.subr.mxu0 0.0
      %1174 = vmatpush1.xpose.msra.mxu0 %v1091
      %1175 = vmatprep.subr.mxu0 0.0
      %1176 = vmatpush1.xpose.msra.mxu0 %v1094
      %1177 = vmatprep.subr.mxu0 0.0
      %1178 = vmatpush1.xpose.msra.mxu0 %v1097
      %1179 = vmatprep.subr.mxu0 0.0
      %1180 = vmatpush1.xpose.msra.mxu0 %v1100
      %1181 = vmatprep.subr.mxu0 0.0
      %1182 = vmatpush1.xpose.msra.mxu0 %v1103
      %1183 = vmatprep.subr.mxu0 0.0
      %1184 = vmatpush1.xpose.msra.mxu0 %v1106
      %1185 = vmatprep.subr.mxu0 0.0
      %1186 = vmatpush1.xpose.msra.mxu0 %v1109
      %1187 = vmatprep.subr.mxu0 0.0
      %1188 = vmatpush1.xpose.msra.mxu0 %v1112
      %1189 = vmatprep.subr.mxu0 0.0
      %1190 = vmatpush1.xpose.msra.mxu0 %v1115
      %1191 = vmatprep.subr.mxu0 0.0
      %1192 = vmatpush1.xpose.msra.mxu0 %v1118
      %1193 = vmatprep.subr.mxu0 0.0
      %1194 = vmatpush1.xpose.msra.mxu0 %v1121
      %1195 = vmatprep.subr.mxu0 0.0
      %1196 = vmatpush1.xpose.msra.mxu0 %v1124
      %1197 = vmatprep.subr.mxu0 0.0
      %1198 = vmatpush1.xpose.msra.mxu0 %v1127
      %1199 = vmatprep.subr.mxu0 0.0
      %1200 = vmatpush1.xpose.msra.mxu0 %v1130
      %1201 = vmatprep.subr.mxu0 0.0
      %1202 = vmatpush1.xpose.msra.mxu0 %v1133
      %1203 = vmatprep.subr.mxu0 0.0
      %1204 = vmatpush1.xpose.msra.mxu0 %v1136
      %1205 = vmatprep.subr.mxu0 0.0
      %1206 = vmatpush1.xpose.msra.mxu0 %v1139
      %1207 = vmatprep.subr.mxu0 0.0
      %1208 = vmatpush1.xpose.msra.mxu0 %v1142
      %1209 = vmatprep.subr.mxu0 0.0
      %1210 = vmatpush1.xpose.msra.mxu0 %v1145
      %1211 = vmatprep.mubr.f32.mxu0 0.0
      %1212 = vmatmul.mubr.f32.gmra.mrb[0].mxu0 %v1004
      %v1213 = vpop.f32.mrb[0].mxu0
      %v1214 = vadd.f32 0.0, %v1213
      %v1215 = vpop.f32.mrb[0].mxu0
      %v1216 = vadd.f32 0.0, %v1215
      %1217 = vmatprep.mubr.f32.mxu0 0.0
      %1218 = vmatmul.mubr.f32.gmra.mrb[0].mxu0 %v1007
      %v1219 = vpop.f32.mrb[0].mxu0
      %v1220 = vadd.f32 0.0, %v1219
      %v1221 = vpop.f32.mrb[0].mxu0
      %v1222 = vadd.f32 0.0, %v1221
      %1223 = vmatprep.mubr.f32.mxu0 0.0
      %1224 = vmatmul.mubr.f32.gmra.mrb[0].mxu0 %v1010
      %v1225 = vpop.f32.mrb[0].mxu0
      %v1226 = vadd.f32 0.0, %v1225
      %v1227 = vpop.f32.mrb[0].mxu0
      %v1228 = vadd.f32 0.0, %v1227
      %1229 = vmatprep.mubr.f32.mxu0 0.0
      %1230 = vmatmul.mubr.f32.gmra.mrb[0].mxu0 %v1013
      %v1231 = vpop.f32.mrb[0].mxu0
      %v1232 = vadd.f32 0.0, %v1231
      %v1233 = vpop.f32.mrb[0].mxu0
      %v1234 = vadd.f32 0.0, %v1233
      %1235 = vmatprep.mubr.f32.mxu0 0.0
      %1236 = vmatmul.mubr.f32.gmra.mrb[0].mxu0 %v1016
      %v1237 = vpop.f32.mrb[0].mxu0
      %v1238 = vadd.f32 0.0, %v1237
      %v1239 = vpop.f32.mrb[0].mxu0
      %v1240 = vadd.f32 0.0, %v1239
      %1241 = vmatprep.mubr.f32.mxu0 0.0
      %1242 = vmatmul.mubr.f32.gmra.mrb[0].mxu0 %v1019
      %v1243 = vpop.f32.mrb[0].mxu0
      %v1244 = vadd.f32 0.0, %v1243
      %v1245 = vpop.f32.mrb[0].mxu0
      %v1246 = vadd.f32 0.0, %v1245
      %1247 = vmatprep.mubr.f32.mxu0 0.0
      %1248 = vmatmul.mubr.f32.gmra.mrb[0].mxu0 %v1022
      %v1249 = vpop.f32.mrb[0].mxu0
      %v1250 = vadd.f32 0.0, %v1249
      %v1251 = vpop.f32.mrb[0].mxu0
      %v1252 = vadd.f32 0.0, %v1251
      %1253 = vmatprep.mubr.f32.mxu0 0.0
      %1254 = vmatmul.mubr.f32.gmra.mrb[0].mxu0 %v1025
      %v1255 = vpop.f32.mrb[0].mxu0
      %v1256 = vadd.f32 0.0, %v1255
      %v1257 = vpop.f32.mrb[0].mxu0
      %v1258 = vadd.f32 0.0, %v1257
      %1259 = vmatprep.mubr.f32.mxu0 0.0
      %1260 = vmatmul.mubr.f32.gmra.mrb[0].mxu0 %v1028
      %v1261 = vpop.f32.mrb[0].mxu0
      %v1262 = vadd.f32 0.0, %v1261
      %v1263 = vpop.f32.mrb[0].mxu0
      %v1264 = vadd.f32 0.0, %v1263
      %1265 = vmatprep.mubr.f32.mxu0 0.0
      %1266 = vmatmul.mubr.f32.gmra.mrb[0].mxu0 %v1031
      %v1267 = vpop.f32.mrb[0].mxu0
      %v1268 = vadd.f32 0.0, %v1267
      %v1269 = vpop.f32.mrb[0].mxu0
      %v1270 = vadd.f32 0.0, %v1269
      %1271 = vmatprep.mubr.f32.mxu0 0.0
      %1272 = vmatmul.mubr.f32.gmra.mrb[0].mxu0 %v1034
      %v1273 = vpop.f32.mrb[0].mxu0
      %v1274 = vadd.f32 0.0, %v1273
      %v1275 = vpop.f32.mrb[0].mxu0
      %v1276 = vadd.f32 0.0, %v1275
      %1277 = vmatprep.mubr.f32.mxu0 0.0
      %1278 = vmatmul.mubr.f32.gmra.mrb[0].mxu0 %v1037
      %v1279 = vpop.f32.mrb[0].mxu0
      %v1280 = vadd.f32 0.0, %v1279
      %v1281 = vpop.f32.mrb[0].mxu0
      %v1282 = vadd.f32 0.0, %v1281
      %1283 = vmatprep.mubr.f32.mxu0 0.0
      %1284 = vmatmul.mubr.f32.gmra.mrb[0].mxu0 %v1040
      %v1285 = vpop.f32.mrb[0].mxu0
      %v1286 = vadd.f32 0.0, %v1285
      %v1287 = vpop.f32.mrb[0].mxu0
      %v1288 = vadd.f32 0.0, %v1287
      %1289 = vmatprep.mubr.f32.mxu0 0.0
      %1290 = vmatmul.mubr.f32.gmra.mrb[0].mxu0 %v1043
      %v1291 = vpop.f32.mrb[0].mxu0
      %v1292 = vadd.f32 0.0, %v1291
      %v1293 = vpop.f32.mrb[0].mxu0
      %v1294 = vadd.f32 0.0, %v1293
      %1295 = vmatprep.mubr.f32.mxu0 0.0
      %1296 = vmatmul.mubr.f32.gmra.mrb[0].mxu0 %v1046
      %v1297 = vpop.f32.mrb[0].mxu0
      %v1298 = vadd.f32 0.0, %v1297
      %v1299 = vpop.f32.mrb[0].mxu0
      %v1300 = vadd.f32 0.0, %v1299
      %1301 = vmatprep.mubr.f32.mxu0 0.0
      %1302 = vmatmul.mubr.f32.gmra.mrb[0].mxu0 %v1049
      %v1303 = vpop.f32.mrb[0].mxu0
      %v1304 = vadd.f32 0.0, %v1303
      %v1305 = vpop.f32.mrb[0].mxu0
      %v1306 = vadd.f32 0.0, %v1305
      %1307 = vdwg.mxu0
      %v1308 = vlaneseq
      %v1309 = vand.u32 %v1308, 127
      %v1310 = vadd.s32 %v1309, 128
      %v1311 = vcvt.s32.f32 %v1309
      %v1312 = vcvt.s32.f32 %v1310
      %v1313 = vmax.f32 %v1214, %v1216
      %1314 = vmax.xlane.f32.xlu0 %v1313
      %v1315 = vpop.xlane.xlu0 %1314
      %v1316 = vmax.f32 %v1220, %v1222
      %1317 = vmax.xlane.f32.xlu0 %v1316
      %v1318 = vpop.xlane.xlu0 %1317
      %v1319 = vmax.f32 %v1226, %v1228
      %1320 = vmax.xlane.f32.xlu0 %v1319
      %v1321 = vpop.xlane.xlu0 %1320
      %v1322 = vmax.f32 %v1232, %v1234
      %1323 = vmax.xlane.f32.xlu0 %v1322
      %v1324 = vpop.xlane.xlu0 %1323
      %v1325 = vmax.f32 %v1238, %v1240
      %1326 = vmax.xlane.f32.xlu0 %v1325
      %v1327 = vpop.xlane.xlu0 %1326
      %v1328 = vmax.f32 %v1244, %v1246
      %1329 = vmax.xlane.f32.xlu0 %v1328
      %v1330 = vpop.xlane.xlu0 %1329
      %v1331 = vmax.f32 %v1250, %v1252
      %1332 = vmax.xlane.f32.xlu0 %v1331
      %v1333 = vpop.xlane.xlu0 %1332
      %v1334 = vmax.f32 %v1256, %v1258
      %1335 = vmax.xlane.f32.xlu0 %v1334
      %v1336 = vpop.xlane.xlu0 %1335
      %v1337 = vmax.f32 %v1262, %v1264
      %1338 = vmax.xlane.f32.xlu0 %v1337
      %v1339 = vpop.xlane.xlu0 %1338
      %v1340 = vmax.f32 %v1268, %v1270
      %1341 = vmax.xlane.f32.xlu0 %v1340
      %v1342 = vpop.xlane.xlu0 %1341
      %v1343 = vmax.f32 %v1274, %v1276
      %1344 = vmax.xlane.f32.xlu0 %v1343
      %v1345 = vpop.xlane.xlu0 %1344
      %v1346 = vmax.f32 %v1280, %v1282
      %1347 = vmax.xlane.f32.xlu0 %v1346
      %v1348 = vpop.xlane.xlu0 %1347
      %v1349 = vmax.f32 %v1286, %v1288
      %1350 = vmax.xlane.f32.xlu0 %v1349
      %v1351 = vpop.xlane.xlu0 %1350
      %v1352 = vmax.f32 %v1292, %v1294
      %1353 = vmax.xlane.f32.xlu0 %v1352
      %v1354 = vpop.xlane.xlu0 %1353
      %v1355 = vmax.f32 %v1298, %v1300
      %1356 = vmax.xlane.f32.xlu0 %v1355
      %v1357 = vpop.xlane.xlu0 %1356
      %v1358 = vmax.f32 %v1304, %v1306
      %1359 = vmax.xlane.f32.xlu0 %v1358
      %v1360 = vpop.xlane.xlu0 %1359
      %vm1361 = vcmp.ge.f32.partialorder %v1214, %v1315
      %vm1362 = vcmp.ge.f32.partialorder %v1216, %v1315
      %vm1363 = vcmp.ge.f32.partialorder %v1220, %v1318
      %vm1364 = vcmp.ge.f32.partialorder %v1222, %v1318
      %vm1365 = vcmp.ge.f32.partialorder %v1226, %v1321
      %vm1366 = vcmp.ge.f32.partialorder %v1228, %v1321
      %vm1367 = vcmp.ge.f32.partialorder %v1232, %v1324
      %vm1368 = vcmp.ge.f32.partialorder %v1234, %v1324
      %vm1369 = vcmp.ge.f32.partialorder %v1238, %v1327
      %vm1370 = vcmp.ge.f32.partialorder %v1240, %v1327
      %vm1371 = vcmp.ge.f32.partialorder %v1244, %v1330
      %vm1372 = vcmp.ge.f32.partialorder %v1246, %v1330
      %vm1373 = vcmp.ge.f32.partialorder %v1250, %v1333
      %vm1374 = vcmp.ge.f32.partialorder %v1252, %v1333
      %vm1375 = vcmp.ge.f32.partialorder %v1256, %v1336
      %vm1376 = vcmp.ge.f32.partialorder %v1258, %v1336
      %vm1377 = vcmp.ge.f32.partialorder %v1262, %v1339
      %vm1378 = vcmp.ge.f32.partialorder %v1264, %v1339
      %vm1379 = vcmp.ge.f32.partialorder %v1268, %v1342
      %vm1380 = vcmp.ge.f32.partialorder %v1270, %v1342
      %vm1381 = vcmp.ge.f32.partialorder %v1274, %v1345
      %vm1382 = vcmp.ge.f32.partialorder %v1276, %v1345
      %vm1383 = vcmp.ge.f32.partialorder %v1280, %v1348
      %vm1384 = vcmp.ge.f32.partialorder %v1282, %v1348
      %vm1385 = vcmp.ge.f32.partialorder %v1286, %v1351
      %vm1386 = vcmp.ge.f32.partialorder %v1288, %v1351
      %vm1387 = vcmp.ge.f32.partialorder %v1292, %v1354
      %vm1388 = vcmp.ge.f32.partialorder %v1294, %v1354
      %vm1389 = vcmp.ge.f32.partialorder %v1298, %v1357
      %vm1390 = vcmp.ge.f32.partialorder %v1300, %v1357
      %vm1391 = vcmp.ge.f32.partialorder %v1304, %v1360
      %vm1392 = vcmp.ge.f32.partialorder %v1306, %v1360
      %v1393 = vsel %vm1361, %v1311, 256.0
      %v1394 = vsel %vm1362, %v1312, 256.0
      %v1395 = vsel %vm1363, %v1311, 256.0
      %v1396 = vsel %vm1364, %v1312, 256.0
      %v1397 = vsel %vm1365, %v1311, 256.0
      %v1398 = vsel %vm1366, %v1312, 256.0
      %v1399 = vsel %vm1367, %v1311, 256.0
      %v1400 = vsel %vm1368, %v1312, 256.0
      %v1401 = vsel %vm1369, %v1311, 256.0
      %v1402 = vsel %vm1370, %v1312, 256.0
      %v1403 = vsel %vm1371, %v1311, 256.0
      %v1404 = vsel %vm1372, %v1312, 256.0
      %v1405 = vsel %vm1373, %v1311, 256.0
      %v1406 = vsel %vm1374, %v1312, 256.0
      %v1407 = vsel %vm1375, %v1311, 256.0
      %v1408 = vsel %vm1376, %v1312, 256.0
      %v1409 = vsel %vm1377, %v1311, 256.0
      %v1410 = vsel %vm1378, %v1312, 256.0
      %v1411 = vsel %vm1379, %v1311, 256.0
      %v1412 = vsel %vm1380, %v1312, 256.0
      %v1413 = vsel %vm1381, %v1311, 256.0
      %v1414 = vsel %vm1382, %v1312, 256.0
      %v1415 = vsel %vm1383, %v1311, 256.0
      %v1416 = vsel %vm1384, %v1312, 256.0
      %v1417 = vsel %vm1385, %v1311, 256.0
      %v1418 = vsel %vm1386, %v1312, 256.0
      %v1419 = vsel %vm1387, %v1311, 256.0
      %v1420 = vsel %vm1388, %v1312, 256.0
      %v1421 = vsel %vm1389, %v1311, 256.0
      %v1422 = vsel %vm1390, %v1312, 256.0
      %v1423 = vsel %vm1391, %v1311, 256.0
      %v1424 = vsel %vm1392, %v1312, 256.0
      %v1425 = vmin.f32 %v1393, %v1394
      %1426 = vmin.xlane.f32.xlu0 %v1425
      %v1427 = vpop.xlane.xlu0 %1426
      %v1428 = vmin.f32 %v1395, %v1396
      %1429 = vmin.xlane.f32.xlu0 %v1428
      %v1430 = vpop.xlane.xlu0 %1429
      %v1431 = vmin.f32 %v1397, %v1398
      %1432 = vmin.xlane.f32.xlu0 %v1431
      %v1433 = vpop.xlane.xlu0 %1432
      %v1434 = vmin.f32 %v1399, %v1400
      %1435 = vmin.xlane.f32.xlu0 %v1434
      %v1436 = vpop.xlane.xlu0 %1435
      %v1437 = vmin.f32 %v1401, %v1402
      %1438 = vmin.xlane.f32.xlu0 %v1437
      %v1439 = vpop.xlane.xlu0 %1438
      %v1440 = vmin.f32 %v1403, %v1404
      %1441 = vmin.xlane.f32.xlu0 %v1440
      %v1442 = vpop.xlane.xlu0 %1441
      %v1443 = vmin.f32 %v1405, %v1406
      %1444 = vmin.xlane.f32.xlu0 %v1443
      %v1445 = vpop.xlane.xlu0 %1444
      %v1446 = vmin.f32 %v1407, %v1408
      %1447 = vmin.xlane.f32.xlu0 %v1446
      %v1448 = vpop.xlane.xlu0 %1447
      %v1449 = vmin.f32 %v1409, %v1410
      %1450 = vmin.xlane.f32.xlu0 %v1449
      %v1451 = vpop.xlane.xlu0 %1450
      %v1452 = vmin.f32 %v1411, %v1412
      %1453 = vmin.xlane.f32.xlu0 %v1452
      %v1454 = vpop.xlane.xlu0 %1453
      %v1455 = vmin.f32 %v1413, %v1414
      %1456 = vmin.xlane.f32.xlu0 %v1455
      %v1457 = vpop.xlane.xlu0 %1456
      %v1458 = vmin.f32 %v1415, %v1416
      %1459 = vmin.xlane.f32.xlu0 %v1458
      %v1460 = vpop.xlane.xlu0 %1459
      %v1461 = vmin.f32 %v1417, %v1418
      %1462 = vmin.xlane.f32.xlu0 %v1461
      %v1463 = vpop.xlane.xlu0 %1462
      %v1464 = vmin.f32 %v1419, %v1420
      %1465 = vmin.xlane.f32.xlu0 %v1464
      %v1466 = vpop.xlane.xlu0 %1465
      %v1467 = vmin.f32 %v1421, %v1422
      %1468 = vmin.xlane.f32.xlu0 %v1467
      %v1469 = vpop.xlane.xlu0 %1468
      %v1470 = vmin.f32 %v1423, %v1424
      %1471 = vmin.xlane.f32.xlu0 %v1470
      %v1472 = vpop.xlane.xlu0 %1471
      %vm1473 = vcmp.eq.f32.partialorder %v1311, %v1427
      %vm1474 = vcmp.eq.f32.partialorder %v1312, %v1427
      %vm1475 = vcmp.eq.f32.partialorder %v1311, %v1430
      %vm1476 = vcmp.eq.f32.partialorder %v1312, %v1430
      %vm1477 = vcmp.eq.f32.partialorder %v1311, %v1433
      %vm1478 = vcmp.eq.f32.partialorder %v1312, %v1433
      %vm1479 = vcmp.eq.f32.partialorder %v1311, %v1436
      %vm1480 = vcmp.eq.f32.partialorder %v1312, %v1436
      %vm1481 = vcmp.eq.f32.partialorder %v1311, %v1439
      %vm1482 = vcmp.eq.f32.partialorder %v1312, %v1439
      %vm1483 = vcmp.eq.f32.partialorder %v1311, %v1442
      %vm1484 = vcmp.eq.f32.partialorder %v1312, %v1442
      %vm1485 = vcmp.eq.f32.partialorder %v1311, %v1445
      %vm1486 = vcmp.eq.f32.partialorder %v1312, %v1445
      %vm1487 = vcmp.eq.f32.partialorder %v1311, %v1448
      %vm1488 = vcmp.eq.f32.partialorder %v1312, %v1448
      %vm1489 = vcmp.eq.f32.partialorder %v1311, %v1451
      %vm1490 = vcmp.eq.f32.partialorder %v1312, %v1451
      %vm1491 = vcmp.eq.f32.partialorder %v1311, %v1454
      %vm1492 = vcmp.eq.f32.partialorder %v1312, %v1454
      %vm1493 = vcmp.eq.f32.partialorder %v1311, %v1457
      %vm1494 = vcmp.eq.f32.partialorder %v1312, %v1457
      %vm1495 = vcmp.eq.f32.partialorder %v1311, %v1460
      %vm1496 = vcmp.eq.f32.partialorder %v1312, %v1460
      %vm1497 = vcmp.eq.f32.partialorder %v1311, %v1463
      %vm1498 = vcmp.eq.f32.partialorder %v1312, %v1463
      %vm1499 = vcmp.eq.f32.partialorder %v1311, %v1466
      %vm1500 = vcmp.eq.f32.partialorder %v1312, %v1466
      %vm1501 = vcmp.eq.f32.partialorder %v1311, %v1469
      %vm1502 = vcmp.eq.f32.partialorder %v1312, %v1469
      %vm1503 = vcmp.eq.f32.partialorder %v1311, %v1472
      %vm1504 = vcmp.eq.f32.partialorder %v1312, %v1472
      %v1505 = vsel %vm1473, 1, 0
      %v1506 = vsel %vm1474, 1, 0
      %v1507 = vsel %vm1475, 1, 0
      %v1508 = vsel %vm1476, 1, 0
      %v1509 = vsel %vm1477, 1, 0
      %v1510 = vsel %vm1478, 1, 0
      %v1511 = vsel %vm1479, 1, 0
      %v1512 = vsel %vm1480, 1, 0
      %v1513 = vsel %vm1481, 1, 0
      %v1514 = vsel %vm1482, 1, 0
      %v1515 = vsel %vm1483, 1, 0
      %v1516 = vsel %vm1484, 1, 0
      %v1517 = vsel %vm1485, 1, 0
      %v1518 = vsel %vm1486, 1, 0
      %v1519 = vsel %vm1487, 1, 0
      %v1520 = vsel %vm1488, 1, 0
      %v1521 = vsel %vm1489, 1, 0
      %v1522 = vsel %vm1490, 1, 0
      %v1523 = vsel %vm1491, 1, 0
      %v1524 = vsel %vm1492, 1, 0
      %v1525 = vsel %vm1493, 1, 0
      %v1526 = vsel %vm1494, 1, 0
      %v1527 = vsel %vm1495, 1, 0
      %v1528 = vsel %vm1496, 1, 0
      %v1529 = vsel %vm1497, 1, 0
      %v1530 = vsel %vm1498, 1, 0
      %v1531 = vsel %vm1499, 1, 0
      %v1532 = vsel %vm1500, 1, 0
      %v1533 = vsel %vm1501, 1, 0
      %v1534 = vsel %vm1502, 1, 0
      %v1535 = vsel %vm1503, 1, 0
      %v1536 = vsel %vm1504, 1, 0
      %v1537 = vcvt.s32.f32 %v1505
      %v1538 = vcvt.s32.f32 %v1506
      %v1539 = vcvt.s32.f32 %v1507
      %v1540 = vcvt.s32.f32 %v1508
      %v1541 = vcvt.s32.f32 %v1509
      %v1542 = vcvt.s32.f32 %v1510
      %v1543 = vcvt.s32.f32 %v1511
      %v1544 = vcvt.s32.f32 %v1512
      %v1545 = vcvt.s32.f32 %v1513
      %v1546 = vcvt.s32.f32 %v1514
      %v1547 = vcvt.s32.f32 %v1515
      %v1548 = vcvt.s32.f32 %v1516
      %v1549 = vcvt.s32.f32 %v1517
      %v1550 = vcvt.s32.f32 %v1518
      %v1551 = vcvt.s32.f32 %v1519
      %v1552 = vcvt.s32.f32 %v1520
      %v1553 = vcvt.s32.f32 %v1521
      %v1554 = vcvt.s32.f32 %v1522
      %v1555 = vcvt.s32.f32 %v1523
      %v1556 = vcvt.s32.f32 %v1524
      %v1557 = vcvt.s32.f32 %v1525
      %v1558 = vcvt.s32.f32 %v1526
      %v1559 = vcvt.s32.f32 %v1527
      %v1560 = vcvt.s32.f32 %v1528
      %v1561 = vcvt.s32.f32 %v1529
      %v1562 = vcvt.s32.f32 %v1530
      %v1563 = vcvt.s32.f32 %v1531
      %v1564 = vcvt.s32.f32 %v1532
      %v1565 = vcvt.s32.f32 %v1533
      %v1566 = vcvt.s32.f32 %v1534
      %v1567 = vcvt.s32.f32 %v1535
      %v1568 = vcvt.s32.f32 %v1536
      %1569 = vmatprep.subr.mxu0 0.0
      %1570 = vmatpush1.msra.mxu0 %v282
      %1571 = vmatprep.subr.mxu0 0.0
      %1572 = vmatpush1.msra.mxu0 %v283
      %1573 = vmatprep.subr.mxu0 0.0
      %1574 = vmatpush1.msra.mxu0 %v284
      %1575 = vmatprep.subr.mxu0 0.0
      %1576 = vmatpush1.msra.mxu0 %v285
      %1577 = vmatprep.subr.mxu0 0.0
      %1578 = vmatpush1.msra.mxu0 %v286
      %1579 = vmatprep.subr.mxu0 0.0
      %1580 = vmatpush1.msra.mxu0 %v287
      %1581 = vmatprep.subr.mxu0 0.0
      %1582 = vmatpush1.msra.mxu0 %v288
      %1583 = vmatprep.subr.mxu0 0.0
      %1584 = vmatpush1.msra.mxu0 %v289
      %1585 = vmatprep.subr.mxu0 0.0
      %1586 = vmatpush1.msra.mxu0 %v290
      %1587 = vmatprep.subr.mxu0 0.0
      %1588 = vmatpush1.msra.mxu0 %v291
      %1589 = vmatprep.subr.mxu0 0.0
      %1590 = vmatpush1.msra.mxu0 %v292
      %1591 = vmatprep.subr.mxu0 0.0
      %1592 = vmatpush1.msra.mxu0 %v293
      %1593 = vmatprep.subr.mxu0 0.0
      %1594 = vmatpush1.msra.mxu0 %v294
      %1595 = vmatprep.subr.mxu0 0.0
      %1596 = vmatpush1.msra.mxu0 %v295
      %1597 = vmatprep.subr.mxu0 0.0
      %1598 = vmatpush1.msra.mxu0 %v296
      %1599 = vmatprep.subr.mxu0 0.0
      %1600 = vmatpush1.msra.mxu0 %v297
      %1601 = vmatprep.subr.mxu0 0.0
      %1602 = vmatpush1.msra.mxu0 %v298
      %1603 = vmatprep.subr.mxu0 0.0
      %1604 = vmatpush1.msra.mxu0 %v299
      %1605 = vmatprep.subr.mxu0 0.0
      %1606 = vmatpush1.msra.mxu0 %v300
      %1607 = vmatprep.subr.mxu0 0.0
      %1608 = vmatpush1.msra.mxu0 %v301
      %1609 = vmatprep.subr.mxu0 0.0
      %1610 = vmatpush1.msra.mxu0 %v302
      %1611 = vmatprep.subr.mxu0 0.0
      %1612 = vmatpush1.msra.mxu0 %v303
      %1613 = vmatprep.subr.mxu0 0.0
      %1614 = vmatpush1.msra.mxu0 %v304
      %1615 = vmatprep.subr.mxu0 0.0
      %1616 = vmatpush1.msra.mxu0 %v305
      %1617 = vmatprep.subr.mxu0 0.0
      %1618 = vmatpush1.msra.mxu0 %v306
      %1619 = vmatprep.subr.mxu0 0.0
      %1620 = vmatpush1.msra.mxu0 %v307
      %1621 = vmatprep.subr.mxu0 0.0
      %1622 = vmatpush1.msra.mxu0 %v308
      %1623 = vmatprep.subr.mxu0 0.0
      %1624 = vmatpush1.msra.mxu0 %v309
      %1625 = vmatprep.subr.mxu0 0.0
      %1626 = vmatpush1.msra.mxu0 %v310
      %1627 = vmatprep.subr.mxu0 0.0
      %1628 = vmatpush1.msra.mxu0 %v311
      %1629 = vmatprep.subr.mxu0 0.0
      %1630 = vmatpush1.msra.mxu0 %v312
      %1631 = vmatprep.subr.mxu0 0.0
      %1632 = vmatpush1.msra.mxu0 %v313
      %1633 = vmatprep.mubr.f32.mxu0 %v1538
      %1634 = vmatmul.mubr.f32.gmra.mrb[0].mxu0 %v1537
      %v1635 = vpop.f32.mrb[0].mxu0
      %v1636 = vadd.f32 0.0, %v1635
      %v1637 = vpop.f32.mrb[0].mxu0
      %1638 = vmatprep.mubr.f32.mxu0 %v1540
      %1639 = vmatmul.mubr.f32.gmra.mrb[0].mxu0 %v1539
      %v1640 = vpop.f32.mrb[0].mxu0
      %v1641 = vadd.f32 0.0, %v1640
      %v1642 = vpop.f32.mrb[0].mxu0
      %1643 = vmatprep.mubr.f32.mxu0 %v1542
      %1644 = vmatmul.mubr.f32.gmra.mrb[0].mxu0 %v1541
      %v1645 = vpop.f32.mrb[0].mxu0
      %v1646 = vadd.f32 0.0, %v1645
      %v1647 = vpop.f32.mrb[0].mxu0
      %1648 = vmatprep.mubr.f32.mxu0 %v1544
      %1649 = vmatmul.mubr.f32.gmra.mrb[0].mxu0 %v1543
      %v1650 = vpop.f32.mrb[0].mxu0
      %v1651 = vadd.f32 0.0, %v1650
      %v1652 = vpop.f32.mrb[0].mxu0
      %1653 = vmatprep.mubr.f32.mxu0 %v1546
      %1654 = vmatmul.mubr.f32.gmra.mrb[0].mxu0 %v1545
      %v1655 = vpop.f32.mrb[0].mxu0
      %v1656 = vadd.f32 0.0, %v1655
      %v1657 = vpop.f32.mrb[0].mxu0
      %1658 = vmatprep.mubr.f32.mxu0 %v1548
      %1659 = vmatmul.mubr.f32.gmra.mrb[0].mxu0 %v1547
      %v1660 = vpop.f32.mrb[0].mxu0
      %v1661 = vadd.f32 0.0, %v1660
      %v1662 = vpop.f32.mrb[0].mxu0
      %1663 = vmatprep.mubr.f32.mxu0 %v1550
      %1664 = vmatmul.mubr.f32.gmra.mrb[0].mxu0 %v1549
      %v1665 = vpop.f32.mrb[0].mxu0
      %v1666 = vadd.f32 0.0, %v1665
      %v1667 = vpop.f32.mrb[0].mxu0
      %1668 = vmatprep.mubr.f32.mxu0 %v1552
      %1669 = vmatmul.mubr.f32.gmra.mrb[0].mxu0 %v1551
      %v1670 = vpop.f32.mrb[0].mxu0
      %v1671 = vadd.f32 0.0, %v1670
      %v1672 = vpop.f32.mrb[0].mxu0
      %1673 = vmatprep.mubr.f32.mxu0 %v1554
      %1674 = vmatmul.mubr.f32.gmra.mrb[0].mxu0 %v1553
      %v1675 = vpop.f32.mrb[0].mxu0
      %v1676 = vadd.f32 0.0, %v1675
      %v1677 = vpop.f32.mrb[0].mxu0
      %1678 = vmatprep.mubr.f32.mxu0 %v1556
      %1679 = vmatmul.mubr.f32.gmra.mrb[0].mxu0 %v1555
      %v1680 = vpop.f32.mrb[0].mxu0
      %v1681 = vadd.f32 0.0, %v1680
      %v1682 = vpop.f32.mrb[0].mxu0
      %1683 = vmatprep.mubr.f32.mxu0 %v1558
      %1684 = vmatmul.mubr.f32.gmra.mrb[0].mxu0 %v1557
      %v1685 = vpop.f32.mrb[0].mxu0
      %v1686 = vadd.f32 0.0, %v1685
      %v1687 = vpop.f32.mrb[0].mxu0
      %1688 = vmatprep.mubr.f32.mxu0 %v1560
      %1689 = vmatmul.mubr.f32.gmra.mrb[0].mxu0 %v1559
      %v1690 = vpop.f32.mrb[0].mxu0
      %v1691 = vadd.f32 0.0, %v1690
      %v1692 = vpop.f32.mrb[0].mxu0
      %1693 = vmatprep.mubr.f32.mxu0 %v1562
      %1694 = vmatmul.mubr.f32.gmra.mrb[0].mxu0 %v1561
      %v1695 = vpop.f32.mrb[0].mxu0
      %v1696 = vadd.f32 0.0, %v1695
      %v1697 = vpop.f32.mrb[0].mxu0
      %1698 = vmatprep.mubr.f32.mxu0 %v1564
      %1699 = vmatmul.mubr.f32.gmra.mrb[0].mxu0 %v1563
      %v1700 = vpop.f32.mrb[0].mxu0
      %v1701 = vadd.f32 0.0, %v1700
      %v1702 = vpop.f32.mrb[0].mxu0
      %1703 = vmatprep.mubr.f32.mxu0 %v1566
      %1704 = vmatmul.mubr.f32.gmra.mrb[0].mxu0 %v1565
      %v1705 = vpop.f32.mrb[0].mxu0
      %v1706 = vadd.f32 0.0, %v1705
      %v1707 = vpop.f32.mrb[0].mxu0
      %1708 = vmatprep.mubr.f32.mxu0 %v1568
      %1709 = vmatmul.mubr.f32.gmra.mrb[0].mxu0 %v1567
      %v1710 = vpop.f32.mrb[0].mxu0
      %v1711 = vadd.f32 0.0, %v1710
      %v1712 = vpop.f32.mrb[0].mxu0
      %1713 = vdwg.mxu0
      %v1714 = vsel %vm1473, -1e+30, %v1214
      %v1715 = vsel %vm1474, -1e+30, %v1216
      %v1716 = vsel %vm1475, -1e+30, %v1220
      %v1717 = vsel %vm1476, -1e+30, %v1222
      %v1718 = vsel %vm1477, -1e+30, %v1226
      %v1719 = vsel %vm1478, -1e+30, %v1228
      %v1720 = vsel %vm1479, -1e+30, %v1232
      %v1721 = vsel %vm1480, -1e+30, %v1234
      %v1722 = vsel %vm1481, -1e+30, %v1238
      %v1723 = vsel %vm1482, -1e+30, %v1240
      %v1724 = vsel %vm1483, -1e+30, %v1244
      %v1725 = vsel %vm1484, -1e+30, %v1246
      %v1726 = vsel %vm1485, -1e+30, %v1250
      %v1727 = vsel %vm1486, -1e+30, %v1252
      %v1728 = vsel %vm1487, -1e+30, %v1256
      %v1729 = vsel %vm1488, -1e+30, %v1258
      %v1730 = vsel %vm1489, -1e+30, %v1262
      %v1731 = vsel %vm1490, -1e+30, %v1264
      %v1732 = vsel %vm1491, -1e+30, %v1268
      %v1733 = vsel %vm1492, -1e+30, %v1270
      %v1734 = vsel %vm1493, -1e+30, %v1274
      %v1735 = vsel %vm1494, -1e+30, %v1276
      %v1736 = vsel %vm1495, -1e+30, %v1280
      %v1737 = vsel %vm1496, -1e+30, %v1282
      %v1738 = vsel %vm1497, -1e+30, %v1286
      %v1739 = vsel %vm1498, -1e+30, %v1288
      %v1740 = vsel %vm1499, -1e+30, %v1292
      %v1741 = vsel %vm1500, -1e+30, %v1294
      %v1742 = vsel %vm1501, -1e+30, %v1298
      %v1743 = vsel %vm1502, -1e+30, %v1300
      %v1744 = vsel %vm1503, -1e+30, %v1304
      %v1745 = vsel %vm1504, -1e+30, %v1306
      %v1746 = vmax.f32 %v1714, %v1715
      %1747 = vmax.xlane.f32.xlu0 %v1746
      %v1748 = vpop.xlane.xlu0 %1747
      %v1749 = vmax.f32 %v1716, %v1717
      %1750 = vmax.xlane.f32.xlu0 %v1749
      %v1751 = vpop.xlane.xlu0 %1750
      %v1752 = vmax.f32 %v1718, %v1719
      %1753 = vmax.xlane.f32.xlu0 %v1752
      %v1754 = vpop.xlane.xlu0 %1753
      %v1755 = vmax.f32 %v1720, %v1721
      %1756 = vmax.xlane.f32.xlu0 %v1755
      %v1757 = vpop.xlane.xlu0 %1756
      %v1758 = vmax.f32 %v1722, %v1723
      %1759 = vmax.xlane.f32.xlu0 %v1758
      %v1760 = vpop.xlane.xlu0 %1759
      %v1761 = vmax.f32 %v1724, %v1725
      %1762 = vmax.xlane.f32.xlu0 %v1761
      %v1763 = vpop.xlane.xlu0 %1762
      %v1764 = vmax.f32 %v1726, %v1727
      %1765 = vmax.xlane.f32.xlu0 %v1764
      %v1766 = vpop.xlane.xlu0 %1765
      %v1767 = vmax.f32 %v1728, %v1729
      %1768 = vmax.xlane.f32.xlu0 %v1767
      %v1769 = vpop.xlane.xlu0 %1768
      %v1770 = vmax.f32 %v1730, %v1731
      %1771 = vmax.xlane.f32.xlu0 %v1770
      %v1772 = vpop.xlane.xlu0 %1771
      %v1773 = vmax.f32 %v1732, %v1733
      %1774 = vmax.xlane.f32.xlu0 %v1773
      %v1775 = vpop.xlane.xlu0 %1774
      %v1776 = vmax.f32 %v1734, %v1735
      %1777 = vmax.xlane.f32.xlu0 %v1776
      %v1778 = vpop.xlane.xlu0 %1777
      %v1779 = vmax.f32 %v1736, %v1737
      %1780 = vmax.xlane.f32.xlu0 %v1779
      %v1781 = vpop.xlane.xlu0 %1780
      %v1782 = vmax.f32 %v1738, %v1739
      %1783 = vmax.xlane.f32.xlu0 %v1782
      %v1784 = vpop.xlane.xlu0 %1783
      %v1785 = vmax.f32 %v1740, %v1741
      %1786 = vmax.xlane.f32.xlu0 %v1785
      %v1787 = vpop.xlane.xlu0 %1786
      %v1788 = vmax.f32 %v1742, %v1743
      %1789 = vmax.xlane.f32.xlu0 %v1788
      %v1790 = vpop.xlane.xlu0 %1789
      %v1791 = vmax.f32 %v1744, %v1745
      %1792 = vmax.xlane.f32.xlu0 %v1791
      %v1793 = vpop.xlane.xlu0 %1792
      %vm1794 = vcmp.ge.f32.partialorder %v1714, %v1748
      %vm1795 = vcmp.ge.f32.partialorder %v1715, %v1748
      %vm1796 = vcmp.ge.f32.partialorder %v1716, %v1751
      %vm1797 = vcmp.ge.f32.partialorder %v1717, %v1751
      %vm1798 = vcmp.ge.f32.partialorder %v1718, %v1754
      %vm1799 = vcmp.ge.f32.partialorder %v1719, %v1754
      %vm1800 = vcmp.ge.f32.partialorder %v1720, %v1757
      %vm1801 = vcmp.ge.f32.partialorder %v1721, %v1757
      %vm1802 = vcmp.ge.f32.partialorder %v1722, %v1760
      %vm1803 = vcmp.ge.f32.partialorder %v1723, %v1760
      %vm1804 = vcmp.ge.f32.partialorder %v1724, %v1763
      %vm1805 = vcmp.ge.f32.partialorder %v1725, %v1763
      %vm1806 = vcmp.ge.f32.partialorder %v1726, %v1766
      %vm1807 = vcmp.ge.f32.partialorder %v1727, %v1766
      %vm1808 = vcmp.ge.f32.partialorder %v1728, %v1769
      %vm1809 = vcmp.ge.f32.partialorder %v1729, %v1769
      %vm1810 = vcmp.ge.f32.partialorder %v1730, %v1772
      %vm1811 = vcmp.ge.f32.partialorder %v1731, %v1772
      %vm1812 = vcmp.ge.f32.partialorder %v1732, %v1775
      %vm1813 = vcmp.ge.f32.partialorder %v1733, %v1775
      %vm1814 = vcmp.ge.f32.partialorder %v1734, %v1778
      %vm1815 = vcmp.ge.f32.partialorder %v1735, %v1778
      %vm1816 = vcmp.ge.f32.partialorder %v1736, %v1781
      %vm1817 = vcmp.ge.f32.partialorder %v1737, %v1781
      %vm1818 = vcmp.ge.f32.partialorder %v1738, %v1784
      %vm1819 = vcmp.ge.f32.partialorder %v1739, %v1784
      %vm1820 = vcmp.ge.f32.partialorder %v1740, %v1787
      %vm1821 = vcmp.ge.f32.partialorder %v1741, %v1787
      %vm1822 = vcmp.ge.f32.partialorder %v1742, %v1790
      %vm1823 = vcmp.ge.f32.partialorder %v1743, %v1790
      %vm1824 = vcmp.ge.f32.partialorder %v1744, %v1793
      %vm1825 = vcmp.ge.f32.partialorder %v1745, %v1793
      %v1826 = vsel %vm1794, %v1311, 256.0
      %v1827 = vsel %vm1795, %v1312, 256.0
      %v1828 = vsel %vm1796, %v1311, 256.0
      %v1829 = vsel %vm1797, %v1312, 256.0
      %v1830 = vsel %vm1798, %v1311, 256.0
      %v1831 = vsel %vm1799, %v1312, 256.0
      %v1832 = vsel %vm1800, %v1311, 256.0
      %v1833 = vsel %vm1801, %v1312, 256.0
      %v1834 = vsel %vm1802, %v1311, 256.0
      %v1835 = vsel %vm1803, %v1312, 256.0
      %v1836 = vsel %vm1804, %v1311, 256.0
      %v1837 = vsel %vm1805, %v1312, 256.0
      %v1838 = vsel %vm1806, %v1311, 256.0
      %v1839 = vsel %vm1807, %v1312, 256.0
      %v1840 = vsel %vm1808, %v1311, 256.0
      %v1841 = vsel %vm1809, %v1312, 256.0
      %v1842 = vsel %vm1810, %v1311, 256.0
      %v1843 = vsel %vm1811, %v1312, 256.0
      %v1844 = vsel %vm1812, %v1311, 256.0
      %v1845 = vsel %vm1813, %v1312, 256.0
      %v1846 = vsel %vm1814, %v1311, 256.0
      %v1847 = vsel %vm1815, %v1312, 256.0
      %v1848 = vsel %vm1816, %v1311, 256.0
      %v1849 = vsel %vm1817, %v1312, 256.0
      %v1850 = vsel %vm1818, %v1311, 256.0
      %v1851 = vsel %vm1819, %v1312, 256.0
      %v1852 = vsel %vm1820, %v1311, 256.0
      %v1853 = vsel %vm1821, %v1312, 256.0
      %v1854 = vsel %vm1822, %v1311, 256.0
      %v1855 = vsel %vm1823, %v1312, 256.0
      %v1856 = vsel %vm1824, %v1311, 256.0
      %v1857 = vsel %vm1825, %v1312, 256.0
      %v1858 = vmin.f32 %v1826, %v1827
      %1859 = vmin.xlane.f32.xlu0 %v1858
      %v1860 = vpop.xlane.xlu0 %1859
      %v1861 = vmin.f32 %v1828, %v1829
      %1862 = vmin.xlane.f32.xlu0 %v1861
      %v1863 = vpop.xlane.xlu0 %1862
      %v1864 = vmin.f32 %v1830, %v1831
      %1865 = vmin.xlane.f32.xlu0 %v1864
      %v1866 = vpop.xlane.xlu0 %1865
      %v1867 = vmin.f32 %v1832, %v1833
      %1868 = vmin.xlane.f32.xlu0 %v1867
      %v1869 = vpop.xlane.xlu0 %1868
      %v1870 = vmin.f32 %v1834, %v1835
      %1871 = vmin.xlane.f32.xlu0 %v1870
      %v1872 = vpop.xlane.xlu0 %1871
      %v1873 = vmin.f32 %v1836, %v1837
      %1874 = vmin.xlane.f32.xlu0 %v1873
      %v1875 = vpop.xlane.xlu0 %1874
      %v1876 = vmin.f32 %v1838, %v1839
      %1877 = vmin.xlane.f32.xlu0 %v1876
      %v1878 = vpop.xlane.xlu0 %1877
      %v1879 = vmin.f32 %v1840, %v1841
      %1880 = vmin.xlane.f32.xlu0 %v1879
      %v1881 = vpop.xlane.xlu0 %1880
      %v1882 = vmin.f32 %v1842, %v1843
      %1883 = vmin.xlane.f32.xlu0 %v1882
      %v1884 = vpop.xlane.xlu0 %1883
      %v1885 = vmin.f32 %v1844, %v1845
      %1886 = vmin.xlane.f32.xlu0 %v1885
      %v1887 = vpop.xlane.xlu0 %1886
      %v1888 = vmin.f32 %v1846, %v1847
      %1889 = vmin.xlane.f32.xlu0 %v1888
      %v1890 = vpop.xlane.xlu0 %1889
      %v1891 = vmin.f32 %v1848, %v1849
      %1892 = vmin.xlane.f32.xlu0 %v1891
      %v1893 = vpop.xlane.xlu0 %1892
      %v1894 = vmin.f32 %v1850, %v1851
      %1895 = vmin.xlane.f32.xlu0 %v1894
      %v1896 = vpop.xlane.xlu0 %1895
      %v1897 = vmin.f32 %v1852, %v1853
      %1898 = vmin.xlane.f32.xlu0 %v1897
      %v1899 = vpop.xlane.xlu0 %1898
      %v1900 = vmin.f32 %v1854, %v1855
      %1901 = vmin.xlane.f32.xlu0 %v1900
      %v1902 = vpop.xlane.xlu0 %1901
      %v1903 = vmin.f32 %v1856, %v1857
      %1904 = vmin.xlane.f32.xlu0 %v1903
      %v1905 = vpop.xlane.xlu0 %1904
      %vm1906 = vcmp.eq.f32.partialorder %v1311, %v1860
      %vm1907 = vcmp.eq.f32.partialorder %v1312, %v1860
      %vm1908 = vcmp.eq.f32.partialorder %v1311, %v1863
      %vm1909 = vcmp.eq.f32.partialorder %v1312, %v1863
      %vm1910 = vcmp.eq.f32.partialorder %v1311, %v1866
      %vm1911 = vcmp.eq.f32.partialorder %v1312, %v1866
      %vm1912 = vcmp.eq.f32.partialorder %v1311, %v1869
      %vm1913 = vcmp.eq.f32.partialorder %v1312, %v1869
      %vm1914 = vcmp.eq.f32.partialorder %v1311, %v1872
      %vm1915 = vcmp.eq.f32.partialorder %v1312, %v1872
      %vm1916 = vcmp.eq.f32.partialorder %v1311, %v1875
      %vm1917 = vcmp.eq.f32.partialorder %v1312, %v1875
      %vm1918 = vcmp.eq.f32.partialorder %v1311, %v1878
      %vm1919 = vcmp.eq.f32.partialorder %v1312, %v1878
      %vm1920 = vcmp.eq.f32.partialorder %v1311, %v1881
      %vm1921 = vcmp.eq.f32.partialorder %v1312, %v1881
      %vm1922 = vcmp.eq.f32.partialorder %v1311, %v1884
      %vm1923 = vcmp.eq.f32.partialorder %v1312, %v1884
      %vm1924 = vcmp.eq.f32.partialorder %v1311, %v1887
      %vm1925 = vcmp.eq.f32.partialorder %v1312, %v1887
      %vm1926 = vcmp.eq.f32.partialorder %v1311, %v1890
      %vm1927 = vcmp.eq.f32.partialorder %v1312, %v1890
      %vm1928 = vcmp.eq.f32.partialorder %v1311, %v1893
      %vm1929 = vcmp.eq.f32.partialorder %v1312, %v1893
      %vm1930 = vcmp.eq.f32.partialorder %v1311, %v1896
      %vm1931 = vcmp.eq.f32.partialorder %v1312, %v1896
      %vm1932 = vcmp.eq.f32.partialorder %v1311, %v1899
      %vm1933 = vcmp.eq.f32.partialorder %v1312, %v1899
      %vm1934 = vcmp.eq.f32.partialorder %v1311, %v1902
      %vm1935 = vcmp.eq.f32.partialorder %v1312, %v1902
      %vm1936 = vcmp.eq.f32.partialorder %v1311, %v1905
      %vm1937 = vcmp.eq.f32.partialorder %v1312, %v1905
      %v1938 = vsel %vm1906, 1, 0
      %v1939 = vsel %vm1907, 1, 0
      %v1940 = vsel %vm1908, 1, 0
      %v1941 = vsel %vm1909, 1, 0
      %v1942 = vsel %vm1910, 1, 0
      %v1943 = vsel %vm1911, 1, 0
      %v1944 = vsel %vm1912, 1, 0
      %v1945 = vsel %vm1913, 1, 0
      %v1946 = vsel %vm1914, 1, 0
      %v1947 = vsel %vm1915, 1, 0
      %v1948 = vsel %vm1916, 1, 0
      %v1949 = vsel %vm1917, 1, 0
      %v1950 = vsel %vm1918, 1, 0
      %v1951 = vsel %vm1919, 1, 0
      %v1952 = vsel %vm1920, 1, 0
      %v1953 = vsel %vm1921, 1, 0
      %v1954 = vsel %vm1922, 1, 0
      %v1955 = vsel %vm1923, 1, 0
      %v1956 = vsel %vm1924, 1, 0
      %v1957 = vsel %vm1925, 1, 0
      %v1958 = vsel %vm1926, 1, 0
      %v1959 = vsel %vm1927, 1, 0
      %v1960 = vsel %vm1928, 1, 0
      %v1961 = vsel %vm1929, 1, 0
      %v1962 = vsel %vm1930, 1, 0
      %v1963 = vsel %vm1931, 1, 0
      %v1964 = vsel %vm1932, 1, 0
      %v1965 = vsel %vm1933, 1, 0
      %v1966 = vsel %vm1934, 1, 0
      %v1967 = vsel %vm1935, 1, 0
      %v1968 = vsel %vm1936, 1, 0
      %v1969 = vsel %vm1937, 1, 0
      %v1970 = vcvt.s32.f32 %v1938
      %v1971 = vcvt.s32.f32 %v1939
      %v1972 = vcvt.s32.f32 %v1940
      %v1973 = vcvt.s32.f32 %v1941
      %v1974 = vcvt.s32.f32 %v1942
      %v1975 = vcvt.s32.f32 %v1943
      %v1976 = vcvt.s32.f32 %v1944
      %v1977 = vcvt.s32.f32 %v1945
      %v1978 = vcvt.s32.f32 %v1946
      %v1979 = vcvt.s32.f32 %v1947
      %v1980 = vcvt.s32.f32 %v1948
      %v1981 = vcvt.s32.f32 %v1949
      %v1982 = vcvt.s32.f32 %v1950
      %v1983 = vcvt.s32.f32 %v1951
      %v1984 = vcvt.s32.f32 %v1952
      %v1985 = vcvt.s32.f32 %v1953
      %v1986 = vcvt.s32.f32 %v1954
      %v1987 = vcvt.s32.f32 %v1955
      %v1988 = vcvt.s32.f32 %v1956
      %v1989 = vcvt.s32.f32 %v1957
      %v1990 = vcvt.s32.f32 %v1958
      %v1991 = vcvt.s32.f32 %v1959
      %v1992 = vcvt.s32.f32 %v1960
      %v1993 = vcvt.s32.f32 %v1961
      %v1994 = vcvt.s32.f32 %v1962
      %v1995 = vcvt.s32.f32 %v1963
      %v1996 = vcvt.s32.f32 %v1964
      %v1997 = vcvt.s32.f32 %v1965
      %v1998 = vcvt.s32.f32 %v1966
      %v1999 = vcvt.s32.f32 %v1967
      %v2000 = vcvt.s32.f32 %v1968
      %v2001 = vcvt.s32.f32 %v1969
      %2002 = vmatprep.subr.mxu0 0.0
      %2003 = vmatpush1.msra.mxu0 %v282
      %2004 = vmatprep.subr.mxu0 0.0
      %2005 = vmatpush1.msra.mxu0 %v283
      %2006 = vmatprep.subr.mxu0 0.0
      %2007 = vmatpush1.msra.mxu0 %v284
      %2008 = vmatprep.subr.mxu0 0.0
      %2009 = vmatpush1.msra.mxu0 %v285
      %2010 = vmatprep.subr.mxu0 0.0
      %2011 = vmatpush1.msra.mxu0 %v286
      %2012 = vmatprep.subr.mxu0 0.0
      %2013 = vmatpush1.msra.mxu0 %v287
      %2014 = vmatprep.subr.mxu0 0.0
      %2015 = vmatpush1.msra.mxu0 %v288
      %2016 = vmatprep.subr.mxu0 0.0
      %2017 = vmatpush1.msra.mxu0 %v289
      %2018 = vmatprep.subr.mxu0 0.0
      %2019 = vmatpush1.msra.mxu0 %v290
      %2020 = vmatprep.subr.mxu0 0.0
      %2021 = vmatpush1.msra.mxu0 %v291
      %2022 = vmatprep.subr.mxu0 0.0
      %2023 = vmatpush1.msra.mxu0 %v292
      %2024 = vmatprep.subr.mxu0 0.0
      %2025 = vmatpush1.msra.mxu0 %v293
      %2026 = vmatprep.subr.mxu0 0.0
      %2027 = vmatpush1.msra.mxu0 %v294
      %2028 = vmatprep.subr.mxu0 0.0
      %2029 = vmatpush1.msra.mxu0 %v295
      %2030 = vmatprep.subr.mxu0 0.0
      %2031 = vmatpush1.msra.mxu0 %v296
      %2032 = vmatprep.subr.mxu0 0.0
      %2033 = vmatpush1.msra.mxu0 %v297
      %2034 = vmatprep.subr.mxu0 0.0
      %2035 = vmatpush1.msra.mxu0 %v298
      %2036 = vmatprep.subr.mxu0 0.0
      %2037 = vmatpush1.msra.mxu0 %v299
      %2038 = vmatprep.subr.mxu0 0.0
      %2039 = vmatpush1.msra.mxu0 %v300
      %2040 = vmatprep.subr.mxu0 0.0
      %2041 = vmatpush1.msra.mxu0 %v301
      %2042 = vmatprep.subr.mxu0 0.0
      %2043 = vmatpush1.msra.mxu0 %v302
      %2044 = vmatprep.subr.mxu0 0.0
      %2045 = vmatpush1.msra.mxu0 %v303
      %2046 = vmatprep.subr.mxu0 0.0
      %2047 = vmatpush1.msra.mxu0 %v304
      %2048 = vmatprep.subr.mxu0 0.0
      %2049 = vmatpush1.msra.mxu0 %v305
      %2050 = vmatprep.subr.mxu0 0.0
      %2051 = vmatpush1.msra.mxu0 %v306
      %2052 = vmatprep.subr.mxu0 0.0
      %2053 = vmatpush1.msra.mxu0 %v307
      %2054 = vmatprep.subr.mxu0 0.0
      %2055 = vmatpush1.msra.mxu0 %v308
      %2056 = vmatprep.subr.mxu0 0.0
      %2057 = vmatpush1.msra.mxu0 %v309
      %2058 = vmatprep.subr.mxu0 0.0
      %2059 = vmatpush1.msra.mxu0 %v310
      %2060 = vmatprep.subr.mxu0 0.0
      %2061 = vmatpush1.msra.mxu0 %v311
      %2062 = vmatprep.subr.mxu0 0.0
      %2063 = vmatpush1.msra.mxu0 %v312
      %2064 = vmatprep.subr.mxu0 0.0
      %2065 = vmatpush1.msra.mxu0 %v313
      %2066 = vmatprep.mubr.f32.mxu0 %v1971
      %2067 = vmatmul.mubr.f32.gmra.mrb[0].mxu0 %v1970
      %v2068 = vpop.f32.mrb[0].mxu0
      %v2069 = vadd.f32 0.0, %v2068
      %v2070 = vpop.f32.mrb[0].mxu0
      %2071 = vmatprep.mubr.f32.mxu0 %v1973
      %2072 = vmatmul.mubr.f32.gmra.mrb[0].mxu0 %v1972
      %v2073 = vpop.f32.mrb[0].mxu0
      %v2074 = vadd.f32 0.0, %v2073
      %v2075 = vpop.f32.mrb[0].mxu0
      %2076 = vmatprep.mubr.f32.mxu0 %v1975
      %2077 = vmatmul.mubr.f32.gmra.mrb[0].mxu0 %v1974
      %v2078 = vpop.f32.mrb[0].mxu0
      %v2079 = vadd.f32 0.0, %v2078
      %v2080 = vpop.f32.mrb[0].mxu0
      %2081 = vmatprep.mubr.f32.mxu0 %v1977
      %2082 = vmatmul.mubr.f32.gmra.mrb[0].mxu0 %v1976
      %v2083 = vpop.f32.mrb[0].mxu0
      %v2084 = vadd.f32 0.0, %v2083
      %v2085 = vpop.f32.mrb[0].mxu0
      %2086 = vmatprep.mubr.f32.mxu0 %v1979
      %2087 = vmatmul.mubr.f32.gmra.mrb[0].mxu0 %v1978
      %v2088 = vpop.f32.mrb[0].mxu0
      %v2089 = vadd.f32 0.0, %v2088
      %v2090 = vpop.f32.mrb[0].mxu0
      %2091 = vmatprep.mubr.f32.mxu0 %v1981
      %2092 = vmatmul.mubr.f32.gmra.mrb[0].mxu0 %v1980
      %v2093 = vpop.f32.mrb[0].mxu0
      %v2094 = vadd.f32 0.0, %v2093
      %v2095 = vpop.f32.mrb[0].mxu0
      %2096 = vmatprep.mubr.f32.mxu0 %v1983
      %2097 = vmatmul.mubr.f32.gmra.mrb[0].mxu0 %v1982
      %v2098 = vpop.f32.mrb[0].mxu0
      %v2099 = vadd.f32 0.0, %v2098
      %v2100 = vpop.f32.mrb[0].mxu0
      %2101 = vmatprep.mubr.f32.mxu0 %v1985
      %2102 = vmatmul.mubr.f32.gmra.mrb[0].mxu0 %v1984
      %v2103 = vpop.f32.mrb[0].mxu0
      %v2104 = vadd.f32 0.0, %v2103
      %v2105 = vpop.f32.mrb[0].mxu0
      %2106 = vmatprep.mubr.f32.mxu0 %v1987
      %2107 = vmatmul.mubr.f32.gmra.mrb[0].mxu0 %v1986
      %v2108 = vpop.f32.mrb[0].mxu0
      %v2109 = vadd.f32 0.0, %v2108
      %v2110 = vpop.f32.mrb[0].mxu0
      %2111 = vmatprep.mubr.f32.mxu0 %v1989
      %2112 = vmatmul.mubr.f32.gmra.mrb[0].mxu0 %v1988
      %v2113 = vpop.f32.mrb[0].mxu0
      %v2114 = vadd.f32 0.0, %v2113
      %v2115 = vpop.f32.mrb[0].mxu0
      %2116 = vmatprep.mubr.f32.mxu0 %v1991
      %2117 = vmatmul.mubr.f32.gmra.mrb[0].mxu0 %v1990
      %v2118 = vpop.f32.mrb[0].mxu0
      %v2119 = vadd.f32 0.0, %v2118
      %v2120 = vpop.f32.mrb[0].mxu0
      %2121 = vmatprep.mubr.f32.mxu0 %v1993
      %2122 = vmatmul.mubr.f32.gmra.mrb[0].mxu0 %v1992
      %v2123 = vpop.f32.mrb[0].mxu0
      %v2124 = vadd.f32 0.0, %v2123
      %v2125 = vpop.f32.mrb[0].mxu0
      %2126 = vmatprep.mubr.f32.mxu0 %v1995
      %2127 = vmatmul.mubr.f32.gmra.mrb[0].mxu0 %v1994
      %v2128 = vpop.f32.mrb[0].mxu0
      %v2129 = vadd.f32 0.0, %v2128
      %v2130 = vpop.f32.mrb[0].mxu0
      %2131 = vmatprep.mubr.f32.mxu0 %v1997
      %2132 = vmatmul.mubr.f32.gmra.mrb[0].mxu0 %v1996
      %v2133 = vpop.f32.mrb[0].mxu0
      %v2134 = vadd.f32 0.0, %v2133
      %v2135 = vpop.f32.mrb[0].mxu0
      %2136 = vmatprep.mubr.f32.mxu0 %v1999
      %2137 = vmatmul.mubr.f32.gmra.mrb[0].mxu0 %v1998
      %v2138 = vpop.f32.mrb[0].mxu0
      %v2139 = vadd.f32 0.0, %v2138
      %v2140 = vpop.f32.mrb[0].mxu0
      %2141 = vmatprep.mubr.f32.mxu0 %v2001
      %2142 = vmatmul.mubr.f32.gmra.mrb[0].mxu0 %v2000
      %v2143 = vpop.f32.mrb[0].mxu0
      %v2144 = vadd.f32 0.0, %v2143
      %v2145 = vpop.f32.mrb[0].mxu0
      %2146 = vdwg.mxu0
      %v2147 = vsel %vm1906, -1e+30, %v1714
      %v2148 = vsel %vm1907, -1e+30, %v1715
      %v2149 = vsel %vm1908, -1e+30, %v1716
      %v2150 = vsel %vm1909, -1e+30, %v1717
      %v2151 = vsel %vm1910, -1e+30, %v1718
      %v2152 = vsel %vm1911, -1e+30, %v1719
      %v2153 = vsel %vm1912, -1e+30, %v1720
      %v2154 = vsel %vm1913, -1e+30, %v1721
      %v2155 = vsel %vm1914, -1e+30, %v1722
      %v2156 = vsel %vm1915, -1e+30, %v1723
      %v2157 = vsel %vm1916, -1e+30, %v1724
      %v2158 = vsel %vm1917, -1e+30, %v1725
      %v2159 = vsel %vm1918, -1e+30, %v1726
      %v2160 = vsel %vm1919, -1e+30, %v1727
      %v2161 = vsel %vm1920, -1e+30, %v1728
      %v2162 = vsel %vm1921, -1e+30, %v1729
      %v2163 = vsel %vm1922, -1e+30, %v1730
      %v2164 = vsel %vm1923, -1e+30, %v1731
      %v2165 = vsel %vm1924, -1e+30, %v1732
      %v2166 = vsel %vm1925, -1e+30, %v1733
      %v2167 = vsel %vm1926, -1e+30, %v1734
      %v2168 = vsel %vm1927, -1e+30, %v1735
      %v2169 = vsel %vm1928, -1e+30, %v1736
      %v2170 = vsel %vm1929, -1e+30, %v1737
      %v2171 = vsel %vm1930, -1e+30, %v1738
      %v2172 = vsel %vm1931, -1e+30, %v1739
      %v2173 = vsel %vm1932, -1e+30, %v1740
      %v2174 = vsel %vm1933, -1e+30, %v1741
      %v2175 = vsel %vm1934, -1e+30, %v1742
      %v2176 = vsel %vm1935, -1e+30, %v1743
      %v2177 = vsel %vm1936, -1e+30, %v1744
      %v2178 = vsel %vm1937, -1e+30, %v1745
      %v2179 = vmax.f32 %v2147, %v2148
      %2180 = vmax.xlane.f32.xlu0 %v2179
      %v2181 = vpop.xlane.xlu0 %2180
      %v2182 = vmax.f32 %v2149, %v2150
      %2183 = vmax.xlane.f32.xlu0 %v2182
      %v2184 = vpop.xlane.xlu0 %2183
      %v2185 = vmax.f32 %v2151, %v2152
      %2186 = vmax.xlane.f32.xlu0 %v2185
      %v2187 = vpop.xlane.xlu0 %2186
      %v2188 = vmax.f32 %v2153, %v2154
      %2189 = vmax.xlane.f32.xlu0 %v2188
      %v2190 = vpop.xlane.xlu0 %2189
      %v2191 = vmax.f32 %v2155, %v2156
      %2192 = vmax.xlane.f32.xlu0 %v2191
      %v2193 = vpop.xlane.xlu0 %2192
      %v2194 = vmax.f32 %v2157, %v2158
      %2195 = vmax.xlane.f32.xlu0 %v2194
      %v2196 = vpop.xlane.xlu0 %2195
      %v2197 = vmax.f32 %v2159, %v2160
      %2198 = vmax.xlane.f32.xlu0 %v2197
      %v2199 = vpop.xlane.xlu0 %2198
      %v2200 = vmax.f32 %v2161, %v2162
      %2201 = vmax.xlane.f32.xlu0 %v2200
      %v2202 = vpop.xlane.xlu0 %2201
      %v2203 = vmax.f32 %v2163, %v2164
      %2204 = vmax.xlane.f32.xlu0 %v2203
      %v2205 = vpop.xlane.xlu0 %2204
      %v2206 = vmax.f32 %v2165, %v2166
      %2207 = vmax.xlane.f32.xlu0 %v2206
      %v2208 = vpop.xlane.xlu0 %2207
      %v2209 = vmax.f32 %v2167, %v2168
      %2210 = vmax.xlane.f32.xlu0 %v2209
      %v2211 = vpop.xlane.xlu0 %2210
      %v2212 = vmax.f32 %v2169, %v2170
      %2213 = vmax.xlane.f32.xlu0 %v2212
      %v2214 = vpop.xlane.xlu0 %2213
      %v2215 = vmax.f32 %v2171, %v2172
      %2216 = vmax.xlane.f32.xlu0 %v2215
      %v2217 = vpop.xlane.xlu0 %2216
      %v2218 = vmax.f32 %v2173, %v2174
      %2219 = vmax.xlane.f32.xlu0 %v2218
      %v2220 = vpop.xlane.xlu0 %2219
      %v2221 = vmax.f32 %v2175, %v2176
      %2222 = vmax.xlane.f32.xlu0 %v2221
      %v2223 = vpop.xlane.xlu0 %2222
      %v2224 = vmax.f32 %v2177, %v2178
      %2225 = vmax.xlane.f32.xlu0 %v2224
      %v2226 = vpop.xlane.xlu0 %2225
      %vm2227 = vcmp.ge.f32.partialorder %v2147, %v2181
      %vm2228 = vcmp.ge.f32.partialorder %v2148, %v2181
      %vm2229 = vcmp.ge.f32.partialorder %v2149, %v2184
      %vm2230 = vcmp.ge.f32.partialorder %v2150, %v2184
      %vm2231 = vcmp.ge.f32.partialorder %v2151, %v2187
      %vm2232 = vcmp.ge.f32.partialorder %v2152, %v2187
      %vm2233 = vcmp.ge.f32.partialorder %v2153, %v2190
      %vm2234 = vcmp.ge.f32.partialorder %v2154, %v2190
      %vm2235 = vcmp.ge.f32.partialorder %v2155, %v2193
      %vm2236 = vcmp.ge.f32.partialorder %v2156, %v2193
      %vm2237 = vcmp.ge.f32.partialorder %v2157, %v2196
      %vm2238 = vcmp.ge.f32.partialorder %v2158, %v2196
      %vm2239 = vcmp.ge.f32.partialorder %v2159, %v2199
      %vm2240 = vcmp.ge.f32.partialorder %v2160, %v2199
      %vm2241 = vcmp.ge.f32.partialorder %v2161, %v2202
      %vm2242 = vcmp.ge.f32.partialorder %v2162, %v2202
      %vm2243 = vcmp.ge.f32.partialorder %v2163, %v2205
      %vm2244 = vcmp.ge.f32.partialorder %v2164, %v2205
      %vm2245 = vcmp.ge.f32.partialorder %v2165, %v2208
      %vm2246 = vcmp.ge.f32.partialorder %v2166, %v2208
      %vm2247 = vcmp.ge.f32.partialorder %v2167, %v2211
      %vm2248 = vcmp.ge.f32.partialorder %v2168, %v2211
      %vm2249 = vcmp.ge.f32.partialorder %v2169, %v2214
      %vm2250 = vcmp.ge.f32.partialorder %v2170, %v2214
      %vm2251 = vcmp.ge.f32.partialorder %v2171, %v2217
      %vm2252 = vcmp.ge.f32.partialorder %v2172, %v2217
      %vm2253 = vcmp.ge.f32.partialorder %v2173, %v2220
      %vm2254 = vcmp.ge.f32.partialorder %v2174, %v2220
      %vm2255 = vcmp.ge.f32.partialorder %v2175, %v2223
      %vm2256 = vcmp.ge.f32.partialorder %v2176, %v2223
      %vm2257 = vcmp.ge.f32.partialorder %v2177, %v2226
      %vm2258 = vcmp.ge.f32.partialorder %v2178, %v2226
      %v2259 = vsel %vm2227, %v1311, 256.0
      %v2260 = vsel %vm2228, %v1312, 256.0
      %v2261 = vsel %vm2229, %v1311, 256.0
      %v2262 = vsel %vm2230, %v1312, 256.0
      %v2263 = vsel %vm2231, %v1311, 256.0
      %v2264 = vsel %vm2232, %v1312, 256.0
      %v2265 = vsel %vm2233, %v1311, 256.0
      %v2266 = vsel %vm2234, %v1312, 256.0
      %v2267 = vsel %vm2235, %v1311, 256.0
      %v2268 = vsel %vm2236, %v1312, 256.0
      %v2269 = vsel %vm2237, %v1311, 256.0
      %v2270 = vsel %vm2238, %v1312, 256.0
      %v2271 = vsel %vm2239, %v1311, 256.0
      %v2272 = vsel %vm2240, %v1312, 256.0
      %v2273 = vsel %vm2241, %v1311, 256.0
      %v2274 = vsel %vm2242, %v1312, 256.0
      %v2275 = vsel %vm2243, %v1311, 256.0
      %v2276 = vsel %vm2244, %v1312, 256.0
      %v2277 = vsel %vm2245, %v1311, 256.0
      %v2278 = vsel %vm2246, %v1312, 256.0
      %v2279 = vsel %vm2247, %v1311, 256.0
      %v2280 = vsel %vm2248, %v1312, 256.0
      %v2281 = vsel %vm2249, %v1311, 256.0
      %v2282 = vsel %vm2250, %v1312, 256.0
      %v2283 = vsel %vm2251, %v1311, 256.0
      %v2284 = vsel %vm2252, %v1312, 256.0
      %v2285 = vsel %vm2253, %v1311, 256.0
      %v2286 = vsel %vm2254, %v1312, 256.0
      %v2287 = vsel %vm2255, %v1311, 256.0
      %v2288 = vsel %vm2256, %v1312, 256.0
      %v2289 = vsel %vm2257, %v1311, 256.0
      %v2290 = vsel %vm2258, %v1312, 256.0
      %v2291 = vmin.f32 %v2259, %v2260
      %2292 = vmin.xlane.f32.xlu0 %v2291
      %v2293 = vpop.xlane.xlu0 %2292
      %v2294 = vmin.f32 %v2261, %v2262
      %2295 = vmin.xlane.f32.xlu0 %v2294
      %v2296 = vpop.xlane.xlu0 %2295
      %v2297 = vmin.f32 %v2263, %v2264
      %2298 = vmin.xlane.f32.xlu0 %v2297
      %v2299 = vpop.xlane.xlu0 %2298
      %v2300 = vmin.f32 %v2265, %v2266
      %2301 = vmin.xlane.f32.xlu0 %v2300
      %v2302 = vpop.xlane.xlu0 %2301
      %v2303 = vmin.f32 %v2267, %v2268
      %2304 = vmin.xlane.f32.xlu0 %v2303
      %v2305 = vpop.xlane.xlu0 %2304
      %v2306 = vmin.f32 %v2269, %v2270
      %2307 = vmin.xlane.f32.xlu0 %v2306
      %v2308 = vpop.xlane.xlu0 %2307
      %v2309 = vmin.f32 %v2271, %v2272
      %2310 = vmin.xlane.f32.xlu0 %v2309
      %v2311 = vpop.xlane.xlu0 %2310
      %v2312 = vmin.f32 %v2273, %v2274
      %2313 = vmin.xlane.f32.xlu0 %v2312
      %v2314 = vpop.xlane.xlu0 %2313
      %v2315 = vmin.f32 %v2275, %v2276
      %2316 = vmin.xlane.f32.xlu0 %v2315
      %v2317 = vpop.xlane.xlu0 %2316
      %v2318 = vmin.f32 %v2277, %v2278
      %2319 = vmin.xlane.f32.xlu0 %v2318
      %v2320 = vpop.xlane.xlu0 %2319
      %v2321 = vmin.f32 %v2279, %v2280
      %2322 = vmin.xlane.f32.xlu0 %v2321
      %v2323 = vpop.xlane.xlu0 %2322
      %v2324 = vmin.f32 %v2281, %v2282
      %2325 = vmin.xlane.f32.xlu0 %v2324
      %v2326 = vpop.xlane.xlu0 %2325
      %v2327 = vmin.f32 %v2283, %v2284
      %2328 = vmin.xlane.f32.xlu0 %v2327
      %v2329 = vpop.xlane.xlu0 %2328
      %v2330 = vmin.f32 %v2285, %v2286
      %2331 = vmin.xlane.f32.xlu0 %v2330
      %v2332 = vpop.xlane.xlu0 %2331
      %v2333 = vmin.f32 %v2287, %v2288
      %2334 = vmin.xlane.f32.xlu0 %v2333
      %v2335 = vpop.xlane.xlu0 %2334
      %v2336 = vmin.f32 %v2289, %v2290
      %2337 = vmin.xlane.f32.xlu0 %v2336
      %v2338 = vpop.xlane.xlu0 %2337
      %vm2339 = vcmp.eq.f32.partialorder %v1311, %v2293
      %vm2340 = vcmp.eq.f32.partialorder %v1312, %v2293
      %vm2341 = vcmp.eq.f32.partialorder %v1311, %v2296
      %vm2342 = vcmp.eq.f32.partialorder %v1312, %v2296
      %vm2343 = vcmp.eq.f32.partialorder %v1311, %v2299
      %vm2344 = vcmp.eq.f32.partialorder %v1312, %v2299
      %vm2345 = vcmp.eq.f32.partialorder %v1311, %v2302
      %vm2346 = vcmp.eq.f32.partialorder %v1312, %v2302
      %vm2347 = vcmp.eq.f32.partialorder %v1311, %v2305
      %vm2348 = vcmp.eq.f32.partialorder %v1312, %v2305
      %vm2349 = vcmp.eq.f32.partialorder %v1311, %v2308
      %vm2350 = vcmp.eq.f32.partialorder %v1312, %v2308
      %vm2351 = vcmp.eq.f32.partialorder %v1311, %v2311
      %vm2352 = vcmp.eq.f32.partialorder %v1312, %v2311
      %vm2353 = vcmp.eq.f32.partialorder %v1311, %v2314
      %vm2354 = vcmp.eq.f32.partialorder %v1312, %v2314
      %vm2355 = vcmp.eq.f32.partialorder %v1311, %v2317
      %vm2356 = vcmp.eq.f32.partialorder %v1312, %v2317
      %vm2357 = vcmp.eq.f32.partialorder %v1311, %v2320
      %vm2358 = vcmp.eq.f32.partialorder %v1312, %v2320
      %vm2359 = vcmp.eq.f32.partialorder %v1311, %v2323
      %vm2360 = vcmp.eq.f32.partialorder %v1312, %v2323
      %vm2361 = vcmp.eq.f32.partialorder %v1311, %v2326
      %vm2362 = vcmp.eq.f32.partialorder %v1312, %v2326
      %vm2363 = vcmp.eq.f32.partialorder %v1311, %v2329
      %vm2364 = vcmp.eq.f32.partialorder %v1312, %v2329
      %vm2365 = vcmp.eq.f32.partialorder %v1311, %v2332
      %vm2366 = vcmp.eq.f32.partialorder %v1312, %v2332
      %vm2367 = vcmp.eq.f32.partialorder %v1311, %v2335
      %vm2368 = vcmp.eq.f32.partialorder %v1312, %v2335
      %vm2369 = vcmp.eq.f32.partialorder %v1311, %v2338
      %vm2370 = vcmp.eq.f32.partialorder %v1312, %v2338
      %v2371 = vsel %vm2339, 1, 0
      %v2372 = vsel %vm2340, 1, 0
      %v2373 = vsel %vm2341, 1, 0
      %v2374 = vsel %vm2342, 1, 0
      %v2375 = vsel %vm2343, 1, 0
      %v2376 = vsel %vm2344, 1, 0
      %v2377 = vsel %vm2345, 1, 0
      %v2378 = vsel %vm2346, 1, 0
      %v2379 = vsel %vm2347, 1, 0
      %v2380 = vsel %vm2348, 1, 0
      %v2381 = vsel %vm2349, 1, 0
      %v2382 = vsel %vm2350, 1, 0
      %v2383 = vsel %vm2351, 1, 0
      %v2384 = vsel %vm2352, 1, 0
      %v2385 = vsel %vm2353, 1, 0
      %v2386 = vsel %vm2354, 1, 0
      %v2387 = vsel %vm2355, 1, 0
      %v2388 = vsel %vm2356, 1, 0
      %v2389 = vsel %vm2357, 1, 0
      %v2390 = vsel %vm2358, 1, 0
      %v2391 = vsel %vm2359, 1, 0
      %v2392 = vsel %vm2360, 1, 0
      %v2393 = vsel %vm2361, 1, 0
      %v2394 = vsel %vm2362, 1, 0
      %v2395 = vsel %vm2363, 1, 0
      %v2396 = vsel %vm2364, 1, 0
      %v2397 = vsel %vm2365, 1, 0
      %v2398 = vsel %vm2366, 1, 0
      %v2399 = vsel %vm2367, 1, 0
      %v2400 = vsel %vm2368, 1, 0
      %v2401 = vsel %vm2369, 1, 0
      %v2402 = vsel %vm2370, 1, 0
      %v2403 = vcvt.s32.f32 %v2371
      %v2404 = vcvt.s32.f32 %v2372
      %v2405 = vcvt.s32.f32 %v2373
      %v2406 = vcvt.s32.f32 %v2374
      %v2407 = vcvt.s32.f32 %v2375
      %v2408 = vcvt.s32.f32 %v2376
      %v2409 = vcvt.s32.f32 %v2377
      %v2410 = vcvt.s32.f32 %v2378
      %v2411 = vcvt.s32.f32 %v2379
      %v2412 = vcvt.s32.f32 %v2380
      %v2413 = vcvt.s32.f32 %v2381
      %v2414 = vcvt.s32.f32 %v2382
      %v2415 = vcvt.s32.f32 %v2383
      %v2416 = vcvt.s32.f32 %v2384
      %v2417 = vcvt.s32.f32 %v2385
      %v2418 = vcvt.s32.f32 %v2386
      %v2419 = vcvt.s32.f32 %v2387
      %v2420 = vcvt.s32.f32 %v2388
      %v2421 = vcvt.s32.f32 %v2389
      %v2422 = vcvt.s32.f32 %v2390
      %v2423 = vcvt.s32.f32 %v2391
      %v2424 = vcvt.s32.f32 %v2392
      %v2425 = vcvt.s32.f32 %v2393
      %v2426 = vcvt.s32.f32 %v2394
      %v2427 = vcvt.s32.f32 %v2395
      %v2428 = vcvt.s32.f32 %v2396
      %v2429 = vcvt.s32.f32 %v2397
      %v2430 = vcvt.s32.f32 %v2398
      %v2431 = vcvt.s32.f32 %v2399
      %v2432 = vcvt.s32.f32 %v2400
      %v2433 = vcvt.s32.f32 %v2401
      %v2434 = vcvt.s32.f32 %v2402
      %2435 = vmatprep.subr.mxu0 0.0
      %2436 = vmatpush1.msra.mxu0 %v282
      %2437 = vmatprep.subr.mxu0 0.0
      %2438 = vmatpush1.msra.mxu0 %v283
      %2439 = vmatprep.subr.mxu0 0.0
      %2440 = vmatpush1.msra.mxu0 %v284
      %2441 = vmatprep.subr.mxu0 0.0
      %2442 = vmatpush1.msra.mxu0 %v285
      %2443 = vmatprep.subr.mxu0 0.0
      %2444 = vmatpush1.msra.mxu0 %v286
      %2445 = vmatprep.subr.mxu0 0.0
      %2446 = vmatpush1.msra.mxu0 %v287
      %2447 = vmatprep.subr.mxu0 0.0
      %2448 = vmatpush1.msra.mxu0 %v288
      %2449 = vmatprep.subr.mxu0 0.0
      %2450 = vmatpush1.msra.mxu0 %v289
      %2451 = vmatprep.subr.mxu0 0.0
      %2452 = vmatpush1.msra.mxu0 %v290
      %2453 = vmatprep.subr.mxu0 0.0
      %2454 = vmatpush1.msra.mxu0 %v291
      %2455 = vmatprep.subr.mxu0 0.0
      %2456 = vmatpush1.msra.mxu0 %v292
      %2457 = vmatprep.subr.mxu0 0.0
      %2458 = vmatpush1.msra.mxu0 %v293
      %2459 = vmatprep.subr.mxu0 0.0
      %2460 = vmatpush1.msra.mxu0 %v294
      %2461 = vmatprep.subr.mxu0 0.0
      %2462 = vmatpush1.msra.mxu0 %v295
      %2463 = vmatprep.subr.mxu0 0.0
      %2464 = vmatpush1.msra.mxu0 %v296
      %2465 = vmatprep.subr.mxu0 0.0
      %2466 = vmatpush1.msra.mxu0 %v297
      %2467 = vmatprep.subr.mxu0 0.0
      %2468 = vmatpush1.msra.mxu0 %v298
      %2469 = vmatprep.subr.mxu0 0.0
      %2470 = vmatpush1.msra.mxu0 %v299
      %2471 = vmatprep.subr.mxu0 0.0
      %2472 = vmatpush1.msra.mxu0 %v300
      %2473 = vmatprep.subr.mxu0 0.0
      %2474 = vmatpush1.msra.mxu0 %v301
      %2475 = vmatprep.subr.mxu0 0.0
      %2476 = vmatpush1.msra.mxu0 %v302
      %2477 = vmatprep.subr.mxu0 0.0
      %2478 = vmatpush1.msra.mxu0 %v303
      %2479 = vmatprep.subr.mxu0 0.0
      %2480 = vmatpush1.msra.mxu0 %v304
      %2481 = vmatprep.subr.mxu0 0.0
      %2482 = vmatpush1.msra.mxu0 %v305
      %2483 = vmatprep.subr.mxu0 0.0
      %2484 = vmatpush1.msra.mxu0 %v306
      %2485 = vmatprep.subr.mxu0 0.0
      %2486 = vmatpush1.msra.mxu0 %v307
      %2487 = vmatprep.subr.mxu0 0.0
      %2488 = vmatpush1.msra.mxu0 %v308
      %2489 = vmatprep.subr.mxu0 0.0
      %2490 = vmatpush1.msra.mxu0 %v309
      %2491 = vmatprep.subr.mxu0 0.0
      %2492 = vmatpush1.msra.mxu0 %v310
      %2493 = vmatprep.subr.mxu0 0.0
      %2494 = vmatpush1.msra.mxu0 %v311
      %2495 = vmatprep.subr.mxu0 0.0
      %2496 = vmatpush1.msra.mxu0 %v312
      %2497 = vmatprep.subr.mxu0 0.0
      %2498 = vmatpush1.msra.mxu0 %v313
      %2499 = vmatprep.mubr.f32.mxu0 %v2404
      %2500 = vmatmul.mubr.f32.gmra.mrb[0].mxu0 %v2403
      %v2501 = vpop.f32.mrb[0].mxu0
      %v2502 = vadd.f32 0.0, %v2501
      %v2503 = vpop.f32.mrb[0].mxu0
      %2504 = vmatprep.mubr.f32.mxu0 %v2406
      %2505 = vmatmul.mubr.f32.gmra.mrb[0].mxu0 %v2405
      %v2506 = vpop.f32.mrb[0].mxu0
      %v2507 = vadd.f32 0.0, %v2506
      %v2508 = vpop.f32.mrb[0].mxu0
      %2509 = vmatprep.mubr.f32.mxu0 %v2408
      %2510 = vmatmul.mubr.f32.gmra.mrb[0].mxu0 %v2407
      %v2511 = vpop.f32.mrb[0].mxu0
      %v2512 = vadd.f32 0.0, %v2511
      %v2513 = vpop.f32.mrb[0].mxu0
      %2514 = vmatprep.mubr.f32.mxu0 %v2410
      %2515 = vmatmul.mubr.f32.gmra.mrb[0].mxu0 %v2409
      %v2516 = vpop.f32.mrb[0].mxu0
      %v2517 = vadd.f32 0.0, %v2516
      %v2518 = vpop.f32.mrb[0].mxu0
      %2519 = vmatprep.mubr.f32.mxu0 %v2412
      %2520 = vmatmul.mubr.f32.gmra.mrb[0].mxu0 %v2411
      %v2521 = vpop.f32.mrb[0].mxu0
      %v2522 = vadd.f32 0.0, %v2521
      %v2523 = vpop.f32.mrb[0].mxu0
      %2524 = vmatprep.mubr.f32.mxu0 %v2414
      %2525 = vmatmul.mubr.f32.gmra.mrb[0].mxu0 %v2413
      %v2526 = vpop.f32.mrb[0].mxu0
      %v2527 = vadd.f32 0.0, %v2526
      %v2528 = vpop.f32.mrb[0].mxu0
      %2529 = vmatprep.mubr.f32.mxu0 %v2416
      %2530 = vmatmul.mubr.f32.gmra.mrb[0].mxu0 %v2415
      %v2531 = vpop.f32.mrb[0].mxu0
      %v2532 = vadd.f32 0.0, %v2531
      %v2533 = vpop.f32.mrb[0].mxu0
      %2534 = vmatprep.mubr.f32.mxu0 %v2418
      %2535 = vmatmul.mubr.f32.gmra.mrb[0].mxu0 %v2417
      %v2536 = vpop.f32.mrb[0].mxu0
      %v2537 = vadd.f32 0.0, %v2536
      %v2538 = vpop.f32.mrb[0].mxu0
      %2539 = vmatprep.mubr.f32.mxu0 %v2420
      %2540 = vmatmul.mubr.f32.gmra.mrb[0].mxu0 %v2419
      %v2541 = vpop.f32.mrb[0].mxu0
      %v2542 = vadd.f32 0.0, %v2541
      %v2543 = vpop.f32.mrb[0].mxu0
      %2544 = vmatprep.mubr.f32.mxu0 %v2422
      %2545 = vmatmul.mubr.f32.gmra.mrb[0].mxu0 %v2421
      %v2546 = vpop.f32.mrb[0].mxu0
      %v2547 = vadd.f32 0.0, %v2546
      %v2548 = vpop.f32.mrb[0].mxu0
      %2549 = vmatprep.mubr.f32.mxu0 %v2424
      %2550 = vmatmul.mubr.f32.gmra.mrb[0].mxu0 %v2423
      %v2551 = vpop.f32.mrb[0].mxu0
      %v2552 = vadd.f32 0.0, %v2551
      %v2553 = vpop.f32.mrb[0].mxu0
      %2554 = vmatprep.mubr.f32.mxu0 %v2426
      %2555 = vmatmul.mubr.f32.gmra.mrb[0].mxu0 %v2425
      %v2556 = vpop.f32.mrb[0].mxu0
      %v2557 = vadd.f32 0.0, %v2556
      %v2558 = vpop.f32.mrb[0].mxu0
      %2559 = vmatprep.mubr.f32.mxu0 %v2428
      %2560 = vmatmul.mubr.f32.gmra.mrb[0].mxu0 %v2427
      %v2561 = vpop.f32.mrb[0].mxu0
      %v2562 = vadd.f32 0.0, %v2561
      %v2563 = vpop.f32.mrb[0].mxu0
      %2564 = vmatprep.mubr.f32.mxu0 %v2430
      %2565 = vmatmul.mubr.f32.gmra.mrb[0].mxu0 %v2429
      %v2566 = vpop.f32.mrb[0].mxu0
      %v2567 = vadd.f32 0.0, %v2566
      %v2568 = vpop.f32.mrb[0].mxu0
      %2569 = vmatprep.mubr.f32.mxu0 %v2432
      %2570 = vmatmul.mubr.f32.gmra.mrb[0].mxu0 %v2431
      %v2571 = vpop.f32.mrb[0].mxu0
      %v2572 = vadd.f32 0.0, %v2571
      %v2573 = vpop.f32.mrb[0].mxu0
      %2574 = vmatprep.mubr.f32.mxu0 %v2434
      %2575 = vmatmul.mubr.f32.gmra.mrb[0].mxu0 %v2433
      %v2576 = vpop.f32.mrb[0].mxu0
      %v2577 = vadd.f32 0.0, %v2576
      %v2578 = vpop.f32.mrb[0].mxu0
      %2579 = vdwg.mxu0
      %v2580 = vsel %vm2339, -1e+30, %v2147
      %v2581 = vsel %vm2340, -1e+30, %v2148
      %v2582 = vsel %vm2341, -1e+30, %v2149
      %v2583 = vsel %vm2342, -1e+30, %v2150
      %v2584 = vsel %vm2343, -1e+30, %v2151
      %v2585 = vsel %vm2344, -1e+30, %v2152
      %v2586 = vsel %vm2345, -1e+30, %v2153
      %v2587 = vsel %vm2346, -1e+30, %v2154
      %v2588 = vsel %vm2347, -1e+30, %v2155
      %v2589 = vsel %vm2348, -1e+30, %v2156
      %v2590 = vsel %vm2349, -1e+30, %v2157
      %v2591 = vsel %vm2350, -1e+30, %v2158
      %v2592 = vsel %vm2351, -1e+30, %v2159
      %v2593 = vsel %vm2352, -1e+30, %v2160
      %v2594 = vsel %vm2353, -1e+30, %v2161
      %v2595 = vsel %vm2354, -1e+30, %v2162
      %v2596 = vsel %vm2355, -1e+30, %v2163
      %v2597 = vsel %vm2356, -1e+30, %v2164
      %v2598 = vsel %vm2357, -1e+30, %v2165
      %v2599 = vsel %vm2358, -1e+30, %v2166
      %v2600 = vsel %vm2359, -1e+30, %v2167
      %v2601 = vsel %vm2360, -1e+30, %v2168
      %v2602 = vsel %vm2361, -1e+30, %v2169
      %v2603 = vsel %vm2362, -1e+30, %v2170
      %v2604 = vsel %vm2363, -1e+30, %v2171
      %v2605 = vsel %vm2364, -1e+30, %v2172
      %v2606 = vsel %vm2365, -1e+30, %v2173
      %v2607 = vsel %vm2366, -1e+30, %v2174
      %v2608 = vsel %vm2367, -1e+30, %v2175
      %v2609 = vsel %vm2368, -1e+30, %v2176
      %v2610 = vsel %vm2369, -1e+30, %v2177
      %v2611 = vsel %vm2370, -1e+30, %v2178
      %v2612 = vmax.f32 %v2580, %v2581
      %2613 = vmax.xlane.f32.xlu0 %v2612
      %v2614 = vpop.xlane.xlu0 %2613
      %v2615 = vmax.f32 %v2582, %v2583
      %2616 = vmax.xlane.f32.xlu0 %v2615
      %v2617 = vpop.xlane.xlu0 %2616
      %v2618 = vmax.f32 %v2584, %v2585
      %2619 = vmax.xlane.f32.xlu0 %v2618
      %v2620 = vpop.xlane.xlu0 %2619
      %v2621 = vmax.f32 %v2586, %v2587
      %2622 = vmax.xlane.f32.xlu0 %v2621
      %v2623 = vpop.xlane.xlu0 %2622
      %v2624 = vmax.f32 %v2588, %v2589
      %2625 = vmax.xlane.f32.xlu0 %v2624
      %v2626 = vpop.xlane.xlu0 %2625
      %v2627 = vmax.f32 %v2590, %v2591
      %2628 = vmax.xlane.f32.xlu0 %v2627
      %v2629 = vpop.xlane.xlu0 %2628
      %v2630 = vmax.f32 %v2592, %v2593
      %2631 = vmax.xlane.f32.xlu0 %v2630
      %v2632 = vpop.xlane.xlu0 %2631
      %v2633 = vmax.f32 %v2594, %v2595
      %2634 = vmax.xlane.f32.xlu0 %v2633
      %v2635 = vpop.xlane.xlu0 %2634
      %v2636 = vmax.f32 %v2596, %v2597
      %2637 = vmax.xlane.f32.xlu0 %v2636
      %v2638 = vpop.xlane.xlu0 %2637
      %v2639 = vmax.f32 %v2598, %v2599
      %2640 = vmax.xlane.f32.xlu0 %v2639
      %v2641 = vpop.xlane.xlu0 %2640
      %v2642 = vmax.f32 %v2600, %v2601
      %2643 = vmax.xlane.f32.xlu0 %v2642
      %v2644 = vpop.xlane.xlu0 %2643
      %v2645 = vmax.f32 %v2602, %v2603
      %2646 = vmax.xlane.f32.xlu0 %v2645
      %v2647 = vpop.xlane.xlu0 %2646
      %v2648 = vmax.f32 %v2604, %v2605
      %2649 = vmax.xlane.f32.xlu0 %v2648
      %v2650 = vpop.xlane.xlu0 %2649
      %v2651 = vmax.f32 %v2606, %v2607
      %2652 = vmax.xlane.f32.xlu0 %v2651
      %v2653 = vpop.xlane.xlu0 %2652
      %v2654 = vmax.f32 %v2608, %v2609
      %2655 = vmax.xlane.f32.xlu0 %v2654
      %v2656 = vpop.xlane.xlu0 %2655
      %v2657 = vmax.f32 %v2610, %v2611
      %2658 = vmax.xlane.f32.xlu0 %v2657
      %v2659 = vpop.xlane.xlu0 %2658
      %vm2660 = vcmp.ge.f32.partialorder %v2580, %v2614
      %vm2661 = vcmp.ge.f32.partialorder %v2581, %v2614
      %vm2662 = vcmp.ge.f32.partialorder %v2582, %v2617
      %vm2663 = vcmp.ge.f32.partialorder %v2583, %v2617
      %vm2664 = vcmp.ge.f32.partialorder %v2584, %v2620
      %vm2665 = vcmp.ge.f32.partialorder %v2585, %v2620
      %vm2666 = vcmp.ge.f32.partialorder %v2586, %v2623
      %vm2667 = vcmp.ge.f32.partialorder %v2587, %v2623
      %vm2668 = vcmp.ge.f32.partialorder %v2588, %v2626
      %vm2669 = vcmp.ge.f32.partialorder %v2589, %v2626
      %vm2670 = vcmp.ge.f32.partialorder %v2590, %v2629
      %vm2671 = vcmp.ge.f32.partialorder %v2591, %v2629
      %vm2672 = vcmp.ge.f32.partialorder %v2592, %v2632
      %vm2673 = vcmp.ge.f32.partialorder %v2593, %v2632
      %vm2674 = vcmp.ge.f32.partialorder %v2594, %v2635
      %vm2675 = vcmp.ge.f32.partialorder %v2595, %v2635
      %vm2676 = vcmp.ge.f32.partialorder %v2596, %v2638
      %vm2677 = vcmp.ge.f32.partialorder %v2597, %v2638
      %vm2678 = vcmp.ge.f32.partialorder %v2598, %v2641
      %vm2679 = vcmp.ge.f32.partialorder %v2599, %v2641
      %vm2680 = vcmp.ge.f32.partialorder %v2600, %v2644
      %vm2681 = vcmp.ge.f32.partialorder %v2601, %v2644
      %vm2682 = vcmp.ge.f32.partialorder %v2602, %v2647
      %vm2683 = vcmp.ge.f32.partialorder %v2603, %v2647
      %vm2684 = vcmp.ge.f32.partialorder %v2604, %v2650
      %vm2685 = vcmp.ge.f32.partialorder %v2605, %v2650
      %vm2686 = vcmp.ge.f32.partialorder %v2606, %v2653
      %vm2687 = vcmp.ge.f32.partialorder %v2607, %v2653
      %vm2688 = vcmp.ge.f32.partialorder %v2608, %v2656
      %vm2689 = vcmp.ge.f32.partialorder %v2609, %v2656
      %vm2690 = vcmp.ge.f32.partialorder %v2610, %v2659
      %vm2691 = vcmp.ge.f32.partialorder %v2611, %v2659
      %v2692 = vsel %vm2660, %v1311, 256.0
      %v2693 = vsel %vm2661, %v1312, 256.0
      %v2694 = vsel %vm2662, %v1311, 256.0
      %v2695 = vsel %vm2663, %v1312, 256.0
      %v2696 = vsel %vm2664, %v1311, 256.0
      %v2697 = vsel %vm2665, %v1312, 256.0
      %v2698 = vsel %vm2666, %v1311, 256.0
      %v2699 = vsel %vm2667, %v1312, 256.0
      %v2700 = vsel %vm2668, %v1311, 256.0
      %v2701 = vsel %vm2669, %v1312, 256.0
      %v2702 = vsel %vm2670, %v1311, 256.0
      %v2703 = vsel %vm2671, %v1312, 256.0
      %v2704 = vsel %vm2672, %v1311, 256.0
      %v2705 = vsel %vm2673, %v1312, 256.0
      %v2706 = vsel %vm2674, %v1311, 256.0
      %v2707 = vsel %vm2675, %v1312, 256.0
      %v2708 = vsel %vm2676, %v1311, 256.0
      %v2709 = vsel %vm2677, %v1312, 256.0
      %v2710 = vsel %vm2678, %v1311, 256.0
      %v2711 = vsel %vm2679, %v1312, 256.0
      %v2712 = vsel %vm2680, %v1311, 256.0
      %v2713 = vsel %vm2681, %v1312, 256.0
      %v2714 = vsel %vm2682, %v1311, 256.0
      %v2715 = vsel %vm2683, %v1312, 256.0
      %v2716 = vsel %vm2684, %v1311, 256.0
      %v2717 = vsel %vm2685, %v1312, 256.0
      %v2718 = vsel %vm2686, %v1311, 256.0
      %v2719 = vsel %vm2687, %v1312, 256.0
      %v2720 = vsel %vm2688, %v1311, 256.0
      %v2721 = vsel %vm2689, %v1312, 256.0
      %v2722 = vsel %vm2690, %v1311, 256.0
      %v2723 = vsel %vm2691, %v1312, 256.0
      %v2724 = vmin.f32 %v2692, %v2693
      %2725 = vmin.xlane.f32.xlu0 %v2724
      %v2726 = vpop.xlane.xlu0 %2725
      %v2727 = vmin.f32 %v2694, %v2695
      %2728 = vmin.xlane.f32.xlu0 %v2727
      %v2729 = vpop.xlane.xlu0 %2728
      %v2730 = vmin.f32 %v2696, %v2697
      %2731 = vmin.xlane.f32.xlu0 %v2730
      %v2732 = vpop.xlane.xlu0 %2731
      %v2733 = vmin.f32 %v2698, %v2699
      %2734 = vmin.xlane.f32.xlu0 %v2733
      %v2735 = vpop.xlane.xlu0 %2734
      %v2736 = vmin.f32 %v2700, %v2701
      %2737 = vmin.xlane.f32.xlu0 %v2736
      %v2738 = vpop.xlane.xlu0 %2737
      %v2739 = vmin.f32 %v2702, %v2703
      %2740 = vmin.xlane.f32.xlu0 %v2739
      %v2741 = vpop.xlane.xlu0 %2740
      %v2742 = vmin.f32 %v2704, %v2705
      %2743 = vmin.xlane.f32.xlu0 %v2742
      %v2744 = vpop.xlane.xlu0 %2743
      %v2745 = vmin.f32 %v2706, %v2707
      %2746 = vmin.xlane.f32.xlu0 %v2745
      %v2747 = vpop.xlane.xlu0 %2746
      %v2748 = vmin.f32 %v2708, %v2709
      %2749 = vmin.xlane.f32.xlu0 %v2748
      %v2750 = vpop.xlane.xlu0 %2749
      %v2751 = vmin.f32 %v2710, %v2711
      %2752 = vmin.xlane.f32.xlu0 %v2751
      %v2753 = vpop.xlane.xlu0 %2752
      %v2754 = vmin.f32 %v2712, %v2713
      %2755 = vmin.xlane.f32.xlu0 %v2754
      %v2756 = vpop.xlane.xlu0 %2755
      %v2757 = vmin.f32 %v2714, %v2715
      %2758 = vmin.xlane.f32.xlu0 %v2757
      %v2759 = vpop.xlane.xlu0 %2758
      %v2760 = vmin.f32 %v2716, %v2717
      %2761 = vmin.xlane.f32.xlu0 %v2760
      %v2762 = vpop.xlane.xlu0 %2761
      %v2763 = vmin.f32 %v2718, %v2719
      %2764 = vmin.xlane.f32.xlu0 %v2763
      %v2765 = vpop.xlane.xlu0 %2764
      %v2766 = vmin.f32 %v2720, %v2721
      %2767 = vmin.xlane.f32.xlu0 %v2766
      %v2768 = vpop.xlane.xlu0 %2767
      %v2769 = vmin.f32 %v2722, %v2723
      %2770 = vmin.xlane.f32.xlu0 %v2769
      %v2771 = vpop.xlane.xlu0 %2770
      %vm2772 = vcmp.eq.f32.partialorder %v1311, %v2726
      %vm2773 = vcmp.eq.f32.partialorder %v1312, %v2726
      %vm2774 = vcmp.eq.f32.partialorder %v1311, %v2729
      %vm2775 = vcmp.eq.f32.partialorder %v1312, %v2729
      %vm2776 = vcmp.eq.f32.partialorder %v1311, %v2732
      %vm2777 = vcmp.eq.f32.partialorder %v1312, %v2732
      %vm2778 = vcmp.eq.f32.partialorder %v1311, %v2735
      %vm2779 = vcmp.eq.f32.partialorder %v1312, %v2735
      %vm2780 = vcmp.eq.f32.partialorder %v1311, %v2738
      %vm2781 = vcmp.eq.f32.partialorder %v1312, %v2738
      %vm2782 = vcmp.eq.f32.partialorder %v1311, %v2741
      %vm2783 = vcmp.eq.f32.partialorder %v1312, %v2741
      %vm2784 = vcmp.eq.f32.partialorder %v1311, %v2744
      %vm2785 = vcmp.eq.f32.partialorder %v1312, %v2744
      %vm2786 = vcmp.eq.f32.partialorder %v1311, %v2747
      %vm2787 = vcmp.eq.f32.partialorder %v1312, %v2747
      %vm2788 = vcmp.eq.f32.partialorder %v1311, %v2750
      %vm2789 = vcmp.eq.f32.partialorder %v1312, %v2750
      %vm2790 = vcmp.eq.f32.partialorder %v1311, %v2753
      %vm2791 = vcmp.eq.f32.partialorder %v1312, %v2753
      %vm2792 = vcmp.eq.f32.partialorder %v1311, %v2756
      %vm2793 = vcmp.eq.f32.partialorder %v1312, %v2756
      %vm2794 = vcmp.eq.f32.partialorder %v1311, %v2759
      %vm2795 = vcmp.eq.f32.partialorder %v1312, %v2759
      %vm2796 = vcmp.eq.f32.partialorder %v1311, %v2762
      %vm2797 = vcmp.eq.f32.partialorder %v1312, %v2762
      %vm2798 = vcmp.eq.f32.partialorder %v1311, %v2765
      %vm2799 = vcmp.eq.f32.partialorder %v1312, %v2765
      %vm2800 = vcmp.eq.f32.partialorder %v1311, %v2768
      %vm2801 = vcmp.eq.f32.partialorder %v1312, %v2768
      %vm2802 = vcmp.eq.f32.partialorder %v1311, %v2771
      %vm2803 = vcmp.eq.f32.partialorder %v1312, %v2771
      %v2804 = vsel %vm2772, 1, 0
      %v2805 = vsel %vm2773, 1, 0
      %v2806 = vsel %vm2774, 1, 0
      %v2807 = vsel %vm2775, 1, 0
      %v2808 = vsel %vm2776, 1, 0
      %v2809 = vsel %vm2777, 1, 0
      %v2810 = vsel %vm2778, 1, 0
      %v2811 = vsel %vm2779, 1, 0
      %v2812 = vsel %vm2780, 1, 0
      %v2813 = vsel %vm2781, 1, 0
      %v2814 = vsel %vm2782, 1, 0
      %v2815 = vsel %vm2783, 1, 0
      %v2816 = vsel %vm2784, 1, 0
      %v2817 = vsel %vm2785, 1, 0
      %v2818 = vsel %vm2786, 1, 0
      %v2819 = vsel %vm2787, 1, 0
      %v2820 = vsel %vm2788, 1, 0
      %v2821 = vsel %vm2789, 1, 0
      %v2822 = vsel %vm2790, 1, 0
      %v2823 = vsel %vm2791, 1, 0
      %v2824 = vsel %vm2792, 1, 0
      %v2825 = vsel %vm2793, 1, 0
      %v2826 = vsel %vm2794, 1, 0
      %v2827 = vsel %vm2795, 1, 0
      %v2828 = vsel %vm2796, 1, 0
      %v2829 = vsel %vm2797, 1, 0
      %v2830 = vsel %vm2798, 1, 0
      %v2831 = vsel %vm2799, 1, 0
      %v2832 = vsel %vm2800, 1, 0
      %v2833 = vsel %vm2801, 1, 0
      %v2834 = vsel %vm2802, 1, 0
      %v2835 = vsel %vm2803, 1, 0
      %v2836 = vcvt.s32.f32 %v2804
      %v2837 = vcvt.s32.f32 %v2805
      %v2838 = vcvt.s32.f32 %v2806
      %v2839 = vcvt.s32.f32 %v2807
      %v2840 = vcvt.s32.f32 %v2808
      %v2841 = vcvt.s32.f32 %v2809
      %v2842 = vcvt.s32.f32 %v2810
      %v2843 = vcvt.s32.f32 %v2811
      %v2844 = vcvt.s32.f32 %v2812
      %v2845 = vcvt.s32.f32 %v2813
      %v2846 = vcvt.s32.f32 %v2814
      %v2847 = vcvt.s32.f32 %v2815
      %v2848 = vcvt.s32.f32 %v2816
      %v2849 = vcvt.s32.f32 %v2817
      %v2850 = vcvt.s32.f32 %v2818
      %v2851 = vcvt.s32.f32 %v2819
      %v2852 = vcvt.s32.f32 %v2820
      %v2853 = vcvt.s32.f32 %v2821
      %v2854 = vcvt.s32.f32 %v2822
      %v2855 = vcvt.s32.f32 %v2823
      %v2856 = vcvt.s32.f32 %v2824
      %v2857 = vcvt.s32.f32 %v2825
      %v2858 = vcvt.s32.f32 %v2826
      %v2859 = vcvt.s32.f32 %v2827
      %v2860 = vcvt.s32.f32 %v2828
      %v2861 = vcvt.s32.f32 %v2829
      %v2862 = vcvt.s32.f32 %v2830
      %v2863 = vcvt.s32.f32 %v2831
      %v2864 = vcvt.s32.f32 %v2832
      %v2865 = vcvt.s32.f32 %v2833
      %v2866 = vcvt.s32.f32 %v2834
      %v2867 = vcvt.s32.f32 %v2835
      %2868 = vmatprep.subr.mxu0 0.0
      %2869 = vmatpush1.msra.mxu0 %v282
      %2870 = vmatprep.subr.mxu0 0.0
      %2871 = vmatpush1.msra.mxu0 %v283
      %2872 = vmatprep.subr.mxu0 0.0
      %2873 = vmatpush1.msra.mxu0 %v284
      %2874 = vmatprep.subr.mxu0 0.0
      %2875 = vmatpush1.msra.mxu0 %v285
      %2876 = vmatprep.subr.mxu0 0.0
      %2877 = vmatpush1.msra.mxu0 %v286
      %2878 = vmatprep.subr.mxu0 0.0
      %2879 = vmatpush1.msra.mxu0 %v287
      %2880 = vmatprep.subr.mxu0 0.0
      %2881 = vmatpush1.msra.mxu0 %v288
      %2882 = vmatprep.subr.mxu0 0.0
      %2883 = vmatpush1.msra.mxu0 %v289
      %2884 = vmatprep.subr.mxu0 0.0
      %2885 = vmatpush1.msra.mxu0 %v290
      %2886 = vmatprep.subr.mxu0 0.0
      %2887 = vmatpush1.msra.mxu0 %v291
      %2888 = vmatprep.subr.mxu0 0.0
      %2889 = vmatpush1.msra.mxu0 %v292
      %2890 = vmatprep.subr.mxu0 0.0
      %2891 = vmatpush1.msra.mxu0 %v293
      %2892 = vmatprep.subr.mxu0 0.0
      %2893 = vmatpush1.msra.mxu0 %v294
      %2894 = vmatprep.subr.mxu0 0.0
      %2895 = vmatpush1.msra.mxu0 %v295
      %2896 = vmatprep.subr.mxu0 0.0
      %2897 = vmatpush1.msra.mxu0 %v296
      %2898 = vmatprep.subr.mxu0 0.0
      %2899 = vmatpush1.msra.mxu0 %v297
      %2900 = vmatprep.subr.mxu0 0.0
      %2901 = vmatpush1.msra.mxu0 %v298
      %2902 = vmatprep.subr.mxu0 0.0
      %2903 = vmatpush1.msra.mxu0 %v299
      %2904 = vmatprep.subr.mxu0 0.0
      %2905 = vmatpush1.msra.mxu0 %v300
      %2906 = vmatprep.subr.mxu0 0.0
      %2907 = vmatpush1.msra.mxu0 %v301
      %2908 = vmatprep.subr.mxu0 0.0
      %2909 = vmatpush1.msra.mxu0 %v302
      %2910 = vmatprep.subr.mxu0 0.0
      %2911 = vmatpush1.msra.mxu0 %v303
      %2912 = vmatprep.subr.mxu0 0.0
      %2913 = vmatpush1.msra.mxu0 %v304
      %2914 = vmatprep.subr.mxu0 0.0
      %2915 = vmatpush1.msra.mxu0 %v305
      %2916 = vmatprep.subr.mxu0 0.0
      %2917 = vmatpush1.msra.mxu0 %v306
      %2918 = vmatprep.subr.mxu0 0.0
      %2919 = vmatpush1.msra.mxu0 %v307
      %2920 = vmatprep.subr.mxu0 0.0
      %2921 = vmatpush1.msra.mxu0 %v308
      %2922 = vmatprep.subr.mxu0 0.0
      %2923 = vmatpush1.msra.mxu0 %v309
      %2924 = vmatprep.subr.mxu0 0.0
      %2925 = vmatpush1.msra.mxu0 %v310
      %2926 = vmatprep.subr.mxu0 0.0
      %2927 = vmatpush1.msra.mxu0 %v311
      %2928 = vmatprep.subr.mxu0 0.0
      %2929 = vmatpush1.msra.mxu0 %v312
      %2930 = vmatprep.subr.mxu0 0.0
      %2931 = vmatpush1.msra.mxu0 %v313
      %2932 = vmatprep.mubr.f32.mxu0 %v2837
      %2933 = vmatmul.mubr.f32.gmra.mrb[0].mxu0 %v2836
      %v2934 = vpop.f32.mrb[0].mxu0
      %v2935 = vadd.f32 0.0, %v2934
      %v2936 = vpop.f32.mrb[0].mxu0
      %2937 = vmatprep.mubr.f32.mxu0 %v2839
      %2938 = vmatmul.mubr.f32.gmra.mrb[0].mxu0 %v2838
      %v2939 = vpop.f32.mrb[0].mxu0
      %v2940 = vadd.f32 0.0, %v2939
      %v2941 = vpop.f32.mrb[0].mxu0
      %2942 = vmatprep.mubr.f32.mxu0 %v2841
      %2943 = vmatmul.mubr.f32.gmra.mrb[0].mxu0 %v2840
      %v2944 = vpop.f32.mrb[0].mxu0
      %v2945 = vadd.f32 0.0, %v2944
      %v2946 = vpop.f32.mrb[0].mxu0
      %2947 = vmatprep.mubr.f32.mxu0 %v2843
      %2948 = vmatmul.mubr.f32.gmra.mrb[0].mxu0 %v2842
      %v2949 = vpop.f32.mrb[0].mxu0
      %v2950 = vadd.f32 0.0, %v2949
      %v2951 = vpop.f32.mrb[0].mxu0
      %2952 = vmatprep.mubr.f32.mxu0 %v2845
      %2953 = vmatmul.mubr.f32.gmra.mrb[0].mxu0 %v2844
      %v2954 = vpop.f32.mrb[0].mxu0
      %v2955 = vadd.f32 0.0, %v2954
      %v2956 = vpop.f32.mrb[0].mxu0
      %2957 = vmatprep.mubr.f32.mxu0 %v2847
      %2958 = vmatmul.mubr.f32.gmra.mrb[0].mxu0 %v2846
      %v2959 = vpop.f32.mrb[0].mxu0
      %v2960 = vadd.f32 0.0, %v2959
      %v2961 = vpop.f32.mrb[0].mxu0
      %2962 = vmatprep.mubr.f32.mxu0 %v2849
      %2963 = vmatmul.mubr.f32.gmra.mrb[0].mxu0 %v2848
      %v2964 = vpop.f32.mrb[0].mxu0
      %v2965 = vadd.f32 0.0, %v2964
      %v2966 = vpop.f32.mrb[0].mxu0
      %2967 = vmatprep.mubr.f32.mxu0 %v2851
      %2968 = vmatmul.mubr.f32.gmra.mrb[0].mxu0 %v2850
      %v2969 = vpop.f32.mrb[0].mxu0
      %v2970 = vadd.f32 0.0, %v2969
      %v2971 = vpop.f32.mrb[0].mxu0
      %2972 = vmatprep.mubr.f32.mxu0 %v2853
      %2973 = vmatmul.mubr.f32.gmra.mrb[0].mxu0 %v2852
      %v2974 = vpop.f32.mrb[0].mxu0
      %v2975 = vadd.f32 0.0, %v2974
      %v2976 = vpop.f32.mrb[0].mxu0
      %2977 = vmatprep.mubr.f32.mxu0 %v2855
      %2978 = vmatmul.mubr.f32.gmra.mrb[0].mxu0 %v2854
      %v2979 = vpop.f32.mrb[0].mxu0
      %v2980 = vadd.f32 0.0, %v2979
      %v2981 = vpop.f32.mrb[0].mxu0
      %2982 = vmatprep.mubr.f32.mxu0 %v2857
      %2983 = vmatmul.mubr.f32.gmra.mrb[0].mxu0 %v2856
      %v2984 = vpop.f32.mrb[0].mxu0
      %v2985 = vadd.f32 0.0, %v2984
      %v2986 = vpop.f32.mrb[0].mxu0
      %2987 = vmatprep.mubr.f32.mxu0 %v2859
      %2988 = vmatmul.mubr.f32.gmra.mrb[0].mxu0 %v2858
      %v2989 = vpop.f32.mrb[0].mxu0
      %v2990 = vadd.f32 0.0, %v2989
      %v2991 = vpop.f32.mrb[0].mxu0
      %2992 = vmatprep.mubr.f32.mxu0 %v2861
      %2993 = vmatmul.mubr.f32.gmra.mrb[0].mxu0 %v2860
      %v2994 = vpop.f32.mrb[0].mxu0
      %v2995 = vadd.f32 0.0, %v2994
      %v2996 = vpop.f32.mrb[0].mxu0
      %2997 = vmatprep.mubr.f32.mxu0 %v2863
      %2998 = vmatmul.mubr.f32.gmra.mrb[0].mxu0 %v2862
      %v2999 = vpop.f32.mrb[0].mxu0
      %v3000 = vadd.f32 0.0, %v2999
      %v3001 = vpop.f32.mrb[0].mxu0
      %3002 = vmatprep.mubr.f32.mxu0 %v2865
      %3003 = vmatmul.mubr.f32.gmra.mrb[0].mxu0 %v2864
      %v3004 = vpop.f32.mrb[0].mxu0
      %v3005 = vadd.f32 0.0, %v3004
      %v3006 = vpop.f32.mrb[0].mxu0
      %3007 = vmatprep.mubr.f32.mxu0 %v2867
      %3008 = vmatmul.mubr.f32.gmra.mrb[0].mxu0 %v2866
      %v3009 = vpop.f32.mrb[0].mxu0
      %v3010 = vadd.f32 0.0, %v3009
      %v3011 = vpop.f32.mrb[0].mxu0
      %3012 = vdwg.mxu0
      %v3013 = vld [vmem:[%s2] sm:$0xff]
      %v3014 = vld [vmem:[%s2 + $0x8] sm:$0xff]
      %v3015 = vld [vmem:[%s2 + $0x10] sm:$0xff]
      %v3016 = vld [vmem:[%s2 + $0x18] sm:$0xff]
      %v3017 = vld [vmem:[%s3] sm:$0x1]
      %v3018 = vld [vmem:[%s4] sm:$0x1]
      %v3020 = vlaneseq
      %v3021 = vshrl.u32 %v3020, 7
      %v3022 = vsub.s32 0, %v3021
      %v3023 = vrot.slane %v3017, %v3022
      %v3026 = vsel %vm362, %v1636, 0
      %v3029 = vsel %vm362, %v1641, 0
      %v3032 = vsel %vm362, %v1646, 0
      %v3035 = vsel %vm362, %v1651, 0
      %v3038 = vsel %vm362, %v1656, 0
      %v3041 = vsel %vm362, %v1661, 0
      %v3044 = vsel %vm362, %v1666, 0
      %v3047 = vsel %vm362, %v1671, 0
      %v3050 = vsel %vm362, %v1676, 0
      %v3053 = vsel %vm362, %v1681, 0
      %v3056 = vsel %vm362, %v1686, 0
      %v3059 = vsel %vm362, %v1691, 0
      %v3062 = vsel %vm362, %v1696, 0
      %v3065 = vsel %vm362, %v1701, 0
      %v3068 = vsel %vm362, %v1706, 0
      %v3071 = vsel %vm362, %v1711, 0
      %3073 = vmatprep.subr.mxu0 0.0
      %3074 = vmatpush1.msra.mxu0 %v3013
      %3075 = vmatprep.subr.mxu0 0.0
      %3076 = vmatpush1.msra.mxu0 %v3014
      %3077 = vmatprep.subr.mxu0 0.0
      %3078 = vmatpush1.msra.mxu0 %v3015
      %3079 = vmatprep.subr.mxu0 0.0
      %3080 = vmatpush1.msra.mxu0 %v3016
      %3081 = vmatprep.subr.mxu0 0.0
      %3082 = vmatpush1.msra.mxu0 0.0
      %3083 = vmatprep.subr.mxu0 0.0
      %3084 = vmatpush1.msra.mxu0 0.0
      %3085 = vmatprep.subr.mxu0 0.0
      %3086 = vmatpush1.msra.mxu0 0.0
      %3087 = vmatprep.subr.mxu0 0.0
      %3088 = vmatpush1.msra.mxu0 0.0
      %3089 = vmatprep.subr.mxu0 0.0
      %3090 = vmatpush1.msra.mxu0 0.0
      %3091 = vmatprep.subr.mxu0 0.0
      %3092 = vmatpush1.msra.mxu0 0.0
      %3093 = vmatprep.subr.mxu0 0.0
      %3094 = vmatpush1.msra.mxu0 0.0
      %3095 = vmatprep.subr.mxu0 0.0
      %3096 = vmatpush1.msra.mxu0 0.0
      %3097 = vmatprep.subr.mxu0 0.0
      %3098 = vmatpush1.msra.mxu0 0.0
      %3099 = vmatprep.subr.mxu0 0.0
      %3100 = vmatpush1.msra.mxu0 0.0
      %3101 = vmatprep.subr.mxu0 0.0
      %3102 = vmatpush1.msra.mxu0 0.0
      %3103 = vmatprep.subr.mxu0 0.0
      %3104 = vmatpush1.msra.mxu0 0.0
      %3105 = vmatprep.subr.mxu0 0.0
      %3106 = vmatpush1.msra.mxu0 0.0
      %3107 = vmatprep.subr.mxu0 0.0
      %3108 = vmatpush1.msra.mxu0 0.0
      %3109 = vmatprep.subr.mxu0 0.0
      %3110 = vmatpush1.msra.mxu0 0.0
      %3111 = vmatprep.subr.mxu0 0.0
      %3112 = vmatpush1.msra.mxu0 0.0
      %3113 = vmatprep.subr.mxu0 0.0
      %3114 = vmatpush1.msra.mxu0 0.0
      %3115 = vmatprep.subr.mxu0 0.0
      %3116 = vmatpush1.msra.mxu0 0.0
      %3117 = vmatprep.subr.mxu0 0.0
      %3118 = vmatpush1.msra.mxu0 0.0
      %3119 = vmatprep.subr.mxu0 0.0
      %3120 = vmatpush1.msra.mxu0 0.0
      %3121 = vmatprep.subr.mxu0 0.0
      %3122 = vmatpush1.msra.mxu0 0.0
      %3123 = vmatprep.subr.mxu0 0.0
      %3124 = vmatpush1.msra.mxu0 0.0
      %3125 = vmatprep.subr.mxu0 0.0
      %3126 = vmatpush1.msra.mxu0 0.0
      %3127 = vmatprep.subr.mxu0 0.0
      %3128 = vmatpush1.msra.mxu0 0.0
      %3129 = vmatprep.subr.mxu0 0.0
      %3130 = vmatpush1.msra.mxu0 0.0
      %3131 = vmatprep.subr.mxu0 0.0
      %3132 = vmatpush1.msra.mxu0 0.0
      %3133 = vmatprep.subr.mxu0 0.0
      %3134 = vmatpush1.msra.mxu0 0.0
      %3135 = vmatprep.subr.mxu0 0.0
      %3136 = vmatpush1.msra.mxu0 0.0
      %3137 = vmatprep.mubr.f32.mxu0 0.0
      %3138 = vmatmul.mubr.f32.gmra.mrb[0].mxu0 %v3026
      %v3139 = vpop.f32.mrb[0].mxu0
      %v3140 = vadd.f32 %v3023, %v3139
      %v3141 = vpop.f32.mrb[0].mxu0
      %3142 = vmatprep.mubr.f32.mxu0 0.0
      %3143 = vmatmul.mubr.f32.gmra.mrb[0].mxu0 %v3029
      %v3144 = vpop.f32.mrb[0].mxu0
      %v3145 = vadd.f32 %v3023, %v3144
      %v3146 = vpop.f32.mrb[0].mxu0
      %3147 = vmatprep.mubr.f32.mxu0 0.0
      %3148 = vmatmul.mubr.f32.gmra.mrb[0].mxu0 %v3032
      %v3149 = vpop.f32.mrb[0].mxu0
      %v3150 = vadd.f32 %v3023, %v3149
      %v3151 = vpop.f32.mrb[0].mxu0
      %3152 = vmatprep.mubr.f32.mxu0 0.0
      %3153 = vmatmul.mubr.f32.gmra.mrb[0].mxu0 %v3035
      %v3154 = vpop.f32.mrb[0].mxu0
      %v3155 = vadd.f32 %v3023, %v3154
      %v3156 = vpop.f32.mrb[0].mxu0
      %3157 = vmatprep.mubr.f32.mxu0 0.0
      %3158 = vmatmul.mubr.f32.gmra.mrb[0].mxu0 %v3038
      %v3159 = vpop.f32.mrb[0].mxu0
      %v3160 = vadd.f32 %v3023, %v3159
      %v3161 = vpop.f32.mrb[0].mxu0
      %3162 = vmatprep.mubr.f32.mxu0 0.0
      %3163 = vmatmul.mubr.f32.gmra.mrb[0].mxu0 %v3041
      %v3164 = vpop.f32.mrb[0].mxu0
      %v3165 = vadd.f32 %v3023, %v3164
      %v3166 = vpop.f32.mrb[0].mxu0
      %3167 = vmatprep.mubr.f32.mxu0 0.0
      %3168 = vmatmul.mubr.f32.gmra.mrb[0].mxu0 %v3044
      %v3169 = vpop.f32.mrb[0].mxu0
      %v3170 = vadd.f32 %v3023, %v3169
      %v3171 = vpop.f32.mrb[0].mxu0
      %3172 = vmatprep.mubr.f32.mxu0 0.0
      %3173 = vmatmul.mubr.f32.gmra.mrb[0].mxu0 %v3047
      %v3174 = vpop.f32.mrb[0].mxu0
      %v3175 = vadd.f32 %v3023, %v3174
      %v3176 = vpop.f32.mrb[0].mxu0
      %3177 = vmatprep.mubr.f32.mxu0 0.0
      %3178 = vmatmul.mubr.f32.gmra.mrb[0].mxu0 %v3050
      %v3179 = vpop.f32.mrb[0].mxu0
      %v3180 = vadd.f32 %v3023, %v3179
      %v3181 = vpop.f32.mrb[0].mxu0
      %3182 = vmatprep.mubr.f32.mxu0 0.0
      %3183 = vmatmul.mubr.f32.gmra.mrb[0].mxu0 %v3053
      %v3184 = vpop.f32.mrb[0].mxu0
      %v3185 = vadd.f32 %v3023, %v3184
      %v3186 = vpop.f32.mrb[0].mxu0
      %3187 = vmatprep.mubr.f32.mxu0 0.0
      %3188 = vmatmul.mubr.f32.gmra.mrb[0].mxu0 %v3056
      %v3189 = vpop.f32.mrb[0].mxu0
      %v3190 = vadd.f32 %v3023, %v3189
      %v3191 = vpop.f32.mrb[0].mxu0
      %3192 = vmatprep.mubr.f32.mxu0 0.0
      %3193 = vmatmul.mubr.f32.gmra.mrb[0].mxu0 %v3059
      %v3194 = vpop.f32.mrb[0].mxu0
      %v3195 = vadd.f32 %v3023, %v3194
      %v3196 = vpop.f32.mrb[0].mxu0
      %3197 = vmatprep.mubr.f32.mxu0 0.0
      %3198 = vmatmul.mubr.f32.gmra.mrb[0].mxu0 %v3062
      %v3199 = vpop.f32.mrb[0].mxu0
      %v3200 = vadd.f32 %v3023, %v3199
      %v3201 = vpop.f32.mrb[0].mxu0
      %3202 = vmatprep.mubr.f32.mxu0 0.0
      %3203 = vmatmul.mubr.f32.gmra.mrb[0].mxu0 %v3065
      %v3204 = vpop.f32.mrb[0].mxu0
      %v3205 = vadd.f32 %v3023, %v3204
      %v3206 = vpop.f32.mrb[0].mxu0
      %3207 = vmatprep.mubr.f32.mxu0 0.0
      %3208 = vmatmul.mubr.f32.gmra.mrb[0].mxu0 %v3068
      %v3209 = vpop.f32.mrb[0].mxu0
      %v3210 = vadd.f32 %v3023, %v3209
      %v3211 = vpop.f32.mrb[0].mxu0
      %3212 = vmatprep.mubr.f32.mxu0 0.0
      %3213 = vmatmul.mubr.f32.gmra.mrb[0].mxu0 %v3071
      %v3214 = vpop.f32.mrb[0].mxu0
      %v3215 = vadd.f32 %v3023, %v3214
      %v3216 = vpop.f32.mrb[0].mxu0
      %3217 = vdwg.mxu0
      %vm3218 = vcmask 31744
      %v3219 = vsel %vm3218, %v3140, -inf
      %3220 = vmax.xlane.f32.xlu0 %v3219
      %v3221 = vpop.xlane.xlu0 %3220
      %v3222 = vsel %vm3218, %v3145, -inf
      %3223 = vmax.xlane.f32.xlu0 %v3222
      %v3224 = vpop.xlane.xlu0 %3223
      %v3225 = vsel %vm3218, %v3150, -inf
      %3226 = vmax.xlane.f32.xlu0 %v3225
      %v3227 = vpop.xlane.xlu0 %3226
      %v3228 = vsel %vm3218, %v3155, -inf
      %3229 = vmax.xlane.f32.xlu0 %v3228
      %v3230 = vpop.xlane.xlu0 %3229
      %v3231 = vsel %vm3218, %v3160, -inf
      %3232 = vmax.xlane.f32.xlu0 %v3231
      %v3233 = vpop.xlane.xlu0 %3232
      %v3234 = vsel %vm3218, %v3165, -inf
      %3235 = vmax.xlane.f32.xlu0 %v3234
      %v3236 = vpop.xlane.xlu0 %3235
      %v3237 = vsel %vm3218, %v3170, -inf
      %3238 = vmax.xlane.f32.xlu0 %v3237
      %v3239 = vpop.xlane.xlu0 %3238
      %v3240 = vsel %vm3218, %v3175, -inf
      %3241 = vmax.xlane.f32.xlu0 %v3240
      %v3242 = vpop.xlane.xlu0 %3241
      %v3243 = vsel %vm3218, %v3180, -inf
      %3244 = vmax.xlane.f32.xlu0 %v3243
      %v3245 = vpop.xlane.xlu0 %3244
      %v3246 = vsel %vm3218, %v3185, -inf
      %3247 = vmax.xlane.f32.xlu0 %v3246
      %v3248 = vpop.xlane.xlu0 %3247
      %v3249 = vsel %vm3218, %v3190, -inf
      %3250 = vmax.xlane.f32.xlu0 %v3249
      %v3251 = vpop.xlane.xlu0 %3250
      %v3252 = vsel %vm3218, %v3195, -inf
      %3253 = vmax.xlane.f32.xlu0 %v3252
      %v3254 = vpop.xlane.xlu0 %3253
      %v3255 = vsel %vm3218, %v3200, -inf
      %3256 = vmax.xlane.f32.xlu0 %v3255
      %v3257 = vpop.xlane.xlu0 %3256
      %v3258 = vsel %vm3218, %v3205, -inf
      %3259 = vmax.xlane.f32.xlu0 %v3258
      %v3260 = vpop.xlane.xlu0 %3259
      %v3261 = vsel %vm3218, %v3210, -inf
      %3262 = vmax.xlane.f32.xlu0 %v3261
      %v3263 = vpop.xlane.xlu0 %3262
      %v3264 = vsel %vm3218, %v3215, -inf
      %3265 = vmax.xlane.f32.xlu0 %v3264
      %v3266 = vpop.xlane.xlu0 %3265
      %v3267 = vsub.f32 %v3140, %v3221
      %v3268 = vsub.f32 %v3145, %v3224
      %v3269 = vsub.f32 %v3150, %v3227
      %v3270 = vsub.f32 %v3155, %v3230
      %v3271 = vsub.f32 %v3160, %v3233
      %v3272 = vsub.f32 %v3165, %v3236
      %v3273 = vsub.f32 %v3170, %v3239
      %v3274 = vsub.f32 %v3175, %v3242
      %v3275 = vsub.f32 %v3180, %v3245
      %v3276 = vsub.f32 %v3185, %v3248
      %v3277 = vsub.f32 %v3190, %v3251
      %v3278 = vsub.f32 %v3195, %v3254
      %v3279 = vsub.f32 %v3200, %v3257
      %v3280 = vsub.f32 %v3205, %v3260
      %v3281 = vsub.f32 %v3210, %v3263
      %v3282 = vsub.f32 %v3215, %v3266
      %v3283 = vmul.f32 %v3267, 1.442695
      %v3284 = vpow.pop %v3283
      %v3285 = vmul.f32 %v3268, 1.442695
      %v3286 = vpow.pop %v3285
      %v3287 = vmul.f32 %v3269, 1.442695
      %v3288 = vpow.pop %v3287
      %v3289 = vmul.f32 %v3270, 1.442695
      %v3290 = vpow.pop %v3289
      %v3291 = vmul.f32 %v3271, 1.442695
      %v3292 = vpow.pop %v3291
      %v3293 = vmul.f32 %v3272, 1.442695
      %v3294 = vpow.pop %v3293
      %v3295 = vmul.f32 %v3273, 1.442695
      %v3296 = vpow.pop %v3295
      %v3297 = vmul.f32 %v3274, 1.442695
      %v3298 = vpow.pop %v3297
      %v3299 = vmul.f32 %v3275, 1.442695
      %v3300 = vpow.pop %v3299
      %v3301 = vmul.f32 %v3276, 1.442695
      %v3302 = vpow.pop %v3301
      %v3303 = vmul.f32 %v3277, 1.442695
      %v3304 = vpow.pop %v3303
      %v3305 = vmul.f32 %v3278, 1.442695
      %v3306 = vpow.pop %v3305
      %v3307 = vmul.f32 %v3279, 1.442695
      %v3308 = vpow.pop %v3307
      %v3309 = vmul.f32 %v3280, 1.442695
      %v3310 = vpow.pop %v3309
      %v3311 = vmul.f32 %v3281, 1.442695
      %v3312 = vpow.pop %v3311
      %v3313 = vmul.f32 %v3282, 1.442695
      %v3314 = vpow.pop %v3313
      %v3315 = vsel %vm3218, %v3284, 0.0
      %3316 = vadd.xlane.f32.xlu0 %v3315
      %v3317 = vpop.xlane.xlu0 %3316
      %v3318 = vsel %vm3218, %v3286, 0.0
      %3319 = vadd.xlane.f32.xlu0 %v3318
      %v3320 = vpop.xlane.xlu0 %3319
      %v3321 = vsel %vm3218, %v3288, 0.0
      %3322 = vadd.xlane.f32.xlu0 %v3321
      %v3323 = vpop.xlane.xlu0 %3322
      %v3324 = vsel %vm3218, %v3290, 0.0
      %3325 = vadd.xlane.f32.xlu0 %v3324
      %v3326 = vpop.xlane.xlu0 %3325
      %v3327 = vsel %vm3218, %v3292, 0.0
      %3328 = vadd.xlane.f32.xlu0 %v3327
      %v3329 = vpop.xlane.xlu0 %3328
      %v3330 = vsel %vm3218, %v3294, 0.0
      %3331 = vadd.xlane.f32.xlu0 %v3330
      %v3332 = vpop.xlane.xlu0 %3331
      %v3333 = vsel %vm3218, %v3296, 0.0
      %3334 = vadd.xlane.f32.xlu0 %v3333
      %v3335 = vpop.xlane.xlu0 %3334
      %v3336 = vsel %vm3218, %v3298, 0.0
      %3337 = vadd.xlane.f32.xlu0 %v3336
      %v3338 = vpop.xlane.xlu0 %3337
      %v3339 = vsel %vm3218, %v3300, 0.0
      %3340 = vadd.xlane.f32.xlu0 %v3339
      %v3341 = vpop.xlane.xlu0 %3340
      %v3342 = vsel %vm3218, %v3302, 0.0
      %3343 = vadd.xlane.f32.xlu0 %v3342
      %v3344 = vpop.xlane.xlu0 %3343
      %v3345 = vsel %vm3218, %v3304, 0.0
      %3346 = vadd.xlane.f32.xlu0 %v3345
      %v3347 = vpop.xlane.xlu0 %3346
      %v3348 = vsel %vm3218, %v3306, 0.0
      %3349 = vadd.xlane.f32.xlu0 %v3348
      %v3350 = vpop.xlane.xlu0 %3349
      %v3351 = vsel %vm3218, %v3308, 0.0
      %3352 = vadd.xlane.f32.xlu0 %v3351
      %v3353 = vpop.xlane.xlu0 %3352
      %v3354 = vsel %vm3218, %v3310, 0.0
      %3355 = vadd.xlane.f32.xlu0 %v3354
      %v3356 = vpop.xlane.xlu0 %3355
      %v3357 = vsel %vm3218, %v3312, 0.0
      %3358 = vadd.xlane.f32.xlu0 %v3357
      %v3359 = vpop.xlane.xlu0 %3358
      %v3360 = vsel %vm3218, %v3314, 0.0
      %3361 = vadd.xlane.f32.xlu0 %v3360
      %v3362 = vpop.xlane.xlu0 %3361
      %v3363 = vrcp.pop %v3317
      %v3364 = vmul.f32 %v3284, %v3363
      %v3365 = vrcp.pop %v3320
      %v3366 = vmul.f32 %v3286, %v3365
      %v3367 = vrcp.pop %v3323
      %v3368 = vmul.f32 %v3288, %v3367
      %v3369 = vrcp.pop %v3326
      %v3370 = vmul.f32 %v3290, %v3369
      %v3371 = vrcp.pop %v3329
      %v3372 = vmul.f32 %v3292, %v3371
      %v3373 = vrcp.pop %v3332
      %v3374 = vmul.f32 %v3294, %v3373
      %v3375 = vrcp.pop %v3335
      %v3376 = vmul.f32 %v3296, %v3375
      %v3377 = vrcp.pop %v3338
      %v3378 = vmul.f32 %v3298, %v3377
      %v3379 = vrcp.pop %v3341
      %v3380 = vmul.f32 %v3300, %v3379
      %v3381 = vrcp.pop %v3344
      %v3382 = vmul.f32 %v3302, %v3381
      %v3383 = vrcp.pop %v3347
      %v3384 = vmul.f32 %v3304, %v3383
      %v3385 = vrcp.pop %v3350
      %v3386 = vmul.f32 %v3306, %v3385
      %v3387 = vrcp.pop %v3353
      %v3388 = vmul.f32 %v3308, %v3387
      %v3389 = vrcp.pop %v3356
      %v3390 = vmul.f32 %v3310, %v3389
      %v3391 = vrcp.pop %v3359
      %v3392 = vmul.f32 %v3312, %v3391
      %v3393 = vrcp.pop %v3362
      %v3394 = vmul.f32 %v3314, %v3393
      %v3396 = vlaneseq
      %v3397 = vshrl.u32 %v3396, 7
      %v3398 = vsub.s32 0, %v3397
      %v3399 = vrot.slane %v3018, %v3398
      %3400 = vset.pattern.permute.xlu0 0
      %3401 = vperm.xlu0 %3400, %v3399
      %v3402 = vpop.permute.xlu0 %3401
      %v3404 = vmul.f32 %v3364, %v3402
      %v3405 = vmul.f32 %v3366, %v3402
      %v3406 = vmul.f32 %v3368, %v3402
      %v3407 = vmul.f32 %v3370, %v3402
      %v3408 = vmul.f32 %v3372, %v3402
      %v3409 = vmul.f32 %v3374, %v3402
      %v3410 = vmul.f32 %v3376, %v3402
      %v3411 = vmul.f32 %v3378, %v3402
      %v3412 = vmul.f32 %v3380, %v3402
      %v3413 = vmul.f32 %v3382, %v3402
      %v3414 = vmul.f32 %v3384, %v3402
      %v3415 = vmul.f32 %v3386, %v3402
      %v3416 = vmul.f32 %v3388, %v3402
      %v3417 = vmul.f32 %v3390, %v3402
      %v3418 = vmul.f32 %v3392, %v3402
      %v3419 = vmul.f32 %v3394, %v3402
      %v3420 = vadd.f32 %v3404, 0.0
      %v3421 = vadd.f32 %v3405, 0.0
      %v3422 = vadd.f32 %v3406, 0.0
      %v3423 = vadd.f32 %v3407, 0.0
      %v3424 = vadd.f32 %v3408, 0.0
      %v3425 = vadd.f32 %v3409, 0.0
      %v3426 = vadd.f32 %v3410, 0.0
      %v3427 = vadd.f32 %v3411, 0.0
      %v3428 = vadd.f32 %v3412, 0.0
      %v3429 = vadd.f32 %v3413, 0.0
      %v3430 = vadd.f32 %v3414, 0.0
      %v3431 = vadd.f32 %v3415, 0.0
      %v3432 = vadd.f32 %v3416, 0.0
      %v3433 = vadd.f32 %v3417, 0.0
      %v3434 = vadd.f32 %v3418, 0.0
      %v3435 = vadd.f32 %v3419, 0.0
      %3440 = vrot.lane.b32.xlu0 %v3013, 124
      %v3441 = vpop.permute.xlu0 %3440
      %3442 = vrot.lane.b32.xlu0 %v3014, 124
      %v3443 = vpop.permute.xlu0 %3442
      %3444 = vrot.lane.b32.xlu0 %v3015, 124
      %v3445 = vpop.permute.xlu0 %3444
      %3446 = vrot.lane.b32.xlu0 %v3016, 124
      %v3447 = vpop.permute.xlu0 %3446
      %3452 = vrot.lane.b32.xlu0 %v3023, 124
      %v3453 = vpop.permute.xlu0 %3452
      %v3456 = vsel %vm362, %v2069, 0
      %v3459 = vsel %vm362, %v2074, 0
      %v3462 = vsel %vm362, %v2079, 0
      %v3465 = vsel %vm362, %v2084, 0
      %v3468 = vsel %vm362, %v2089, 0
      %v3471 = vsel %vm362, %v2094, 0
      %v3474 = vsel %vm362, %v2099, 0
      %v3477 = vsel %vm362, %v2104, 0
      %v3480 = vsel %vm362, %v2109, 0
      %v3483 = vsel %vm362, %v2114, 0
      %v3486 = vsel %vm362, %v2119, 0
      %v3489 = vsel %vm362, %v2124, 0
      %v3492 = vsel %vm362, %v2129, 0
      %v3495 = vsel %vm362, %v2134, 0
      %v3498 = vsel %vm362, %v2139, 0
      %v3501 = vsel %vm362, %v2144, 0
      %3503 = vmatprep.subr.mxu0 0.0
      %3504 = vmatpush1.msra.mxu0 %v3441
      %3505 = vmatprep.subr.mxu0 0.0
      %3506 = vmatpush1.msra.mxu0 %v3443
      %3507 = vmatprep.subr.mxu0 0.0
      %3508 = vmatpush1.msra.mxu0 %v3445
      %3509 = vmatprep.subr.mxu0 0.0
      %3510 = vmatpush1.msra.mxu0 %v3447
      %3511 = vmatprep.subr.mxu0 0.0
      %3512 = vmatpush1.msra.mxu0 0.0
      %3513 = vmatprep.subr.mxu0 0.0
      %3514 = vmatpush1.msra.mxu0 0.0
      %3515 = vmatprep.subr.mxu0 0.0
      %3516 = vmatpush1.msra.mxu0 0.0
      %3517 = vmatprep.subr.mxu0 0.0
      %3518 = vmatpush1.msra.mxu0 0.0
      %3519 = vmatprep.subr.mxu0 0.0
      %3520 = vmatpush1.msra.mxu0 0.0
      %3521 = vmatprep.subr.mxu0 0.0
      %3522 = vmatpush1.msra.mxu0 0.0
      %3523 = vmatprep.subr.mxu0 0.0
      %3524 = vmatpush1.msra.mxu0 0.0
      %3525 = vmatprep.subr.mxu0 0.0
      %3526 = vmatpush1.msra.mxu0 0.0
      %3527 = vmatprep.subr.mxu0 0.0
      %3528 = vmatpush1.msra.mxu0 0.0
      %3529 = vmatprep.subr.mxu0 0.0
      %3530 = vmatpush1.msra.mxu0 0.0
      %3531 = vmatprep.subr.mxu0 0.0
      %3532 = vmatpush1.msra.mxu0 0.0
      %3533 = vmatprep.subr.mxu0 0.0
      %3534 = vmatpush1.msra.mxu0 0.0
      %3535 = vmatprep.subr.mxu0 0.0
      %3536 = vmatpush1.msra.mxu0 0.0
      %3537 = vmatprep.subr.mxu0 0.0
      %3538 = vmatpush1.msra.mxu0 0.0
      %3539 = vmatprep.subr.mxu0 0.0
      %3540 = vmatpush1.msra.mxu0 0.0
      %3541 = vmatprep.subr.mxu0 0.0
      %3542 = vmatpush1.msra.mxu0 0.0
      %3543 = vmatprep.subr.mxu0 0.0
      %3544 = vmatpush1.msra.mxu0 0.0
      %3545 = vmatprep.subr.mxu0 0.0
      %3546 = vmatpush1.msra.mxu0 0.0
      %3547 = vmatprep.subr.mxu0 0.0
      %3548 = vmatpush1.msra.mxu0 0.0
      %3549 = vmatprep.subr.mxu0 0.0
      %3550 = vmatpush1.msra.mxu0 0.0
      %3551 = vmatprep.subr.mxu0 0.0
      %3552 = vmatpush1.msra.mxu0 0.0
      %3553 = vmatprep.subr.mxu0 0.0
      %3554 = vmatpush1.msra.mxu0 0.0
      %3555 = vmatprep.subr.mxu0 0.0
      %3556 = vmatpush1.msra.mxu0 0.0
      %3557 = vmatprep.subr.mxu0 0.0
      %3558 = vmatpush1.msra.mxu0 0.0
      %3559 = vmatprep.subr.mxu0 0.0
      %3560 = vmatpush1.msra.mxu0 0.0
      %3561 = vmatprep.subr.mxu0 0.0
      %3562 = vmatpush1.msra.mxu0 0.0
      %3563 = vmatprep.subr.mxu0 0.0
      %3564 = vmatpush1.msra.mxu0 0.0
      %3565 = vmatprep.subr.mxu0 0.0
      %3566 = vmatpush1.msra.mxu0 0.0
      %3567 = vmatprep.mubr.f32.mxu0 0.0
      %3568 = vmatmul.mubr.f32.gmra.mrb[0].mxu0 %v3456
      %v3569 = vpop.f32.mrb[0].mxu0
      %v3570 = vadd.f32 %v3453, %v3569
      %v3571 = vpop.f32.mrb[0].mxu0
      %3572 = vmatprep.mubr.f32.mxu0 0.0
      %3573 = vmatmul.mubr.f32.gmra.mrb[0].mxu0 %v3459
      %v3574 = vpop.f32.mrb[0].mxu0
      %v3575 = vadd.f32 %v3453, %v3574
      %v3576 = vpop.f32.mrb[0].mxu0
      %3577 = vmatprep.mubr.f32.mxu0 0.0
      %3578 = vmatmul.mubr.f32.gmra.mrb[0].mxu0 %v3462
      %v3579 = vpop.f32.mrb[0].mxu0
      %v3580 = vadd.f32 %v3453, %v3579
      %v3581 = vpop.f32.mrb[0].mxu0
      %3582 = vmatprep.mubr.f32.mxu0 0.0
      %3583 = vmatmul.mubr.f32.gmra.mrb[0].mxu0 %v3465
      %v3584 = vpop.f32.mrb[0].mxu0
      %v3585 = vadd.f32 %v3453, %v3584
      %v3586 = vpop.f32.mrb[0].mxu0
      %3587 = vmatprep.mubr.f32.mxu0 0.0
      %3588 = vmatmul.mubr.f32.gmra.mrb[0].mxu0 %v3468
      %v3589 = vpop.f32.mrb[0].mxu0
      %v3590 = vadd.f32 %v3453, %v3589
      %v3591 = vpop.f32.mrb[0].mxu0
      %3592 = vmatprep.mubr.f32.mxu0 0.0
      %3593 = vmatmul.mubr.f32.gmra.mrb[0].mxu0 %v3471
      %v3594 = vpop.f32.mrb[0].mxu0
      %v3595 = vadd.f32 %v3453, %v3594
      %v3596 = vpop.f32.mrb[0].mxu0
      %3597 = vmatprep.mubr.f32.mxu0 0.0
      %3598 = vmatmul.mubr.f32.gmra.mrb[0].mxu0 %v3474
      %v3599 = vpop.f32.mrb[0].mxu0
      %v3600 = vadd.f32 %v3453, %v3599
      %v3601 = vpop.f32.mrb[0].mxu0
      %3602 = vmatprep.mubr.f32.mxu0 0.0
      %3603 = vmatmul.mubr.f32.gmra.mrb[0].mxu0 %v3477
      %v3604 = vpop.f32.mrb[0].mxu0
      %v3605 = vadd.f32 %v3453, %v3604
      %v3606 = vpop.f32.mrb[0].mxu0
      %3607 = vmatprep.mubr.f32.mxu0 0.0
      %3608 = vmatmul.mubr.f32.gmra.mrb[0].mxu0 %v3480
      %v3609 = vpop.f32.mrb[0].mxu0
      %v3610 = vadd.f32 %v3453, %v3609
      %v3611 = vpop.f32.mrb[0].mxu0
      %3612 = vmatprep.mubr.f32.mxu0 0.0
      %3613 = vmatmul.mubr.f32.gmra.mrb[0].mxu0 %v3483
      %v3614 = vpop.f32.mrb[0].mxu0
      %v3615 = vadd.f32 %v3453, %v3614
      %v3616 = vpop.f32.mrb[0].mxu0
      %3617 = vmatprep.mubr.f32.mxu0 0.0
      %3618 = vmatmul.mubr.f32.gmra.mrb[0].mxu0 %v3486
      %v3619 = vpop.f32.mrb[0].mxu0
      %v3620 = vadd.f32 %v3453, %v3619
      %v3621 = vpop.f32.mrb[0].mxu0
      %3622 = vmatprep.mubr.f32.mxu0 0.0
      %3623 = vmatmul.mubr.f32.gmra.mrb[0].mxu0 %v3489
      %v3624 = vpop.f32.mrb[0].mxu0
      %v3625 = vadd.f32 %v3453, %v3624
      %v3626 = vpop.f32.mrb[0].mxu0
      %3627 = vmatprep.mubr.f32.mxu0 0.0
      %3628 = vmatmul.mubr.f32.gmra.mrb[0].mxu0 %v3492
      %v3629 = vpop.f32.mrb[0].mxu0
      %v3630 = vadd.f32 %v3453, %v3629
      %v3631 = vpop.f32.mrb[0].mxu0
      %3632 = vmatprep.mubr.f32.mxu0 0.0
      %3633 = vmatmul.mubr.f32.gmra.mrb[0].mxu0 %v3495
      %v3634 = vpop.f32.mrb[0].mxu0
      %v3635 = vadd.f32 %v3453, %v3634
      %v3636 = vpop.f32.mrb[0].mxu0
      %3637 = vmatprep.mubr.f32.mxu0 0.0
      %3638 = vmatmul.mubr.f32.gmra.mrb[0].mxu0 %v3498
      %v3639 = vpop.f32.mrb[0].mxu0
      %v3640 = vadd.f32 %v3453, %v3639
      %v3641 = vpop.f32.mrb[0].mxu0
      %3642 = vmatprep.mubr.f32.mxu0 0.0
      %3643 = vmatmul.mubr.f32.gmra.mrb[0].mxu0 %v3501
      %v3644 = vpop.f32.mrb[0].mxu0
      %v3645 = vadd.f32 %v3453, %v3644
      %v3646 = vpop.f32.mrb[0].mxu0
      %3647 = vdwg.mxu0
      %v3648 = vsel %vm3218, %v3570, -inf
      %3649 = vmax.xlane.f32.xlu0 %v3648
      %v3650 = vpop.xlane.xlu0 %3649
      %v3651 = vsel %vm3218, %v3575, -inf
      %3652 = vmax.xlane.f32.xlu0 %v3651
      %v3653 = vpop.xlane.xlu0 %3652
      %v3654 = vsel %vm3218, %v3580, -inf
      %3655 = vmax.xlane.f32.xlu0 %v3654
      %v3656 = vpop.xlane.xlu0 %3655
      %v3657 = vsel %vm3218, %v3585, -inf
      %3658 = vmax.xlane.f32.xlu0 %v3657
      %v3659 = vpop.xlane.xlu0 %3658
      %v3660 = vsel %vm3218, %v3590, -inf
      %3661 = vmax.xlane.f32.xlu0 %v3660
      %v3662 = vpop.xlane.xlu0 %3661
      %v3663 = vsel %vm3218, %v3595, -inf
      %3664 = vmax.xlane.f32.xlu0 %v3663
      %v3665 = vpop.xlane.xlu0 %3664
      %v3666 = vsel %vm3218, %v3600, -inf
      %3667 = vmax.xlane.f32.xlu0 %v3666
      %v3668 = vpop.xlane.xlu0 %3667
      %v3669 = vsel %vm3218, %v3605, -inf
      %3670 = vmax.xlane.f32.xlu0 %v3669
      %v3671 = vpop.xlane.xlu0 %3670
      %v3672 = vsel %vm3218, %v3610, -inf
      %3673 = vmax.xlane.f32.xlu0 %v3672
      %v3674 = vpop.xlane.xlu0 %3673
      %v3675 = vsel %vm3218, %v3615, -inf
      %3676 = vmax.xlane.f32.xlu0 %v3675
      %v3677 = vpop.xlane.xlu0 %3676
      %v3678 = vsel %vm3218, %v3620, -inf
      %3679 = vmax.xlane.f32.xlu0 %v3678
      %v3680 = vpop.xlane.xlu0 %3679
      %v3681 = vsel %vm3218, %v3625, -inf
      %3682 = vmax.xlane.f32.xlu0 %v3681
      %v3683 = vpop.xlane.xlu0 %3682
      %v3684 = vsel %vm3218, %v3630, -inf
      %3685 = vmax.xlane.f32.xlu0 %v3684
      %v3686 = vpop.xlane.xlu0 %3685
      %v3687 = vsel %vm3218, %v3635, -inf
      %3688 = vmax.xlane.f32.xlu0 %v3687
      %v3689 = vpop.xlane.xlu0 %3688
      %v3690 = vsel %vm3218, %v3640, -inf
      %3691 = vmax.xlane.f32.xlu0 %v3690
      %v3692 = vpop.xlane.xlu0 %3691
      %v3693 = vsel %vm3218, %v3645, -inf
      %3694 = vmax.xlane.f32.xlu0 %v3693
      %v3695 = vpop.xlane.xlu0 %3694
      %v3696 = vsub.f32 %v3570, %v3650
      %v3697 = vsub.f32 %v3575, %v3653
      %v3698 = vsub.f32 %v3580, %v3656
      %v3699 = vsub.f32 %v3585, %v3659
      %v3700 = vsub.f32 %v3590, %v3662
      %v3701 = vsub.f32 %v3595, %v3665
      %v3702 = vsub.f32 %v3600, %v3668
      %v3703 = vsub.f32 %v3605, %v3671
      %v3704 = vsub.f32 %v3610, %v3674
      %v3705 = vsub.f32 %v3615, %v3677
      %v3706 = vsub.f32 %v3620, %v3680
      %v3707 = vsub.f32 %v3625, %v3683
      %v3708 = vsub.f32 %v3630, %v3686
      %v3709 = vsub.f32 %v3635, %v3689
      %v3710 = vsub.f32 %v3640, %v3692
      %v3711 = vsub.f32 %v3645, %v3695
      %v3712 = vmul.f32 %v3696, 1.442695
      %v3713 = vpow.pop %v3712
      %v3714 = vmul.f32 %v3697, 1.442695
      %v3715 = vpow.pop %v3714
      %v3716 = vmul.f32 %v3698, 1.442695
      %v3717 = vpow.pop %v3716
      %v3718 = vmul.f32 %v3699, 1.442695
      %v3719 = vpow.pop %v3718
      %v3720 = vmul.f32 %v3700, 1.442695
      %v3721 = vpow.pop %v3720
      %v3722 = vmul.f32 %v3701, 1.442695
      %v3723 = vpow.pop %v3722
      %v3724 = vmul.f32 %v3702, 1.442695
      %v3725 = vpow.pop %v3724
      %v3726 = vmul.f32 %v3703, 1.442695
      %v3727 = vpow.pop %v3726
      %v3728 = vmul.f32 %v3704, 1.442695
      %v3729 = vpow.pop %v3728
      %v3730 = vmul.f32 %v3705, 1.442695
      %v3731 = vpow.pop %v3730
      %v3732 = vmul.f32 %v3706, 1.442695
      %v3733 = vpow.pop %v3732
      %v3734 = vmul.f32 %v3707, 1.442695
      %v3735 = vpow.pop %v3734
      %v3736 = vmul.f32 %v3708, 1.442695
      %v3737 = vpow.pop %v3736
      %v3738 = vmul.f32 %v3709, 1.442695
      %v3739 = vpow.pop %v3738
      %v3740 = vmul.f32 %v3710, 1.442695
      %v3741 = vpow.pop %v3740
      %v3742 = vmul.f32 %v3711, 1.442695
      %v3743 = vpow.pop %v3742
      %v3744 = vsel %vm3218, %v3713, 0.0
      %3745 = vadd.xlane.f32.xlu0 %v3744
      %v3746 = vpop.xlane.xlu0 %3745
      %v3747 = vsel %vm3218, %v3715, 0.0
      %3748 = vadd.xlane.f32.xlu0 %v3747
      %v3749 = vpop.xlane.xlu0 %3748
      %v3750 = vsel %vm3218, %v3717, 0.0
      %3751 = vadd.xlane.f32.xlu0 %v3750
      %v3752 = vpop.xlane.xlu0 %3751
      %v3753 = vsel %vm3218, %v3719, 0.0
      %3754 = vadd.xlane.f32.xlu0 %v3753
      %v3755 = vpop.xlane.xlu0 %3754
      %v3756 = vsel %vm3218, %v3721, 0.0
      %3757 = vadd.xlane.f32.xlu0 %v3756
      %v3758 = vpop.xlane.xlu0 %3757
      %v3759 = vsel %vm3218, %v3723, 0.0
      %3760 = vadd.xlane.f32.xlu0 %v3759
      %v3761 = vpop.xlane.xlu0 %3760
      %v3762 = vsel %vm3218, %v3725, 0.0
      %3763 = vadd.xlane.f32.xlu0 %v3762
      %v3764 = vpop.xlane.xlu0 %3763
      %v3765 = vsel %vm3218, %v3727, 0.0
      %3766 = vadd.xlane.f32.xlu0 %v3765
      %v3767 = vpop.xlane.xlu0 %3766
      %v3768 = vsel %vm3218, %v3729, 0.0
      %3769 = vadd.xlane.f32.xlu0 %v3768
      %v3770 = vpop.xlane.xlu0 %3769
      %v3771 = vsel %vm3218, %v3731, 0.0
      %3772 = vadd.xlane.f32.xlu0 %v3771
      %v3773 = vpop.xlane.xlu0 %3772
      %v3774 = vsel %vm3218, %v3733, 0.0
      %3775 = vadd.xlane.f32.xlu0 %v3774
      %v3776 = vpop.xlane.xlu0 %3775
      %v3777 = vsel %vm3218, %v3735, 0.0
      %3778 = vadd.xlane.f32.xlu0 %v3777
      %v3779 = vpop.xlane.xlu0 %3778
      %v3780 = vsel %vm3218, %v3737, 0.0
      %3781 = vadd.xlane.f32.xlu0 %v3780
      %v3782 = vpop.xlane.xlu0 %3781
      %v3783 = vsel %vm3218, %v3739, 0.0
      %3784 = vadd.xlane.f32.xlu0 %v3783
      %v3785 = vpop.xlane.xlu0 %3784
      %v3786 = vsel %vm3218, %v3741, 0.0
      %3787 = vadd.xlane.f32.xlu0 %v3786
      %v3788 = vpop.xlane.xlu0 %3787
      %v3789 = vsel %vm3218, %v3743, 0.0
      %3790 = vadd.xlane.f32.xlu0 %v3789
      %v3791 = vpop.xlane.xlu0 %3790
      %v3792 = vrcp.pop %v3746
      %v3793 = vmul.f32 %v3713, %v3792
      %v3794 = vrcp.pop %v3749
      %v3795 = vmul.f32 %v3715, %v3794
      %v3796 = vrcp.pop %v3752
      %v3797 = vmul.f32 %v3717, %v3796
      %v3798 = vrcp.pop %v3755
      %v3799 = vmul.f32 %v3719, %v3798
      %v3800 = vrcp.pop %v3758
      %v3801 = vmul.f32 %v3721, %v3800
      %v3802 = vrcp.pop %v3761
      %v3803 = vmul.f32 %v3723, %v3802
      %v3804 = vrcp.pop %v3764
      %v3805 = vmul.f32 %v3725, %v3804
      %v3806 = vrcp.pop %v3767
      %v3807 = vmul.f32 %v3727, %v3806
      %v3808 = vrcp.pop %v3770
      %v3809 = vmul.f32 %v3729, %v3808
      %v3810 = vrcp.pop %v3773
      %v3811 = vmul.f32 %v3731, %v3810
      %v3812 = vrcp.pop %v3776
      %v3813 = vmul.f32 %v3733, %v3812
      %v3814 = vrcp.pop %v3779
      %v3815 = vmul.f32 %v3735, %v3814
      %v3816 = vrcp.pop %v3782
      %v3817 = vmul.f32 %v3737, %v3816
      %v3818 = vrcp.pop %v3785
      %v3819 = vmul.f32 %v3739, %v3818
      %v3820 = vrcp.pop %v3788
      %v3821 = vmul.f32 %v3741, %v3820
      %v3822 = vrcp.pop %v3791
      %v3823 = vmul.f32 %v3743, %v3822
      %3824 = vset.pattern.permute.xlu0 1
      %3825 = vperm.xlu0 %3824, %v3399
      %v3826 = vpop.permute.xlu0 %3825
      %v3828 = vmul.f32 %v3793, %v3826
      %v3829 = vmul.f32 %v3795, %v3826
      %v3830 = vmul.f32 %v3797, %v3826
      %v3831 = vmul.f32 %v3799, %v3826
      %v3832 = vmul.f32 %v3801, %v3826
      %v3833 = vmul.f32 %v3803, %v3826
      %v3834 = vmul.f32 %v3805, %v3826
      %v3835 = vmul.f32 %v3807, %v3826
      %v3836 = vmul.f32 %v3809, %v3826
      %v3837 = vmul.f32 %v3811, %v3826
      %v3838 = vmul.f32 %v3813, %v3826
      %v3839 = vmul.f32 %v3815, %v3826
      %v3840 = vmul.f32 %v3817, %v3826
      %v3841 = vmul.f32 %v3819, %v3826
      %v3842 = vmul.f32 %v3821, %v3826
      %v3843 = vmul.f32 %v3823, %v3826
      %v3844 = vadd.f32 %v3420, %v3828
      %v3845 = vadd.f32 %v3421, %v3829
      %v3846 = vadd.f32 %v3422, %v3830
      %v3847 = vadd.f32 %v3423, %v3831
      %v3848 = vadd.f32 %v3424, %v3832
      %v3849 = vadd.f32 %v3425, %v3833
      %v3850 = vadd.f32 %v3426, %v3834
      %v3851 = vadd.f32 %v3427, %v3835
      %v3852 = vadd.f32 %v3428, %v3836
      %v3853 = vadd.f32 %v3429, %v3837
      %v3854 = vadd.f32 %v3430, %v3838
      %v3855 = vadd.f32 %v3431, %v3839
      %v3856 = vadd.f32 %v3432, %v3840
      %v3857 = vadd.f32 %v3433, %v3841
      %v3858 = vadd.f32 %v3434, %v3842
      %v3859 = vadd.f32 %v3435, %v3843
      %3860 = vrot.lane.b32.xlu0 %v3013, 120
      %v3861 = vpop.permute.xlu0 %3860
      %3862 = vrot.lane.b32.xlu0 %v3014, 120
      %v3863 = vpop.permute.xlu0 %3862
      %3864 = vrot.lane.b32.xlu0 %v3015, 120
      %v3865 = vpop.permute.xlu0 %3864
      %3866 = vrot.lane.b32.xlu0 %v3016, 120
      %v3867 = vpop.permute.xlu0 %3866
      %3872 = vrot.lane.b32.xlu0 %v3023, 120
      %v3873 = vpop.permute.xlu0 %3872
      %v3876 = vsel %vm362, %v2502, 0
      %v3879 = vsel %vm362, %v2507, 0
      %v3882 = vsel %vm362, %v2512, 0
      %v3885 = vsel %vm362, %v2517, 0
      %v3888 = vsel %vm362, %v2522, 0
      %v3891 = vsel %vm362, %v2527, 0
      %v3894 = vsel %vm362, %v2532, 0
      %v3897 = vsel %vm362, %v2537, 0
      %v3900 = vsel %vm362, %v2542, 0
      %v3903 = vsel %vm362, %v2547, 0
      %v3906 = vsel %vm362, %v2552, 0
      %v3909 = vsel %vm362, %v2557, 0
      %v3912 = vsel %vm362, %v2562, 0
      %v3915 = vsel %vm362, %v2567, 0
      %v3918 = vsel %vm362, %v2572, 0
      %v3921 = vsel %vm362, %v2577, 0
      %3923 = vmatprep.subr.mxu0 0.0
      %3924 = vmatpush1.msra.mxu0 %v3861
      %3925 = vmatprep.subr.mxu0 0.0
      %3926 = vmatpush1.msra.mxu0 %v3863
      %3927 = vmatprep.subr.mxu0 0.0
      %3928 = vmatpush1.msra.mxu0 %v3865
      %3929 = vmatprep.subr.mxu0 0.0
      %3930 = vmatpush1.msra.mxu0 %v3867
      %3931 = vmatprep.subr.mxu0 0.0
      %3932 = vmatpush1.msra.mxu0 0.0
      %3933 = vmatprep.subr.mxu0 0.0
      %3934 = vmatpush1.msra.mxu0 0.0
      %3935 = vmatprep.subr.mxu0 0.0
      %3936 = vmatpush1.msra.mxu0 0.0
      %3937 = vmatprep.subr.mxu0 0.0
      %3938 = vmatpush1.msra.mxu0 0.0
      %3939 = vmatprep.subr.mxu0 0.0
      %3940 = vmatpush1.msra.mxu0 0.0
      %3941 = vmatprep.subr.mxu0 0.0
      %3942 = vmatpush1.msra.mxu0 0.0
      %3943 = vmatprep.subr.mxu0 0.0
      %3944 = vmatpush1.msra.mxu0 0.0
      %3945 = vmatprep.subr.mxu0 0.0
      %3946 = vmatpush1.msra.mxu0 0.0
      %3947 = vmatprep.subr.mxu0 0.0
      %3948 = vmatpush1.msra.mxu0 0.0
      %3949 = vmatprep.subr.mxu0 0.0
      %3950 = vmatpush1.msra.mxu0 0.0
      %3951 = vmatprep.subr.mxu0 0.0
      %3952 = vmatpush1.msra.mxu0 0.0
      %3953 = vmatprep.subr.mxu0 0.0
      %3954 = vmatpush1.msra.mxu0 0.0
      %3955 = vmatprep.subr.mxu0 0.0
      %3956 = vmatpush1.msra.mxu0 0.0
      %3957 = vmatprep.subr.mxu0 0.0
      %3958 = vmatpush1.msra.mxu0 0.0
      %3959 = vmatprep.subr.mxu0 0.0
      %3960 = vmatpush1.msra.mxu0 0.0
      %3961 = vmatprep.subr.mxu0 0.0
      %3962 = vmatpush1.msra.mxu0 0.0
      %3963 = vmatprep.subr.mxu0 0.0
      %3964 = vmatpush1.msra.mxu0 0.0
      %3965 = vmatprep.subr.mxu0 0.0
      %3966 = vmatpush1.msra.mxu0 0.0
      %3967 = vmatprep.subr.mxu0 0.0
      %3968 = vmatpush1.msra.mxu0 0.0
      %3969 = vmatprep.subr.mxu0 0.0
      %3970 = vmatpush1.msra.mxu0 0.0
      %3971 = vmatprep.subr.mxu0 0.0
      %3972 = vmatpush1.msra.mxu0 0.0
      %3973 = vmatprep.subr.mxu0 0.0
      %3974 = vmatpush1.msra.mxu0 0.0
      %3975 = vmatprep.subr.mxu0 0.0
      %3976 = vmatpush1.msra.mxu0 0.0
      %3977 = vmatprep.subr.mxu0 0.0
      %3978 = vmatpush1.msra.mxu0 0.0
      %3979 = vmatprep.subr.mxu0 0.0
      %3980 = vmatpush1.msra.mxu0 0.0
      %3981 = vmatprep.subr.mxu0 0.0
      %3982 = vmatpush1.msra.mxu0 0.0
      %3983 = vmatprep.subr.mxu0 0.0
      %3984 = vmatpush1.msra.mxu0 0.0
      %3985 = vmatprep.subr.mxu0 0.0
      %3986 = vmatpush1.msra.mxu0 0.0
      %3987 = vmatprep.mubr.f32.mxu0 0.0
      %3988 = vmatmul.mubr.f32.gmra.mrb[0].mxu0 %v3876
      %v3989 = vpop.f32.mrb[0].mxu0
      %v3990 = vadd.f32 %v3873, %v3989
      %v3991 = vpop.f32.mrb[0].mxu0
      %3992 = vmatprep.mubr.f32.mxu0 0.0
      %3993 = vmatmul.mubr.f32.gmra.mrb[0].mxu0 %v3879
      %v3994 = vpop.f32.mrb[0].mxu0
      %v3995 = vadd.f32 %v3873, %v3994
      %v3996 = vpop.f32.mrb[0].mxu0
      %3997 = vmatprep.mubr.f32.mxu0 0.0
      %3998 = vmatmul.mubr.f32.gmra.mrb[0].mxu0 %v3882
      %v3999 = vpop.f32.mrb[0].mxu0
      %v4000 = vadd.f32 %v3873, %v3999
      %v4001 = vpop.f32.mrb[0].mxu0
      %4002 = vmatprep.mubr.f32.mxu0 0.0
      %4003 = vmatmul.mubr.f32.gmra.mrb[0].mxu0 %v3885
      %v4004 = vpop.f32.mrb[0].mxu0
      %v4005 = vadd.f32 %v3873, %v4004
      %v4006 = vpop.f32.mrb[0].mxu0
      %4007 = vmatprep.mubr.f32.mxu0 0.0
      %4008 = vmatmul.mubr.f32.gmra.mrb[0].mxu0 %v3888
      %v4009 = vpop.f32.mrb[0].mxu0
      %v4010 = vadd.f32 %v3873, %v4009
      %v4011 = vpop.f32.mrb[0].mxu0
      %4012 = vmatprep.mubr.f32.mxu0 0.0
      %4013 = vmatmul.mubr.f32.gmra.mrb[0].mxu0 %v3891
      %v4014 = vpop.f32.mrb[0].mxu0
      %v4015 = vadd.f32 %v3873, %v4014
      %v4016 = vpop.f32.mrb[0].mxu0
      %4017 = vmatprep.mubr.f32.mxu0 0.0
      %4018 = vmatmul.mubr.f32.gmra.mrb[0].mxu0 %v3894
      %v4019 = vpop.f32.mrb[0].mxu0
      %v4020 = vadd.f32 %v3873, %v4019
      %v4021 = vpop.f32.mrb[0].mxu0
      %4022 = vmatprep.mubr.f32.mxu0 0.0
      %4023 = vmatmul.mubr.f32.gmra.mrb[0].mxu0 %v3897
      %v4024 = vpop.f32.mrb[0].mxu0
      %v4025 = vadd.f32 %v3873, %v4024
      %v4026 = vpop.f32.mrb[0].mxu0
      %4027 = vmatprep.mubr.f32.mxu0 0.0
      %4028 = vmatmul.mubr.f32.gmra.mrb[0].mxu0 %v3900
      %v4029 = vpop.f32.mrb[0].mxu0
      %v4030 = vadd.f32 %v3873, %v4029
      %v4031 = vpop.f32.mrb[0].mxu0
      %4032 = vmatprep.mubr.f32.mxu0 0.0
      %4033 = vmatmul.mubr.f32.gmra.mrb[0].mxu0 %v3903
      %v4034 = vpop.f32.mrb[0].mxu0
      %v4035 = vadd.f32 %v3873, %v4034
      %v4036 = vpop.f32.mrb[0].mxu0
      %4037 = vmatprep.mubr.f32.mxu0 0.0
      %4038 = vmatmul.mubr.f32.gmra.mrb[0].mxu0 %v3906
      %v4039 = vpop.f32.mrb[0].mxu0
      %v4040 = vadd.f32 %v3873, %v4039
      %v4041 = vpop.f32.mrb[0].mxu0
      %4042 = vmatprep.mubr.f32.mxu0 0.0
      %4043 = vmatmul.mubr.f32.gmra.mrb[0].mxu0 %v3909
      %v4044 = vpop.f32.mrb[0].mxu0
      %v4045 = vadd.f32 %v3873, %v4044
      %v4046 = vpop.f32.mrb[0].mxu0
      %4047 = vmatprep.mubr.f32.mxu0 0.0
      %4048 = vmatmul.mubr.f32.gmra.mrb[0].mxu0 %v3912
      %v4049 = vpop.f32.mrb[0].mxu0
      %v4050 = vadd.f32 %v3873, %v4049
      %v4051 = vpop.f32.mrb[0].mxu0
      %4052 = vmatprep.mubr.f32.mxu0 0.0
      %4053 = vmatmul.mubr.f32.gmra.mrb[0].mxu0 %v3915
      %v4054 = vpop.f32.mrb[0].mxu0
      %v4055 = vadd.f32 %v3873, %v4054
      %v4056 = vpop.f32.mrb[0].mxu0
      %4057 = vmatprep.mubr.f32.mxu0 0.0
      %4058 = vmatmul.mubr.f32.gmra.mrb[0].mxu0 %v3918
      %v4059 = vpop.f32.mrb[0].mxu0
      %v4060 = vadd.f32 %v3873, %v4059
      %v4061 = vpop.f32.mrb[0].mxu0
      %4062 = vmatprep.mubr.f32.mxu0 0.0
      %4063 = vmatmul.mubr.f32.gmra.mrb[0].mxu0 %v3921
      %v4064 = vpop.f32.mrb[0].mxu0
      %v4065 = vadd.f32 %v3873, %v4064
      %v4066 = vpop.f32.mrb[0].mxu0
      %4067 = vdwg.mxu0
      %v4068 = vsel %vm3218, %v3990, -inf
      %4069 = vmax.xlane.f32.xlu0 %v4068
      %v4070 = vpop.xlane.xlu0 %4069
      %v4071 = vsel %vm3218, %v3995, -inf
      %4072 = vmax.xlane.f32.xlu0 %v4071
      %v4073 = vpop.xlane.xlu0 %4072
      %v4074 = vsel %vm3218, %v4000, -inf
      %4075 = vmax.xlane.f32.xlu0 %v4074
      %v4076 = vpop.xlane.xlu0 %4075
      %v4077 = vsel %vm3218, %v4005, -inf
      %4078 = vmax.xlane.f32.xlu0 %v4077
      %v4079 = vpop.xlane.xlu0 %4078
      %v4080 = vsel %vm3218, %v4010, -inf
      %4081 = vmax.xlane.f32.xlu0 %v4080
      %v4082 = vpop.xlane.xlu0 %4081
      %v4083 = vsel %vm3218, %v4015, -inf
      %4084 = vmax.xlane.f32.xlu0 %v4083
      %v4085 = vpop.xlane.xlu0 %4084
      %v4086 = vsel %vm3218, %v4020, -inf
      %4087 = vmax.xlane.f32.xlu0 %v4086
      %v4088 = vpop.xlane.xlu0 %4087
      %v4089 = vsel %vm3218, %v4025, -inf
      %4090 = vmax.xlane.f32.xlu0 %v4089
      %v4091 = vpop.xlane.xlu0 %4090
      %v4092 = vsel %vm3218, %v4030, -inf
      %4093 = vmax.xlane.f32.xlu0 %v4092
      %v4094 = vpop.xlane.xlu0 %4093
      %v4095 = vsel %vm3218, %v4035, -inf
      %4096 = vmax.xlane.f32.xlu0 %v4095
      %v4097 = vpop.xlane.xlu0 %4096
      %v4098 = vsel %vm3218, %v4040, -inf
      %4099 = vmax.xlane.f32.xlu0 %v4098
      %v4100 = vpop.xlane.xlu0 %4099
      %v4101 = vsel %vm3218, %v4045, -inf
      %4102 = vmax.xlane.f32.xlu0 %v4101
      %v4103 = vpop.xlane.xlu0 %4102
      %v4104 = vsel %vm3218, %v4050, -inf
      %4105 = vmax.xlane.f32.xlu0 %v4104
      %v4106 = vpop.xlane.xlu0 %4105
      %v4107 = vsel %vm3218, %v4055, -inf
      %4108 = vmax.xlane.f32.xlu0 %v4107
      %v4109 = vpop.xlane.xlu0 %4108
      %v4110 = vsel %vm3218, %v4060, -inf
      %4111 = vmax.xlane.f32.xlu0 %v4110
      %v4112 = vpop.xlane.xlu0 %4111
      %v4113 = vsel %vm3218, %v4065, -inf
      %4114 = vmax.xlane.f32.xlu0 %v4113
      %v4115 = vpop.xlane.xlu0 %4114
      %v4116 = vsub.f32 %v3990, %v4070
      %v4117 = vsub.f32 %v3995, %v4073
      %v4118 = vsub.f32 %v4000, %v4076
      %v4119 = vsub.f32 %v4005, %v4079
      %v4120 = vsub.f32 %v4010, %v4082
      %v4121 = vsub.f32 %v4015, %v4085
      %v4122 = vsub.f32 %v4020, %v4088
      %v4123 = vsub.f32 %v4025, %v4091
      %v4124 = vsub.f32 %v4030, %v4094
      %v4125 = vsub.f32 %v4035, %v4097
      %v4126 = vsub.f32 %v4040, %v4100
      %v4127 = vsub.f32 %v4045, %v4103
      %v4128 = vsub.f32 %v4050, %v4106
      %v4129 = vsub.f32 %v4055, %v4109
      %v4130 = vsub.f32 %v4060, %v4112
      %v4131 = vsub.f32 %v4065, %v4115
      %v4132 = vmul.f32 %v4116, 1.442695
      %v4133 = vpow.pop %v4132
      %v4134 = vmul.f32 %v4117, 1.442695
      %v4135 = vpow.pop %v4134
      %v4136 = vmul.f32 %v4118, 1.442695
      %v4137 = vpow.pop %v4136
      %v4138 = vmul.f32 %v4119, 1.442695
      %v4139 = vpow.pop %v4138
      %v4140 = vmul.f32 %v4120, 1.442695
      %v4141 = vpow.pop %v4140
      %v4142 = vmul.f32 %v4121, 1.442695
      %v4143 = vpow.pop %v4142
      %v4144 = vmul.f32 %v4122, 1.442695
      %v4145 = vpow.pop %v4144
      %v4146 = vmul.f32 %v4123, 1.442695
      %v4147 = vpow.pop %v4146
      %v4148 = vmul.f32 %v4124, 1.442695
      %v4149 = vpow.pop %v4148
      %v4150 = vmul.f32 %v4125, 1.442695
      %v4151 = vpow.pop %v4150
      %v4152 = vmul.f32 %v4126, 1.442695
      %v4153 = vpow.pop %v4152
      %v4154 = vmul.f32 %v4127, 1.442695
      %v4155 = vpow.pop %v4154
      %v4156 = vmul.f32 %v4128, 1.442695
      %v4157 = vpow.pop %v4156
      %v4158 = vmul.f32 %v4129, 1.442695
      %v4159 = vpow.pop %v4158
      %v4160 = vmul.f32 %v4130, 1.442695
      %v4161 = vpow.pop %v4160
      %v4162 = vmul.f32 %v4131, 1.442695
      %v4163 = vpow.pop %v4162
      %v4164 = vsel %vm3218, %v4133, 0.0
      %4165 = vadd.xlane.f32.xlu0 %v4164
      %v4166 = vpop.xlane.xlu0 %4165
      %v4167 = vsel %vm3218, %v4135, 0.0
      %4168 = vadd.xlane.f32.xlu0 %v4167
      %v4169 = vpop.xlane.xlu0 %4168
      %v4170 = vsel %vm3218, %v4137, 0.0
      %4171 = vadd.xlane.f32.xlu0 %v4170
      %v4172 = vpop.xlane.xlu0 %4171
      %v4173 = vsel %vm3218, %v4139, 0.0
      %4174 = vadd.xlane.f32.xlu0 %v4173
      %v4175 = vpop.xlane.xlu0 %4174
      %v4176 = vsel %vm3218, %v4141, 0.0
      %4177 = vadd.xlane.f32.xlu0 %v4176
      %v4178 = vpop.xlane.xlu0 %4177
      %v4179 = vsel %vm3218, %v4143, 0.0
      %4180 = vadd.xlane.f32.xlu0 %v4179
      %v4181 = vpop.xlane.xlu0 %4180
      %v4182 = vsel %vm3218, %v4145, 0.0
      %4183 = vadd.xlane.f32.xlu0 %v4182
      %v4184 = vpop.xlane.xlu0 %4183
      %v4185 = vsel %vm3218, %v4147, 0.0
      %4186 = vadd.xlane.f32.xlu0 %v4185
      %v4187 = vpop.xlane.xlu0 %4186
      %v4188 = vsel %vm3218, %v4149, 0.0
      %4189 = vadd.xlane.f32.xlu0 %v4188
      %v4190 = vpop.xlane.xlu0 %4189
      %v4191 = vsel %vm3218, %v4151, 0.0
      %4192 = vadd.xlane.f32.xlu0 %v4191
      %v4193 = vpop.xlane.xlu0 %4192
      %v4194 = vsel %vm3218, %v4153, 0.0
      %4195 = vadd.xlane.f32.xlu0 %v4194
      %v4196 = vpop.xlane.xlu0 %4195
      %v4197 = vsel %vm3218, %v4155, 0.0
      %4198 = vadd.xlane.f32.xlu0 %v4197
      %v4199 = vpop.xlane.xlu0 %4198
      %v4200 = vsel %vm3218, %v4157, 0.0
      %4201 = vadd.xlane.f32.xlu0 %v4200
      %v4202 = vpop.xlane.xlu0 %4201
      %v4203 = vsel %vm3218, %v4159, 0.0
      %4204 = vadd.xlane.f32.xlu0 %v4203
      %v4205 = vpop.xlane.xlu0 %4204
      %v4206 = vsel %vm3218, %v4161, 0.0
      %4207 = vadd.xlane.f32.xlu0 %v4206
      %v4208 = vpop.xlane.xlu0 %4207
      %v4209 = vsel %vm3218, %v4163, 0.0
      %4210 = vadd.xlane.f32.xlu0 %v4209
      %v4211 = vpop.xlane.xlu0 %4210
      %v4212 = vrcp.pop %v4166
      %v4213 = vmul.f32 %v4133, %v4212
      %v4214 = vrcp.pop %v4169
      %v4215 = vmul.f32 %v4135, %v4214
      %v4216 = vrcp.pop %v4172
      %v4217 = vmul.f32 %v4137, %v4216
      %v4218 = vrcp.pop %v4175
      %v4219 = vmul.f32 %v4139, %v4218
      %v4220 = vrcp.pop %v4178
      %v4221 = vmul.f32 %v4141, %v4220
      %v4222 = vrcp.pop %v4181
      %v4223 = vmul.f32 %v4143, %v4222
      %v4224 = vrcp.pop %v4184
      %v4225 = vmul.f32 %v4145, %v4224
      %v4226 = vrcp.pop %v4187
      %v4227 = vmul.f32 %v4147, %v4226
      %v4228 = vrcp.pop %v4190
      %v4229 = vmul.f32 %v4149, %v4228
      %v4230 = vrcp.pop %v4193
      %v4231 = vmul.f32 %v4151, %v4230
      %v4232 = vrcp.pop %v4196
      %v4233 = vmul.f32 %v4153, %v4232
      %v4234 = vrcp.pop %v4199
      %v4235 = vmul.f32 %v4155, %v4234
      %v4236 = vrcp.pop %v4202
      %v4237 = vmul.f32 %v4157, %v4236
      %v4238 = vrcp.pop %v4205
      %v4239 = vmul.f32 %v4159, %v4238
      %v4240 = vrcp.pop %v4208
      %v4241 = vmul.f32 %v4161, %v4240
      %v4242 = vrcp.pop %v4211
      %v4243 = vmul.f32 %v4163, %v4242
      %4244 = vset.pattern.permute.xlu0 2
      %4245 = vperm.xlu0 %4244, %v3399
      %v4246 = vpop.permute.xlu0 %4245
      %v4248 = vmul.f32 %v4213, %v4246
      %v4249 = vmul.f32 %v4215, %v4246
      %v4250 = vmul.f32 %v4217, %v4246
      %v4251 = vmul.f32 %v4219, %v4246
      %v4252 = vmul.f32 %v4221, %v4246
      %v4253 = vmul.f32 %v4223, %v4246
      %v4254 = vmul.f32 %v4225, %v4246
      %v4255 = vmul.f32 %v4227, %v4246
      %v4256 = vmul.f32 %v4229, %v4246
      %v4257 = vmul.f32 %v4231, %v4246
      %v4258 = vmul.f32 %v4233, %v4246
      %v4259 = vmul.f32 %v4235, %v4246
      %v4260 = vmul.f32 %v4237, %v4246
      %v4261 = vmul.f32 %v4239, %v4246
      %v4262 = vmul.f32 %v4241, %v4246
      %v4263 = vmul.f32 %v4243, %v4246
      %v4264 = vadd.f32 %v3844, %v4248
      %v4265 = vadd.f32 %v3845, %v4249
      %v4266 = vadd.f32 %v3846, %v4250
      %v4267 = vadd.f32 %v3847, %v4251
      %v4268 = vadd.f32 %v3848, %v4252
      %v4269 = vadd.f32 %v3849, %v4253
      %v4270 = vadd.f32 %v3850, %v4254
      %v4271 = vadd.f32 %v3851, %v4255
      %v4272 = vadd.f32 %v3852, %v4256
      %v4273 = vadd.f32 %v3853, %v4257
      %v4274 = vadd.f32 %v3854, %v4258
      %v4275 = vadd.f32 %v3855, %v4259
      %v4276 = vadd.f32 %v3856, %v4260
      %v4277 = vadd.f32 %v3857, %v4261
      %v4278 = vadd.f32 %v3858, %v4262
      %v4279 = vadd.f32 %v3859, %v4263
      %4280 = vrot.lane.b32.xlu0 %v3013, 116
      %v4281 = vpop.permute.xlu0 %4280
      %4282 = vrot.lane.b32.xlu0 %v3014, 116
      %v4283 = vpop.permute.xlu0 %4282
      %4284 = vrot.lane.b32.xlu0 %v3015, 116
      %v4285 = vpop.permute.xlu0 %4284
      %4286 = vrot.lane.b32.xlu0 %v3016, 116
      %v4287 = vpop.permute.xlu0 %4286
      %4292 = vrot.lane.b32.xlu0 %v3023, 116
      %v4293 = vpop.permute.xlu0 %4292
      %v4296 = vsel %vm362, %v2935, 0
      %v4299 = vsel %vm362, %v2940, 0
      %v4302 = vsel %vm362, %v2945, 0
      %v4305 = vsel %vm362, %v2950, 0
      %v4308 = vsel %vm362, %v2955, 0
      %v4311 = vsel %vm362, %v2960, 0
      %v4314 = vsel %vm362, %v2965, 0
      %v4317 = vsel %vm362, %v2970, 0
      %v4320 = vsel %vm362, %v2975, 0
      %v4323 = vsel %vm362, %v2980, 0
      %v4326 = vsel %vm362, %v2985, 0
      %v4329 = vsel %vm362, %v2990, 0
      %v4332 = vsel %vm362, %v2995, 0
      %v4335 = vsel %vm362, %v3000, 0
      %v4338 = vsel %vm362, %v3005, 0
      %v4341 = vsel %vm362, %v3010, 0
      %4343 = vmatprep.subr.mxu0 0.0
      %4344 = vmatpush1.msra.mxu0 %v4281
      %4345 = vmatprep.subr.mxu0 0.0
      %4346 = vmatpush1.msra.mxu0 %v4283
      %4347 = vmatprep.subr.mxu0 0.0
      %4348 = vmatpush1.msra.mxu0 %v4285
      %4349 = vmatprep.subr.mxu0 0.0
      %4350 = vmatpush1.msra.mxu0 %v4287
      %4351 = vmatprep.subr.mxu0 0.0
      %4352 = vmatpush1.msra.mxu0 0.0
      %4353 = vmatprep.subr.mxu0 0.0
      %4354 = vmatpush1.msra.mxu0 0.0
      %4355 = vmatprep.subr.mxu0 0.0
      %4356 = vmatpush1.msra.mxu0 0.0
      %4357 = vmatprep.subr.mxu0 0.0
      %4358 = vmatpush1.msra.mxu0 0.0
      %4359 = vmatprep.subr.mxu0 0.0
      %4360 = vmatpush1.msra.mxu0 0.0
      %4361 = vmatprep.subr.mxu0 0.0
      %4362 = vmatpush1.msra.mxu0 0.0
      %4363 = vmatprep.subr.mxu0 0.0
      %4364 = vmatpush1.msra.mxu0 0.0
      %4365 = vmatprep.subr.mxu0 0.0
      %4366 = vmatpush1.msra.mxu0 0.0
      %4367 = vmatprep.subr.mxu0 0.0
      %4368 = vmatpush1.msra.mxu0 0.0
      %4369 = vmatprep.subr.mxu0 0.0
      %4370 = vmatpush1.msra.mxu0 0.0
      %4371 = vmatprep.subr.mxu0 0.0
      %4372 = vmatpush1.msra.mxu0 0.0
      %4373 = vmatprep.subr.mxu0 0.0
      %4374 = vmatpush1.msra.mxu0 0.0
      %4375 = vmatprep.subr.mxu0 0.0
      %4376 = vmatpush1.msra.mxu0 0.0
      %4377 = vmatprep.subr.mxu0 0.0
      %4378 = vmatpush1.msra.mxu0 0.0
      %4379 = vmatprep.subr.mxu0 0.0
      %4380 = vmatpush1.msra.mxu0 0.0
      %4381 = vmatprep.subr.mxu0 0.0
      %4382 = vmatpush1.msra.mxu0 0.0
      %4383 = vmatprep.subr.mxu0 0.0
      %4384 = vmatpush1.msra.mxu0 0.0
      %4385 = vmatprep.subr.mxu0 0.0
      %4386 = vmatpush1.msra.mxu0 0.0
      %4387 = vmatprep.subr.mxu0 0.0
      %4388 = vmatpush1.msra.mxu0 0.0
      %4389 = vmatprep.subr.mxu0 0.0
      %4390 = vmatpush1.msra.mxu0 0.0
      %4391 = vmatprep.subr.mxu0 0.0
      %4392 = vmatpush1.msra.mxu0 0.0
      %4393 = vmatprep.subr.mxu0 0.0
      %4394 = vmatpush1.msra.mxu0 0.0
      %4395 = vmatprep.subr.mxu0 0.0
      %4396 = vmatpush1.msra.mxu0 0.0
      %4397 = vmatprep.subr.mxu0 0.0
      %4398 = vmatpush1.msra.mxu0 0.0
      %4399 = vmatprep.subr.mxu0 0.0
      %4400 = vmatpush1.msra.mxu0 0.0
      %4401 = vmatprep.subr.mxu0 0.0
      %4402 = vmatpush1.msra.mxu0 0.0
      %4403 = vmatprep.subr.mxu0 0.0
      %4404 = vmatpush1.msra.mxu0 0.0
      %4405 = vmatprep.subr.mxu0 0.0
      %4406 = vmatpush1.msra.mxu0 0.0
      %4407 = vmatprep.mubr.f32.mxu0 0.0
      %4408 = vmatmul.mubr.f32.gmra.mrb[0].mxu0 %v4296
      %v4409 = vpop.f32.mrb[0].mxu0
      %v4410 = vadd.f32 %v4293, %v4409
      %v4411 = vpop.f32.mrb[0].mxu0
      %4412 = vmatprep.mubr.f32.mxu0 0.0
      %4413 = vmatmul.mubr.f32.gmra.mrb[0].mxu0 %v4299
      %v4414 = vpop.f32.mrb[0].mxu0
      %v4415 = vadd.f32 %v4293, %v4414
      %v4416 = vpop.f32.mrb[0].mxu0
      %4417 = vmatprep.mubr.f32.mxu0 0.0
      %4418 = vmatmul.mubr.f32.gmra.mrb[0].mxu0 %v4302
      %v4419 = vpop.f32.mrb[0].mxu0
      %v4420 = vadd.f32 %v4293, %v4419
      %v4421 = vpop.f32.mrb[0].mxu0
      %4422 = vmatprep.mubr.f32.mxu0 0.0
      %4423 = vmatmul.mubr.f32.gmra.mrb[0].mxu0 %v4305
      %v4424 = vpop.f32.mrb[0].mxu0
      %v4425 = vadd.f32 %v4293, %v4424
      %v4426 = vpop.f32.mrb[0].mxu0
      %4427 = vmatprep.mubr.f32.mxu0 0.0
      %4428 = vmatmul.mubr.f32.gmra.mrb[0].mxu0 %v4308
      %v4429 = vpop.f32.mrb[0].mxu0
      %v4430 = vadd.f32 %v4293, %v4429
      %v4431 = vpop.f32.mrb[0].mxu0
      %4432 = vmatprep.mubr.f32.mxu0 0.0
      %4433 = vmatmul.mubr.f32.gmra.mrb[0].mxu0 %v4311
      %v4434 = vpop.f32.mrb[0].mxu0
      %v4435 = vadd.f32 %v4293, %v4434
      %v4436 = vpop.f32.mrb[0].mxu0
      %4437 = vmatprep.mubr.f32.mxu0 0.0
      %4438 = vmatmul.mubr.f32.gmra.mrb[0].mxu0 %v4314
      %v4439 = vpop.f32.mrb[0].mxu0
      %v4440 = vadd.f32 %v4293, %v4439
      %v4441 = vpop.f32.mrb[0].mxu0
      %4442 = vmatprep.mubr.f32.mxu0 0.0
      %4443 = vmatmul.mubr.f32.gmra.mrb[0].mxu0 %v4317
      %v4444 = vpop.f32.mrb[0].mxu0
      %v4445 = vadd.f32 %v4293, %v4444
      %v4446 = vpop.f32.mrb[0].mxu0
      %4447 = vmatprep.mubr.f32.mxu0 0.0
      %4448 = vmatmul.mubr.f32.gmra.mrb[0].mxu0 %v4320
      %v4449 = vpop.f32.mrb[0].mxu0
      %v4450 = vadd.f32 %v4293, %v4449
      %v4451 = vpop.f32.mrb[0].mxu0
      %4452 = vmatprep.mubr.f32.mxu0 0.0
      %4453 = vmatmul.mubr.f32.gmra.mrb[0].mxu0 %v4323
      %v4454 = vpop.f32.mrb[0].mxu0
      %v4455 = vadd.f32 %v4293, %v4454
      %v4456 = vpop.f32.mrb[0].mxu0
      %4457 = vmatprep.mubr.f32.mxu0 0.0
      %4458 = vmatmul.mubr.f32.gmra.mrb[0].mxu0 %v4326
      %v4459 = vpop.f32.mrb[0].mxu0
      %v4460 = vadd.f32 %v4293, %v4459
      %v4461 = vpop.f32.mrb[0].mxu0
      %4462 = vmatprep.mubr.f32.mxu0 0.0
      %4463 = vmatmul.mubr.f32.gmra.mrb[0].mxu0 %v4329
      %v4464 = vpop.f32.mrb[0].mxu0
      %v4465 = vadd.f32 %v4293, %v4464
      %v4466 = vpop.f32.mrb[0].mxu0
      %4467 = vmatprep.mubr.f32.mxu0 0.0
      %4468 = vmatmul.mubr.f32.gmra.mrb[0].mxu0 %v4332
      %v4469 = vpop.f32.mrb[0].mxu0
      %v4470 = vadd.f32 %v4293, %v4469
      %v4471 = vpop.f32.mrb[0].mxu0
      %4472 = vmatprep.mubr.f32.mxu0 0.0
      %4473 = vmatmul.mubr.f32.gmra.mrb[0].mxu0 %v4335
      %v4474 = vpop.f32.mrb[0].mxu0
      %v4475 = vadd.f32 %v4293, %v4474
      %v4476 = vpop.f32.mrb[0].mxu0
      %4477 = vmatprep.mubr.f32.mxu0 0.0
      %4478 = vmatmul.mubr.f32.gmra.mrb[0].mxu0 %v4338
      %v4479 = vpop.f32.mrb[0].mxu0
      %v4480 = vadd.f32 %v4293, %v4479
      %v4481 = vpop.f32.mrb[0].mxu0
      %4482 = vmatprep.mubr.f32.mxu0 0.0
      %4483 = vmatmul.mubr.f32.gmra.mrb[0].mxu0 %v4341
      %v4484 = vpop.f32.mrb[0].mxu0
      %v4485 = vadd.f32 %v4293, %v4484
      %v4486 = vpop.f32.mrb[0].mxu0
      %4487 = vdwg.mxu0
      %v4488 = vsel %vm3218, %v4410, -inf
      %4489 = vmax.xlane.f32.xlu0 %v4488
      %v4490 = vpop.xlane.xlu0 %4489
      %v4491 = vsel %vm3218, %v4415, -inf
      %4492 = vmax.xlane.f32.xlu0 %v4491
      %v4493 = vpop.xlane.xlu0 %4492
      %v4494 = vsel %vm3218, %v4420, -inf
      %4495 = vmax.xlane.f32.xlu0 %v4494
      %v4496 = vpop.xlane.xlu0 %4495
      %v4497 = vsel %vm3218, %v4425, -inf
      %4498 = vmax.xlane.f32.xlu0 %v4497
      %v4499 = vpop.xlane.xlu0 %4498
      %v4500 = vsel %vm3218, %v4430, -inf
      %4501 = vmax.xlane.f32.xlu0 %v4500
      %v4502 = vpop.xlane.xlu0 %4501
      %v4503 = vsel %vm3218, %v4435, -inf
      %4504 = vmax.xlane.f32.xlu0 %v4503
      %v4505 = vpop.xlane.xlu0 %4504
      %v4506 = vsel %vm3218, %v4440, -inf
      %4507 = vmax.xlane.f32.xlu0 %v4506
      %v4508 = vpop.xlane.xlu0 %4507
      %v4509 = vsel %vm3218, %v4445, -inf
      %4510 = vmax.xlane.f32.xlu0 %v4509
      %v4511 = vpop.xlane.xlu0 %4510
      %v4512 = vsel %vm3218, %v4450, -inf
      %4513 = vmax.xlane.f32.xlu0 %v4512
      %v4514 = vpop.xlane.xlu0 %4513
      %v4515 = vsel %vm3218, %v4455, -inf
      %4516 = vmax.xlane.f32.xlu0 %v4515
      %v4517 = vpop.xlane.xlu0 %4516
      %v4518 = vsel %vm3218, %v4460, -inf
      %4519 = vmax.xlane.f32.xlu0 %v4518
      %v4520 = vpop.xlane.xlu0 %4519
      %v4521 = vsel %vm3218, %v4465, -inf
      %4522 = vmax.xlane.f32.xlu0 %v4521
      %v4523 = vpop.xlane.xlu0 %4522
      %v4524 = vsel %vm3218, %v4470, -inf
      %4525 = vmax.xlane.f32.xlu0 %v4524
      %v4526 = vpop.xlane.xlu0 %4525
      %v4527 = vsel %vm3218, %v4475, -inf
      %4528 = vmax.xlane.f32.xlu0 %v4527
      %v4529 = vpop.xlane.xlu0 %4528
      %v4530 = vsel %vm3218, %v4480, -inf
      %4531 = vmax.xlane.f32.xlu0 %v4530
      %v4532 = vpop.xlane.xlu0 %4531
      %v4533 = vsel %vm3218, %v4485, -inf
      %4534 = vmax.xlane.f32.xlu0 %v4533
      %v4535 = vpop.xlane.xlu0 %4534
      %v4536 = vsub.f32 %v4410, %v4490
      %v4537 = vsub.f32 %v4415, %v4493
      %v4538 = vsub.f32 %v4420, %v4496
      %v4539 = vsub.f32 %v4425, %v4499
      %v4540 = vsub.f32 %v4430, %v4502
      %v4541 = vsub.f32 %v4435, %v4505
      %v4542 = vsub.f32 %v4440, %v4508
      %v4543 = vsub.f32 %v4445, %v4511
      %v4544 = vsub.f32 %v4450, %v4514
      %v4545 = vsub.f32 %v4455, %v4517
      %v4546 = vsub.f32 %v4460, %v4520
      %v4547 = vsub.f32 %v4465, %v4523
      %v4548 = vsub.f32 %v4470, %v4526
      %v4549 = vsub.f32 %v4475, %v4529
      %v4550 = vsub.f32 %v4480, %v4532
      %v4551 = vsub.f32 %v4485, %v4535
      %v4552 = vmul.f32 %v4536, 1.442695
      %v4553 = vpow.pop %v4552
      %v4554 = vmul.f32 %v4537, 1.442695
      %v4555 = vpow.pop %v4554
      %v4556 = vmul.f32 %v4538, 1.442695
      %v4557 = vpow.pop %v4556
      %v4558 = vmul.f32 %v4539, 1.442695
      %v4559 = vpow.pop %v4558
      %v4560 = vmul.f32 %v4540, 1.442695
      %v4561 = vpow.pop %v4560
      %v4562 = vmul.f32 %v4541, 1.442695
      %v4563 = vpow.pop %v4562
      %v4564 = vmul.f32 %v4542, 1.442695
      %v4565 = vpow.pop %v4564
      %v4566 = vmul.f32 %v4543, 1.442695
      %v4567 = vpow.pop %v4566
      %v4568 = vmul.f32 %v4544, 1.442695
      %v4569 = vpow.pop %v4568
      %v4570 = vmul.f32 %v4545, 1.442695
      %v4571 = vpow.pop %v4570
      %v4572 = vmul.f32 %v4546, 1.442695
      %v4573 = vpow.pop %v4572
      %v4574 = vmul.f32 %v4547, 1.442695
      %v4575 = vpow.pop %v4574
      %v4576 = vmul.f32 %v4548, 1.442695
      %v4577 = vpow.pop %v4576
      %v4578 = vmul.f32 %v4549, 1.442695
      %v4579 = vpow.pop %v4578
      %v4580 = vmul.f32 %v4550, 1.442695
      %v4581 = vpow.pop %v4580
      %v4582 = vmul.f32 %v4551, 1.442695
      %v4583 = vpow.pop %v4582
      %v4584 = vsel %vm3218, %v4553, 0.0
      %4585 = vadd.xlane.f32.xlu0 %v4584
      %v4586 = vpop.xlane.xlu0 %4585
      %v4587 = vsel %vm3218, %v4555, 0.0
      %4588 = vadd.xlane.f32.xlu0 %v4587
      %v4589 = vpop.xlane.xlu0 %4588
      %v4590 = vsel %vm3218, %v4557, 0.0
      %4591 = vadd.xlane.f32.xlu0 %v4590
      %v4592 = vpop.xlane.xlu0 %4591
      %v4593 = vsel %vm3218, %v4559, 0.0
      %4594 = vadd.xlane.f32.xlu0 %v4593
      %v4595 = vpop.xlane.xlu0 %4594
      %v4596 = vsel %vm3218, %v4561, 0.0
      %4597 = vadd.xlane.f32.xlu0 %v4596
      %v4598 = vpop.xlane.xlu0 %4597
      %v4599 = vsel %vm3218, %v4563, 0.0
      %4600 = vadd.xlane.f32.xlu0 %v4599
      %v4601 = vpop.xlane.xlu0 %4600
      %v4602 = vsel %vm3218, %v4565, 0.0
      %4603 = vadd.xlane.f32.xlu0 %v4602
      %v4604 = vpop.xlane.xlu0 %4603
      %v4605 = vsel %vm3218, %v4567, 0.0
      %4606 = vadd.xlane.f32.xlu0 %v4605
      %v4607 = vpop.xlane.xlu0 %4606
      %v4608 = vsel %vm3218, %v4569, 0.0
      %4609 = vadd.xlane.f32.xlu0 %v4608
      %v4610 = vpop.xlane.xlu0 %4609
      %v4611 = vsel %vm3218, %v4571, 0.0
      %4612 = vadd.xlane.f32.xlu0 %v4611
      %v4613 = vpop.xlane.xlu0 %4612
      %v4614 = vsel %vm3218, %v4573, 0.0
      %4615 = vadd.xlane.f32.xlu0 %v4614
      %v4616 = vpop.xlane.xlu0 %4615
      %v4617 = vsel %vm3218, %v4575, 0.0
      %4618 = vadd.xlane.f32.xlu0 %v4617
      %v4619 = vpop.xlane.xlu0 %4618
      %v4620 = vsel %vm3218, %v4577, 0.0
      %4621 = vadd.xlane.f32.xlu0 %v4620
      %v4622 = vpop.xlane.xlu0 %4621
      %v4623 = vsel %vm3218, %v4579, 0.0
      %4624 = vadd.xlane.f32.xlu0 %v4623
      %v4625 = vpop.xlane.xlu0 %4624
      %v4626 = vsel %vm3218, %v4581, 0.0
      %4627 = vadd.xlane.f32.xlu0 %v4626
      %v4628 = vpop.xlane.xlu0 %4627
      %v4629 = vsel %vm3218, %v4583, 0.0
      %4630 = vadd.xlane.f32.xlu0 %v4629
      %v4631 = vpop.xlane.xlu0 %4630
      %v4632 = vrcp.pop %v4586
      %v4633 = vmul.f32 %v4553, %v4632
      %v4634 = vrcp.pop %v4589
      %v4635 = vmul.f32 %v4555, %v4634
      %v4636 = vrcp.pop %v4592
      %v4637 = vmul.f32 %v4557, %v4636
      %v4638 = vrcp.pop %v4595
      %v4639 = vmul.f32 %v4559, %v4638
      %v4640 = vrcp.pop %v4598
      %v4641 = vmul.f32 %v4561, %v4640
      %v4642 = vrcp.pop %v4601
      %v4643 = vmul.f32 %v4563, %v4642
      %v4644 = vrcp.pop %v4604
      %v4645 = vmul.f32 %v4565, %v4644
      %v4646 = vrcp.pop %v4607
      %v4647 = vmul.f32 %v4567, %v4646
      %v4648 = vrcp.pop %v4610
      %v4649 = vmul.f32 %v4569, %v4648
      %v4650 = vrcp.pop %v4613
      %v4651 = vmul.f32 %v4571, %v4650
      %v4652 = vrcp.pop %v4616
      %v4653 = vmul.f32 %v4573, %v4652
      %v4654 = vrcp.pop %v4619
      %v4655 = vmul.f32 %v4575, %v4654
      %v4656 = vrcp.pop %v4622
      %v4657 = vmul.f32 %v4577, %v4656
      %v4658 = vrcp.pop %v4625
      %v4659 = vmul.f32 %v4579, %v4658
      %v4660 = vrcp.pop %v4628
      %v4661 = vmul.f32 %v4581, %v4660
      %v4662 = vrcp.pop %v4631
      %v4663 = vmul.f32 %v4583, %v4662
      %4664 = vset.pattern.permute.xlu0 3
      %4665 = vperm.xlu0 %4664, %v3399
      %v4666 = vpop.permute.xlu0 %4665
      %v4668 = vmul.f32 %v4633, %v4666
      %v4669 = vmul.f32 %v4635, %v4666
      %v4670 = vmul.f32 %v4637, %v4666
      %v4671 = vmul.f32 %v4639, %v4666
      %v4672 = vmul.f32 %v4641, %v4666
      %v4673 = vmul.f32 %v4643, %v4666
      %v4674 = vmul.f32 %v4645, %v4666
      %v4675 = vmul.f32 %v4647, %v4666
      %v4676 = vmul.f32 %v4649, %v4666
      %v4677 = vmul.f32 %v4651, %v4666
      %v4678 = vmul.f32 %v4653, %v4666
      %v4679 = vmul.f32 %v4655, %v4666
      %v4680 = vmul.f32 %v4657, %v4666
      %v4681 = vmul.f32 %v4659, %v4666
      %v4682 = vmul.f32 %v4661, %v4666
      %v4683 = vmul.f32 %v4663, %v4666
      %v4684 = vadd.f32 %v4264, %v4668
      %v4685 = vadd.f32 %v4265, %v4669
      %v4686 = vadd.f32 %v4266, %v4670
      %v4687 = vadd.f32 %v4267, %v4671
      %v4688 = vadd.f32 %v4268, %v4672
      %v4689 = vadd.f32 %v4269, %v4673
      %v4690 = vadd.f32 %v4270, %v4674
      %v4691 = vadd.f32 %v4271, %v4675
      %v4692 = vadd.f32 %v4272, %v4676
      %v4693 = vadd.f32 %v4273, %v4677
      %v4694 = vadd.f32 %v4274, %v4678
      %v4695 = vadd.f32 %v4275, %v4679
      %v4696 = vadd.f32 %v4276, %v4680
      %v4697 = vadd.f32 %v4277, %v4681
      %v4698 = vadd.f32 %v4278, %v4682
      %v4699 = vadd.f32 %v4279, %v4683
      %4701 = vset.pattern.permute.xlu0 0
      %4702 = vperm.xlu0 %4701, %v4684
      %v4703 = vpop.permute.xlu0 %4702
      %4706 = vset.pattern.permute.xlu0 0
      %4707 = vperm.xlu0 %4706, %v4685
      %v4708 = vpop.permute.xlu0 %4707
      %4711 = vset.pattern.permute.xlu0 0
      %4712 = vperm.xlu0 %4711, %v4686
      %v4713 = vpop.permute.xlu0 %4712
      %4716 = vset.pattern.permute.xlu0 0
      %4717 = vperm.xlu0 %4716, %v4687
      %v4718 = vpop.permute.xlu0 %4717
      %4721 = vset.pattern.permute.xlu0 0
      %4722 = vperm.xlu0 %4721, %v4688
      %v4723 = vpop.permute.xlu0 %4722
      %4726 = vset.pattern.permute.xlu0 0
      %4727 = vperm.xlu0 %4726, %v4689
      %v4728 = vpop.permute.xlu0 %4727
      %4731 = vset.pattern.permute.xlu0 0
      %4732 = vperm.xlu0 %4731, %v4690
      %v4733 = vpop.permute.xlu0 %4732
      %4736 = vset.pattern.permute.xlu0 0
      %4737 = vperm.xlu0 %4736, %v4691
      %v4738 = vpop.permute.xlu0 %4737
      %4741 = vset.pattern.permute.xlu0 0
      %4742 = vperm.xlu0 %4741, %v4692
      %v4743 = vpop.permute.xlu0 %4742
      %4746 = vset.pattern.permute.xlu0 0
      %4747 = vperm.xlu0 %4746, %v4693
      %v4748 = vpop.permute.xlu0 %4747
      %4751 = vset.pattern.permute.xlu0 0
      %4752 = vperm.xlu0 %4751, %v4694
      %v4753 = vpop.permute.xlu0 %4752
      %4756 = vset.pattern.permute.xlu0 0
      %4757 = vperm.xlu0 %4756, %v4695
      %v4758 = vpop.permute.xlu0 %4757
      %4761 = vset.pattern.permute.xlu0 0
      %4762 = vperm.xlu0 %4761, %v4696
      %v4763 = vpop.permute.xlu0 %4762
      %4766 = vset.pattern.permute.xlu0 0
      %4767 = vperm.xlu0 %4766, %v4697
      %v4768 = vpop.permute.xlu0 %4767
      %4771 = vset.pattern.permute.xlu0 0
      %4772 = vperm.xlu0 %4771, %v4698
      %v4773 = vpop.permute.xlu0 %4772
      %4776 = vset.pattern.permute.xlu0 0
      %4777 = vperm.xlu0 %4776, %v4699
      %v4778 = vpop.permute.xlu0 %4777
      %v4780 = vmul.f32 %v4703, %v1636
      %v4781 = vmul.f32 %v4708, %v1641
      %v4782 = vmul.f32 %v4713, %v1646
      %v4783 = vmul.f32 %v4718, %v1651
      %v4784 = vmul.f32 %v4723, %v1656
      %v4785 = vmul.f32 %v4728, %v1661
      %v4786 = vmul.f32 %v4733, %v1666
      %v4787 = vmul.f32 %v4738, %v1671
      %v4788 = vmul.f32 %v4743, %v1676
      %v4789 = vmul.f32 %v4748, %v1681
      %v4790 = vmul.f32 %v4753, %v1686
      %v4791 = vmul.f32 %v4758, %v1691
      %v4792 = vmul.f32 %v4763, %v1696
      %v4793 = vmul.f32 %v4768, %v1701
      %v4794 = vmul.f32 %v4773, %v1706
      %v4795 = vmul.f32 %v4778, %v1711
      %4796 = vset.pattern.permute.xlu0 1
      %4797 = vperm.xlu0 %4796, %v4684
      %v4798 = vpop.permute.xlu0 %4797
      %4800 = vset.pattern.permute.xlu0 1
      %4801 = vperm.xlu0 %4800, %v4685
      %v4802 = vpop.permute.xlu0 %4801
      %4804 = vset.pattern.permute.xlu0 1
      %4805 = vperm.xlu0 %4804, %v4686
      %v4806 = vpop.permute.xlu0 %4805
      %4808 = vset.pattern.permute.xlu0 1
      %4809 = vperm.xlu0 %4808, %v4687
      %v4810 = vpop.permute.xlu0 %4809
      %4812 = vset.pattern.permute.xlu0 1
      %4813 = vperm.xlu0 %4812, %v4688
      %v4814 = vpop.permute.xlu0 %4813
      %4816 = vset.pattern.permute.xlu0 1
      %4817 = vperm.xlu0 %4816, %v4689
      %v4818 = vpop.permute.xlu0 %4817
      %4820 = vset.pattern.permute.xlu0 1
      %4821 = vperm.xlu0 %4820, %v4690
      %v4822 = vpop.permute.xlu0 %4821
      %4824 = vset.pattern.permute.xlu0 1
      %4825 = vperm.xlu0 %4824, %v4691
      %v4826 = vpop.permute.xlu0 %4825
      %4828 = vset.pattern.permute.xlu0 1
      %4829 = vperm.xlu0 %4828, %v4692
      %v4830 = vpop.permute.xlu0 %4829
      %4832 = vset.pattern.permute.xlu0 1
      %4833 = vperm.xlu0 %4832, %v4693
      %v4834 = vpop.permute.xlu0 %4833
      %4836 = vset.pattern.permute.xlu0 1
      %4837 = vperm.xlu0 %4836, %v4694
      %v4838 = vpop.permute.xlu0 %4837
      %4840 = vset.pattern.permute.xlu0 1
      %4841 = vperm.xlu0 %4840, %v4695
      %v4842 = vpop.permute.xlu0 %4841
      %4844 = vset.pattern.permute.xlu0 1
      %4845 = vperm.xlu0 %4844, %v4696
      %v4846 = vpop.permute.xlu0 %4845
      %4848 = vset.pattern.permute.xlu0 1
      %4849 = vperm.xlu0 %4848, %v4697
      %v4850 = vpop.permute.xlu0 %4849
      %4852 = vset.pattern.permute.xlu0 1
      %4853 = vperm.xlu0 %4852, %v4698
      %v4854 = vpop.permute.xlu0 %4853
      %4856 = vset.pattern.permute.xlu0 1
      %4857 = vperm.xlu0 %4856, %v4699
      %v4858 = vpop.permute.xlu0 %4857
      %v4860 = vmul.f32 %v4798, %v2069
      %v4861 = vmul.f32 %v4802, %v2074
      %v4862 = vmul.f32 %v4806, %v2079
      %v4863 = vmul.f32 %v4810, %v2084
      %v4864 = vmul.f32 %v4814, %v2089
      %v4865 = vmul.f32 %v4818, %v2094
      %v4866 = vmul.f32 %v4822, %v2099
      %v4867 = vmul.f32 %v4826, %v2104
      %v4868 = vmul.f32 %v4830, %v2109
      %v4869 = vmul.f32 %v4834, %v2114
      %v4870 = vmul.f32 %v4838, %v2119
      %v4871 = vmul.f32 %v4842, %v2124
      %v4872 = vmul.f32 %v4846, %v2129
      %v4873 = vmul.f32 %v4850, %v2134
      %v4874 = vmul.f32 %v4854, %v2139
      %v4875 = vmul.f32 %v4858, %v2144
      %v4876 = vadd.f32 %v4780, %v4860
      %v4877 = vadd.f32 %v4781, %v4861
      %v4878 = vadd.f32 %v4782, %v4862
      %v4879 = vadd.f32 %v4783, %v4863
      %v4880 = vadd.f32 %v4784, %v4864
      %v4881 = vadd.f32 %v4785, %v4865
      %v4882 = vadd.f32 %v4786, %v4866
      %v4883 = vadd.f32 %v4787, %v4867
      %v4884 = vadd.f32 %v4788, %v4868
      %v4885 = vadd.f32 %v4789, %v4869
      %v4886 = vadd.f32 %v4790, %v4870
      %v4887 = vadd.f32 %v4791, %v4871
      %v4888 = vadd.f32 %v4792, %v4872
      %v4889 = vadd.f32 %v4793, %v4873
      %v4890 = vadd.f32 %v4794, %v4874
      %v4891 = vadd.f32 %v4795, %v4875
      %4892 = vset.pattern.permute.xlu0 2
      %4893 = vperm.xlu0 %4892, %v4684
      %v4894 = vpop.permute.xlu0 %4893
      %4896 = vset.pattern.permute.xlu0 2
      %4897 = vperm.xlu0 %4896, %v4685
      %v4898 = vpop.permute.xlu0 %4897
      %4900 = vset.pattern.permute.xlu0 2
      %4901 = vperm.xlu0 %4900, %v4686
      %v4902 = vpop.permute.xlu0 %4901
      %4904 = vset.pattern.permute.xlu0 2
      %4905 = vperm.xlu0 %4904, %v4687
      %v4906 = vpop.permute.xlu0 %4905
      %4908 = vset.pattern.permute.xlu0 2
      %4909 = vperm.xlu0 %4908, %v4688
      %v4910 = vpop.permute.xlu0 %4909
      %4912 = vset.pattern.permute.xlu0 2
      %4913 = vperm.xlu0 %4912, %v4689
      %v4914 = vpop.permute.xlu0 %4913
      %4916 = vset.pattern.permute.xlu0 2
      %4917 = vperm.xlu0 %4916, %v4690
      %v4918 = vpop.permute.xlu0 %4917
      %4920 = vset.pattern.permute.xlu0 2
      %4921 = vperm.xlu0 %4920, %v4691
      %v4922 = vpop.permute.xlu0 %4921
      %4924 = vset.pattern.permute.xlu0 2
      %4925 = vperm.xlu0 %4924, %v4692
      %v4926 = vpop.permute.xlu0 %4925
      %4928 = vset.pattern.permute.xlu0 2
      %4929 = vperm.xlu0 %4928, %v4693
      %v4930 = vpop.permute.xlu0 %4929
      %4932 = vset.pattern.permute.xlu0 2
      %4933 = vperm.xlu0 %4932, %v4694
      %v4934 = vpop.permute.xlu0 %4933
      %4936 = vset.pattern.permute.xlu0 2
      %4937 = vperm.xlu0 %4936, %v4695
      %v4938 = vpop.permute.xlu0 %4937
      %4940 = vset.pattern.permute.xlu0 2
      %4941 = vperm.xlu0 %4940, %v4696
      %v4942 = vpop.permute.xlu0 %4941
      %4944 = vset.pattern.permute.xlu0 2
      %4945 = vperm.xlu0 %4944, %v4697
      %v4946 = vpop.permute.xlu0 %4945
      %4948 = vset.pattern.permute.xlu0 2
      %4949 = vperm.xlu0 %4948, %v4698
      %v4950 = vpop.permute.xlu0 %4949
      %4952 = vset.pattern.permute.xlu0 2
      %4953 = vperm.xlu0 %4952, %v4699
      %v4954 = vpop.permute.xlu0 %4953
      %v4956 = vmul.f32 %v4894, %v2502
      %v4957 = vmul.f32 %v4898, %v2507
      %v4958 = vmul.f32 %v4902, %v2512
      %v4959 = vmul.f32 %v4906, %v2517
      %v4960 = vmul.f32 %v4910, %v2522
      %v4961 = vmul.f32 %v4914, %v2527
      %v4962 = vmul.f32 %v4918, %v2532
      %v4963 = vmul.f32 %v4922, %v2537
      %v4964 = vmul.f32 %v4926, %v2542
      %v4965 = vmul.f32 %v4930, %v2547
      %v4966 = vmul.f32 %v4934, %v2552
      %v4967 = vmul.f32 %v4938, %v2557
      %v4968 = vmul.f32 %v4942, %v2562
      %v4969 = vmul.f32 %v4946, %v2567
      %v4970 = vmul.f32 %v4950, %v2572
      %v4971 = vmul.f32 %v4954, %v2577
      %v4972 = vadd.f32 %v4876, %v4956
      %v4973 = vadd.f32 %v4877, %v4957
      %v4974 = vadd.f32 %v4878, %v4958
      %v4975 = vadd.f32 %v4879, %v4959
      %v4976 = vadd.f32 %v4880, %v4960
      %v4977 = vadd.f32 %v4881, %v4961
      %v4978 = vadd.f32 %v4882, %v4962
      %v4979 = vadd.f32 %v4883, %v4963
      %v4980 = vadd.f32 %v4884, %v4964
      %v4981 = vadd.f32 %v4885, %v4965
      %v4982 = vadd.f32 %v4886, %v4966
      %v4983 = vadd.f32 %v4887, %v4967
      %v4984 = vadd.f32 %v4888, %v4968
      %v4985 = vadd.f32 %v4889, %v4969
      %v4986 = vadd.f32 %v4890, %v4970
      %v4987 = vadd.f32 %v4891, %v4971
      %4988 = vset.pattern.permute.xlu0 3
      %4989 = vperm.xlu0 %4988, %v4684
      %v4990 = vpop.permute.xlu0 %4989
      %4992 = vset.pattern.permute.xlu0 3
      %4993 = vperm.xlu0 %4992, %v4685
      %v4994 = vpop.permute.xlu0 %4993
      %4996 = vset.pattern.permute.xlu0 3
      %4997 = vperm.xlu0 %4996, %v4686
      %v4998 = vpop.permute.xlu0 %4997
      %5000 = vset.pattern.permute.xlu0 3
      %5001 = vperm.xlu0 %5000, %v4687
      %v5002 = vpop.permute.xlu0 %5001
      %5004 = vset.pattern.permute.xlu0 3
      %5005 = vperm.xlu0 %5004, %v4688
      %v5006 = vpop.permute.xlu0 %5005
      %5008 = vset.pattern.permute.xlu0 3
      %5009 = vperm.xlu0 %5008, %v4689
      %v5010 = vpop.permute.xlu0 %5009
      %5012 = vset.pattern.permute.xlu0 3
      %5013 = vperm.xlu0 %5012, %v4690
      %v5014 = vpop.permute.xlu0 %5013
      %5016 = vset.pattern.permute.xlu0 3
      %5017 = vperm.xlu0 %5016, %v4691
      %v5018 = vpop.permute.xlu0 %5017
      %5020 = vset.pattern.permute.xlu0 3
      %5021 = vperm.xlu0 %5020, %v4692
      %v5022 = vpop.permute.xlu0 %5021
      %5024 = vset.pattern.permute.xlu0 3
      %5025 = vperm.xlu0 %5024, %v4693
      %v5026 = vpop.permute.xlu0 %5025
      %5028 = vset.pattern.permute.xlu0 3
      %5029 = vperm.xlu0 %5028, %v4694
      %v5030 = vpop.permute.xlu0 %5029
      %5032 = vset.pattern.permute.xlu0 3
      %5033 = vperm.xlu0 %5032, %v4695
      %v5034 = vpop.permute.xlu0 %5033
      %5036 = vset.pattern.permute.xlu0 3
      %5037 = vperm.xlu0 %5036, %v4696
      %v5038 = vpop.permute.xlu0 %5037
      %5040 = vset.pattern.permute.xlu0 3
      %5041 = vperm.xlu0 %5040, %v4697
      %v5042 = vpop.permute.xlu0 %5041
      %5044 = vset.pattern.permute.xlu0 3
      %5045 = vperm.xlu0 %5044, %v4698
      %v5046 = vpop.permute.xlu0 %5045
      %5048 = vset.pattern.permute.xlu0 3
      %5049 = vperm.xlu0 %5048, %v4699
      %v5050 = vpop.permute.xlu0 %5049
      %v5052 = vmul.f32 %v4990, %v2935
      %v5053 = vmul.f32 %v4994, %v2940
      %v5054 = vmul.f32 %v4998, %v2945
      %v5055 = vmul.f32 %v5002, %v2950
      %v5056 = vmul.f32 %v5006, %v2955
      %v5057 = vmul.f32 %v5010, %v2960
      %v5058 = vmul.f32 %v5014, %v2965
      %v5059 = vmul.f32 %v5018, %v2970
      %v5060 = vmul.f32 %v5022, %v2975
      %v5061 = vmul.f32 %v5026, %v2980
      %v5062 = vmul.f32 %v5030, %v2985
      %v5063 = vmul.f32 %v5034, %v2990
      %v5064 = vmul.f32 %v5038, %v2995
      %v5065 = vmul.f32 %v5042, %v3000
      %v5066 = vmul.f32 %v5046, %v3005
      %v5067 = vmul.f32 %v5050, %v3010
      %v5068 = vadd.f32 %v4972, %v5052
      %v5069 = vadd.f32 %v4973, %v5053
      %v5070 = vadd.f32 %v4974, %v5054
      %v5071 = vadd.f32 %v4975, %v5055
      %v5072 = vadd.f32 %v4976, %v5056
      %v5073 = vadd.f32 %v4977, %v5057
      %v5074 = vadd.f32 %v4978, %v5058
      %v5075 = vadd.f32 %v4979, %v5059
      %v5076 = vadd.f32 %v4980, %v5060
      %v5077 = vadd.f32 %v4981, %v5061
      %v5078 = vadd.f32 %v4982, %v5062
      %v5079 = vadd.f32 %v4983, %v5063
      %v5080 = vadd.f32 %v4984, %v5064
      %v5081 = vadd.f32 %v4985, %v5065
      %v5082 = vadd.f32 %v4986, %v5066
      %v5083 = vadd.f32 %v4987, %v5067
      %v5084 = vld [vmem:[%s5] sm:$0xff]
      %v5085 = vld [vmem:[%s5 + $0x8] sm:$0xff]
      %v5086 = vld [vmem:[%s5 + $0x10] sm:$0xff]
      %v5087 = vld [vmem:[%s5 + $0x18] sm:$0xff]
      %v5088 = vld [vmem:[%s6] sm:$0x1]
      %v5090 = vlaneseq
      %v5091 = vshrl.u32 %v5090, 7
      %v5092 = vsub.s32 0, %v5091
      %v5093 = vrot.slane %v5088, %v5092
      %v5096 = vsel %vm362, %v5068, 0
      %v5099 = vsel %vm362, %v5069, 0
      %v5102 = vsel %vm362, %v5070, 0
      %v5105 = vsel %vm362, %v5071, 0
      %v5108 = vsel %vm362, %v5072, 0
      %v5111 = vsel %vm362, %v5073, 0
      %v5114 = vsel %vm362, %v5074, 0
      %v5117 = vsel %vm362, %v5075, 0
      %v5120 = vsel %vm362, %v5076, 0
      %v5123 = vsel %vm362, %v5077, 0
      %v5126 = vsel %vm362, %v5078, 0
      %v5129 = vsel %vm362, %v5079, 0
      %v5132 = vsel %vm362, %v5080, 0
      %v5135 = vsel %vm362, %v5081, 0
      %v5138 = vsel %vm362, %v5082, 0
      %v5141 = vsel %vm362, %v5083, 0
      %5143 = vmatprep.subr.mxu0 0.0
      %5144 = vmatpush1.msra.mxu0 %v5084
      %5145 = vmatprep.subr.mxu0 0.0
      %5146 = vmatpush1.msra.mxu0 %v5085
      %5147 = vmatprep.subr.mxu0 0.0
      %5148 = vmatpush1.msra.mxu0 %v5086
      %5149 = vmatprep.subr.mxu0 0.0
      %5150 = vmatpush1.msra.mxu0 %v5087
      %5151 = vmatprep.subr.mxu0 0.0
      %5152 = vmatpush1.msra.mxu0 0.0
      %5153 = vmatprep.subr.mxu0 0.0
      %5154 = vmatpush1.msra.mxu0 0.0
      %5155 = vmatprep.subr.mxu0 0.0
      %5156 = vmatpush1.msra.mxu0 0.0
      %5157 = vmatprep.subr.mxu0 0.0
      %5158 = vmatpush1.msra.mxu0 0.0
      %5159 = vmatprep.subr.mxu0 0.0
      %5160 = vmatpush1.msra.mxu0 0.0
      %5161 = vmatprep.subr.mxu0 0.0
      %5162 = vmatpush1.msra.mxu0 0.0
      %5163 = vmatprep.subr.mxu0 0.0
      %5164 = vmatpush1.msra.mxu0 0.0
      %5165 = vmatprep.subr.mxu0 0.0
      %5166 = vmatpush1.msra.mxu0 0.0
      %5167 = vmatprep.subr.mxu0 0.0
      %5168 = vmatpush1.msra.mxu0 0.0
      %5169 = vmatprep.subr.mxu0 0.0
      %5170 = vmatpush1.msra.mxu0 0.0
      %5171 = vmatprep.subr.mxu0 0.0
      %5172 = vmatpush1.msra.mxu0 0.0
      %5173 = vmatprep.subr.mxu0 0.0
      %5174 = vmatpush1.msra.mxu0 0.0
      %5175 = vmatprep.subr.mxu0 0.0
      %5176 = vmatpush1.msra.mxu0 0.0
      %5177 = vmatprep.subr.mxu0 0.0
      %5178 = vmatpush1.msra.mxu0 0.0
      %5179 = vmatprep.subr.mxu0 0.0
      %5180 = vmatpush1.msra.mxu0 0.0
      %5181 = vmatprep.subr.mxu0 0.0
      %5182 = vmatpush1.msra.mxu0 0.0
      %5183 = vmatprep.subr.mxu0 0.0
      %5184 = vmatpush1.msra.mxu0 0.0
      %5185 = vmatprep.subr.mxu0 0.0
      %5186 = vmatpush1.msra.mxu0 0.0
      %5187 = vmatprep.subr.mxu0 0.0
      %5188 = vmatpush1.msra.mxu0 0.0
      %5189 = vmatprep.subr.mxu0 0.0
      %5190 = vmatpush1.msra.mxu0 0.0
      %5191 = vmatprep.subr.mxu0 0.0
      %5192 = vmatpush1.msra.mxu0 0.0
      %5193 = vmatprep.subr.mxu0 0.0
      %5194 = vmatpush1.msra.mxu0 0.0
      %5195 = vmatprep.subr.mxu0 0.0
      %5196 = vmatpush1.msra.mxu0 0.0
      %5197 = vmatprep.subr.mxu0 0.0
      %5198 = vmatpush1.msra.mxu0 0.0
      %5199 = vmatprep.subr.mxu0 0.0
      %5200 = vmatpush1.msra.mxu0 0.0
      %5201 = vmatprep.subr.mxu0 0.0
      %5202 = vmatpush1.msra.mxu0 0.0
      %5203 = vmatprep.subr.mxu0 0.0
      %5204 = vmatpush1.msra.mxu0 0.0
      %5205 = vmatprep.subr.mxu0 0.0
      %5206 = vmatpush1.msra.mxu0 0.0
      %5207 = vmatprep.mubr.f32.mxu0 0.0
      %5208 = vmatmul.mubr.f32.gmra.mrb[0].mxu0 %v5096
      %v5209 = vpop.f32.mrb[0].mxu0
      %v5210 = vadd.f32 %v5093, %v5209
      %v5211 = vpop.f32.mrb[0].mxu0
      %5212 = vmatprep.mubr.f32.mxu0 0.0
      %5213 = vmatmul.mubr.f32.gmra.mrb[0].mxu0 %v5099
      %v5214 = vpop.f32.mrb[0].mxu0
      %v5215 = vadd.f32 %v5093, %v5214
      %v5216 = vpop.f32.mrb[0].mxu0
      %5217 = vmatprep.mubr.f32.mxu0 0.0
      %5218 = vmatmul.mubr.f32.gmra.mrb[0].mxu0 %v5102
      %v5219 = vpop.f32.mrb[0].mxu0
      %v5220 = vadd.f32 %v5093, %v5219
      %v5221 = vpop.f32.mrb[0].mxu0
      %5222 = vmatprep.mubr.f32.mxu0 0.0
      %5223 = vmatmul.mubr.f32.gmra.mrb[0].mxu0 %v5105
      %v5224 = vpop.f32.mrb[0].mxu0
      %v5225 = vadd.f32 %v5093, %v5224
      %v5226 = vpop.f32.mrb[0].mxu0
      %5227 = vmatprep.mubr.f32.mxu0 0.0
      %5228 = vmatmul.mubr.f32.gmra.mrb[0].mxu0 %v5108
      %v5229 = vpop.f32.mrb[0].mxu0
      %v5230 = vadd.f32 %v5093, %v5229
      %v5231 = vpop.f32.mrb[0].mxu0
      %5232 = vmatprep.mubr.f32.mxu0 0.0
      %5233 = vmatmul.mubr.f32.gmra.mrb[0].mxu0 %v5111
      %v5234 = vpop.f32.mrb[0].mxu0
      %v5235 = vadd.f32 %v5093, %v5234
      %v5236 = vpop.f32.mrb[0].mxu0
      %5237 = vmatprep.mubr.f32.mxu0 0.0
      %5238 = vmatmul.mubr.f32.gmra.mrb[0].mxu0 %v5114
      %v5239 = vpop.f32.mrb[0].mxu0
      %v5240 = vadd.f32 %v5093, %v5239
      %v5241 = vpop.f32.mrb[0].mxu0
      %5242 = vmatprep.mubr.f32.mxu0 0.0
      %5243 = vmatmul.mubr.f32.gmra.mrb[0].mxu0 %v5117
      %v5244 = vpop.f32.mrb[0].mxu0
      %v5245 = vadd.f32 %v5093, %v5244
      %v5246 = vpop.f32.mrb[0].mxu0
      %5247 = vmatprep.mubr.f32.mxu0 0.0
      %5248 = vmatmul.mubr.f32.gmra.mrb[0].mxu0 %v5120
      %v5249 = vpop.f32.mrb[0].mxu0
      %v5250 = vadd.f32 %v5093, %v5249
      %v5251 = vpop.f32.mrb[0].mxu0
      %5252 = vmatprep.mubr.f32.mxu0 0.0
      %5253 = vmatmul.mubr.f32.gmra.mrb[0].mxu0 %v5123
      %v5254 = vpop.f32.mrb[0].mxu0
      %v5255 = vadd.f32 %v5093, %v5254
      %v5256 = vpop.f32.mrb[0].mxu0
      %5257 = vmatprep.mubr.f32.mxu0 0.0
      %5258 = vmatmul.mubr.f32.gmra.mrb[0].mxu0 %v5126
      %v5259 = vpop.f32.mrb[0].mxu0
      %v5260 = vadd.f32 %v5093, %v5259
      %v5261 = vpop.f32.mrb[0].mxu0
      %5262 = vmatprep.mubr.f32.mxu0 0.0
      %5263 = vmatmul.mubr.f32.gmra.mrb[0].mxu0 %v5129
      %v5264 = vpop.f32.mrb[0].mxu0
      %v5265 = vadd.f32 %v5093, %v5264
      %v5266 = vpop.f32.mrb[0].mxu0
      %5267 = vmatprep.mubr.f32.mxu0 0.0
      %5268 = vmatmul.mubr.f32.gmra.mrb[0].mxu0 %v5132
      %v5269 = vpop.f32.mrb[0].mxu0
      %v5270 = vadd.f32 %v5093, %v5269
      %v5271 = vpop.f32.mrb[0].mxu0
      %5272 = vmatprep.mubr.f32.mxu0 0.0
      %5273 = vmatmul.mubr.f32.gmra.mrb[0].mxu0 %v5135
      %v5274 = vpop.f32.mrb[0].mxu0
      %v5275 = vadd.f32 %v5093, %v5274
      %v5276 = vpop.f32.mrb[0].mxu0
      %5277 = vmatprep.mubr.f32.mxu0 0.0
      %5278 = vmatmul.mubr.f32.gmra.mrb[0].mxu0 %v5138
      %v5279 = vpop.f32.mrb[0].mxu0
      %v5280 = vadd.f32 %v5093, %v5279
      %v5281 = vpop.f32.mrb[0].mxu0
      %5282 = vmatprep.mubr.f32.mxu0 0.0
      %5283 = vmatmul.mubr.f32.gmra.mrb[0].mxu0 %v5141
      %v5284 = vpop.f32.mrb[0].mxu0
      %v5285 = vadd.f32 %v5093, %v5284
      %v5286 = vpop.f32.mrb[0].mxu0
      %5287 = vdwg.mxu0
      %5288 = vst.msk [vmem:[%s280] sm:$0xff] %vm362, %v5210
      %5289 = vst.msk [vmem:[%s280 + $0x8] sm:$0xff] %vm362, %v5215
      %5290 = vst.msk [vmem:[%s280 + $0x10] sm:$0xff] %vm362, %v5220
      %5291 = vst.msk [vmem:[%s280 + $0x18] sm:$0xff] %vm362, %v5225
      %5292 = vst.msk [vmem:[%s280 + $0x20] sm:$0xff] %vm362, %v5230
      %5293 = vst.msk [vmem:[%s280 + $0x28] sm:$0xff] %vm362, %v5235
      %5294 = vst.msk [vmem:[%s280 + $0x30] sm:$0xff] %vm362, %v5240
      %5295 = vst.msk [vmem:[%s280 + $0x38] sm:$0xff] %vm362, %v5245
      %5296 = vst.msk [vmem:[%s280 + $0x40] sm:$0xff] %vm362, %v5250
      %5297 = vst.msk [vmem:[%s280 + $0x48] sm:$0xff] %vm362, %v5255
      %5298 = vst.msk [vmem:[%s280 + $0x50] sm:$0xff] %vm362, %v5260
      %5299 = vst.msk [vmem:[%s280 + $0x58] sm:$0xff] %vm362, %v5265
      %5300 = vst.msk [vmem:[%s280 + $0x60] sm:$0xff] %vm362, %v5270
      %5301 = vst.msk [vmem:[%s280 + $0x68] sm:$0xff] %vm362, %v5275
      %5302 = vst.msk [vmem:[%s280 + $0x70] sm:$0xff] %vm362, %v5280
      %5303 = vst.msk [vmem:[%s280 + $0x78] sm:$0xff] %vm362, %v5285
      %s5304 = smul.u32 16, %s18
      %p5305 = scmp.lt.s32.totalorder %s5304, 31
      %s5306 = scalar_select %p5305, %s5304, 31
      %s5307 = smul.addr %s5306, 8
      %s5308 = scalar_lea.vmem %s7, %s5307
      // Predicated region
      $region49: #{tpu_custom_call.1} parent=47 // pred_check
        %p5309 = pneg %p188
      $region50: #{tpu_custom_call.1} parent=47 // pred_check_branch
        %5311 = sbr.rel (%p5309) target = $region52
      $region51: #{tpu_custom_call.1} parent=47 // pred_region
        %s5312 = smul.u32 16, %s18
      $region52: #{tpu_custom_call.1} parent=47 // pred_fallthru
        _
    $region48: #{tpu_custom_call.1} parent=5 // pred_fallthru
      _
    %p5313 = scmp.le.s32.totalorder 2, %s13
    // Predicated region
    $region53: #{tpu_custom_call.1} parent=5 // pred_check
      %p5314 = pneg %p5313
    $region54: #{tpu_custom_call.1} parent=5 // pred_check_branch
      %5316 = sbr.rel (%p5314) target = $region56
    $region55: #{tpu_custom_call.1} parent=5 // pred_region
      %s5317 = ssub.s32 %s13, 2
      // Predicated region
      $region57: #{tpu_custom_call.1} parent=55 // pred_check
        %p5318 = pneg %p194
      $region58: #{tpu_custom_call.1} parent=55 // pred_check_branch
        %5320 = sbr.rel (%p5318) target = $region60
      $region59: #{tpu_custom_call.1} parent=55 // pred_region
        %s5321 = smul.u32 16, %s19
        %p5322 = scmp.lt.s32.totalorder %s5321, 31
        %s5323 = scalar_select %p5322, %s5321, 31
        %s5324 = smul.addr %s5323, 8
        %s5325 = scalar_lea.vmem %s7, %s5324
      $region60: #{tpu_custom_call.1} parent=55 // pred_fallthru
        _
    $region56: #{tpu_custom_call.1} parent=5 // pred_fallthru
      _
  $region6: #{tpu_custom_call.1} parent=0 // loop_footer
    %s17 = sadd.s32 1, %s13
  $region7: #{tpu_custom_call.1} parent=0 // loop_footer_branch
    %12 = sbr.rel target = $region3
  $region8: #{tpu_custom_call.1} parent=0 // loop_exit
    _

</llo_original>
